<compile_context>
chip_gen: v5e
topology: v5e:2x2
jax: 0.10.0
libtpu: 0.0.40
codegen_flags: <defaults>
</compile_context>

<pallas_src>
import functools

import jax
import jax.numpy as jnp
from jax import lax
from jax.experimental import pallas as pl
from jax.experimental.pallas import tpu as pltpu

# ---- module hyper-parameters (globals in the reference script) ---------------
HEADS = 4
NUM_LAYERS = 3
OPTION_NUM = 4          # option_num global
TOKEN_DIM = 48          # token_dim global
IN_CHANNELS = 16
OUT_CHANNELS = 32
D_K = OUT_CHANNELS // HEADS
LEAKY_SLOPE = 0.2       # reference uses F.leaky_relu(..., negative_slope=0.2)
MASK_NEG = -1e30        # finite sentinel for global max pool (no -inf -> no NaN)


# -----------------------------------------------------------------------------
# Parameters (deterministic synthetic init)
# -----------------------------------------------------------------------------
def init_linear(key, fan_in, fan_out):
    k1, k2 = jax.random.split(key)
    w = jax.random.normal(k1, (fan_in, fan_out), jnp.float32) * 0.1
    b = jax.random.normal(k2, (fan_out,), jnp.float32) * 0.01
    return w, b


def init_params(key, num_entities):
    params = {}
    keys = jax.random.split(key, 10)
    params['entity_embeddings'] = jax.random.normal(
        keys[0], (num_entities, IN_CHANNELS), jnp.float32)
    layers = []
    for i in range(NUM_LAYERS):
        in_ch = IN_CHANNELS if i == 0 else OUT_CHANNELS
        lkeys = jax.random.split(keys[1 + i], 6)
        lp = {}
        lp['Wq'], lp['bq'] = init_linear(lkeys[0], in_ch, OUT_CHANNELS)
        lp['Wk'], lp['bk'] = init_linear(lkeys[1], in_ch, OUT_CHANNELS)
        lp['Wv'], lp['bv'] = init_linear(lkeys[2], in_ch, OUT_CHANNELS)
        lp['Ws'], lp['bs'] = init_linear(lkeys[3], TOKEN_DIM, OUT_CHANNELS)
        lp['Wo'], lp['bo'] = init_linear(lkeys[4], OUT_CHANNELS, OUT_CHANNELS)
        if in_ch != OUT_CHANNELS:
            lp['Wr'], lp['br'] = init_linear(lkeys[5], in_ch, OUT_CHANNELS)
        layers.append(lp)
    params['layers'] = layers
    params['W_ffn1'], params['b_ffn1'] = init_linear(keys[5], OUT_CHANNELS, OUT_CHANNELS)
    params['W_ffn2'], params['b_ffn2'] = init_linear(keys[6], TOKEN_DIM, OUT_CHANNELS)
    params['W_ffn3'], params['b_ffn3'] = init_linear(keys[7], OUT_CHANNELS, TOKEN_DIM)
    params['W_outl'], params['b_outl'] = init_linear(
        keys[8], OPTION_NUM * OUT_CHANNELS, OUT_CHANNELS)
    return params


# -----------------------------------------------------------------------------
# Forward pass: one fused Pallas kernel (mirrors GraphTransformer.forward)
# -----------------------------------------------------------------------------
@functools.partial(jax.jit, static_argnames=("num_graphs",))
def graph_transformer_forward(params, concept_ids, edge_index, edge_type,
                              sentence_embeddings, token_embedding, batch,
                              num_graphs):
    del edge_type                                   # unused by the reference forward
    gi = batch // OPTION_NUM                        # map_batch_to_group
    x0 = params['entity_embeddings'][concept_ids]   # (N, in_channels)
    N = x0.shape[0]
    B, T, _ = token_embedding.shape                 # B must equal option_num
    num_groups = num_graphs // OPTION_NUM
    row, col = edge_index[0], edge_index[1]

    # ---- tiny one-hot index matrices (exact gathers/scatters as matmuls) ------
    ar_n = jnp.arange(N, dtype=row.dtype)
    grow = (row[:, None] == ar_n[None, :]).astype(jnp.float32)     # (E, N)
    gcol = (col[:, None] == ar_n[None, :]).astype(jnp.float32)     # (E, N)
    scat = grow.T                                                   # (N, E) index_add_
    hoh = ((jnp.arange(OUT_CHANNELS)[:, None] // D_K)
           == jnp.arange(HEADS)[None, :]).astype(jnp.float32)       # (32, H)

    sent = sentence_embeddings[gi]                                  # (N, token_dim)
    gi2 = gi[gi]                                                    # composed double gather
    gsel = (gi2[:, None] == jnp.arange(num_groups, dtype=gi.dtype)[None, :]
            ).astype(jnp.float32)                                   # (N, G)
    mask = batch[:, None] == jnp.arange(num_graphs, dtype=batch.dtype)[None, :]
    mbias = jnp.where(mask, 0.0, MASK_NEG).astype(jnp.float32)      # (N, num_graphs)

    def w16(w):  # weights uploaded in native MXU operand format
        return w.astype(jnp.bfloat16)

    # ---- operand list (all 2-D, all VMEM-resident inside the kernel) ----------
    operands = [x0, sent, grow, gcol, scat, hoh]
    for lp in params['layers']:
        w_list = [lp['Wq'], lp['Wk'], lp['Wv']]
        b_list = [lp['bq'], lp['bk'], lp['bv']]
        if 'Wr' in lp:
            w_list.append(lp['Wr'])
            b_list.append(lp['br'])
        operands += [w16(jnp.concatenate(w_list, axis=1)),          # (in, 96|128) bf16
                     jnp.concatenate(b_list, axis=0).reshape(1, -1),
                     w16(lp['Ws']), lp['bs'].reshape(1, -1),
                     w16(lp['Wo']), lp['bo'].reshape(1, -1)]
    operands += [w16(params['W_ffn1']), params['b_ffn1'].reshape(1, -1),
                 token_embedding.reshape(B * T, TOKEN_DIM),
                 w16(params['W_ffn2']), params['b_ffn2'].reshape(1, -1),
                 gsel,
                 w16(params['W_outl']), params['b_outl'].reshape(1, -1),
                 mbias,
                 w16(params['W_ffn3']), params['b_ffn3'].reshape(1, -1)]

    inv_3sqdk = 1.0 / (3.0 * float(D_K) ** 0.5)
    xattn_scale = 1.0 / float(OUT_CHANNELS) ** 0.5

    def mmw(a, w):   # weight matmul: bf16 operands (native MXU), f32 accumulation
        return jnp.dot(a.astype(jnp.bfloat16), w,
                       preferred_element_type=jnp.float32)

    def mm(a, b):    # exact f32 matmul (one-hot gather/scatter, attention values)
        return jnp.dot(a, b, preferred_element_type=jnp.float32)

    def kernel(*refs):
        x_ref, sent_ref, grow_ref, gcol_ref, scat_ref, hoh_ref = refs[:6]
        layer_refs = [refs[6 + 6 * l: 12 + 6 * l] for l in range(NUM_LAYERS)]
        (wf1_ref, bf1_ref, tok_ref, wf2_ref, bf2_ref, gsel_ref,
         woutl_ref, boutl_ref, mbias_ref, wf3_ref, bf3_ref) = refs[6 + 6 * NUM_LAYERS:-1]
        o_ref = refs[-1]

        x = x_ref[...]
        s_in = sent_ref[...]
        grow_m = grow_ref[...]
        gcol_m = gcol_ref[...]
        scat_m = scat_ref[...]
        hoh_m = hoh_ref[...]

        # ---- 3 CustomGraphTransformerLayer blocks (unrolled) ------------------
        for wc_ref, bc_ref, ws_ref, bs_ref, wo_ref, bo_ref in layer_refs:
            qkv = mmw(x, wc_ref[...]) + bc_ref[...]            # (N, 96|128) lane-dense
            q = qkv[:, 0 * OUT_CHANNELS:1 * OUT_CHANNELS]
            k = qkv[:, 1 * OUT_CHANNELS:2 * OUT_CHANNELS]
            v = qkv[:, 2 * OUT_CHANNELS:3 * OUT_CHANNELS]
            has_res = wc_ref.shape[1] == 4 * OUT_CHANNELS
            resid = qkv[:, 3 * OUT_CHANNELS:4 * OUT_CHANNELS] if has_res else x
            s_proj = mmw(s_in, ws_ref[...]) + bs_ref[...]      # lin_sentence (Q==K)

            # edge-endpoint gathers as exact one-hot matmuls
            qi = mm(grow_m, q)
            kj = mm(gcol_m, k)
            vj = mm(gcol_m, v)
            qsi = mm(grow_m, s_proj)
            ksj = mm(gcol_m, s_proj)

            # (qi*kj + qsi*kj + qi*ksj) summed per head with ONE (E,32)x(32,H) matmul
            prod = (qi + qsi) * kj + qi * ksj                  # (E, 32)
            alpha = mm(prod, hoh_m) * inv_3sqdk                # (E, H)
            alpha = jnp.where(alpha >= 0.0, alpha, LEAKY_SLOPE * alpha)
            m = jnp.max(alpha, axis=0, keepdims=True)          # softmax over ALL edges
            e = jnp.exp(alpha - m)
            alpha = e * pl.reciprocal(jnp.sum(e, axis=0, keepdims=True), approx=True)
            # broadcast per-head alpha across its D_K lanes on the MXU (not VPU repeat)
            alpha_full = lax.dot_general(alpha, hoh_m, (((1,), (1,)), ((), ())),
                                         preferred_element_type=jnp.float32)  # (E, 32)
            agg = mm(scat_m, vj * alpha_full)                  # index_add_: (N, 32)
            x = mmw(agg, wo_ref[...]) + bo_ref[...] + resid    # lin_out + residual

        # ---- ffn1 --------------------------------------------------------------
        x = mmw(x, wf1_ref[...]) + bf1_ref[...]                # (N, 32)

        # ---- ffn2 on token embeddings ------------------------------------------
        tok = mmw(tok_ref[...], wf2_ref[...]) + bf2_ref[...]   # (B*T, 32), K == V

        # ---- attention_multihead + output_layer (algebraically fused) -----------
        num_g = gsel_ref.shape[1]
        xg = x[0:num_g, :]                       # rows hit by the composed double gather
        woutl = woutl_ref[...]
        acc = None
        for b in range(B):                       # B == option_num (static)
            kb = tok[b * T:(b + 1) * T, :]                     # (T, 32)
            sc = lax.dot_general(xg, kb, (((1,), (1,)), ((), ())),
                                 preferred_element_type=jnp.float32) * xattn_scale
            msc = jnp.max(sc, axis=-1, keepdims=True)
            esc = jnp.exp(sc - msc)
            w = esc * pl.reciprocal(jnp.sum(esc, axis=-1, keepdims=True), approx=True)
            attn_b = mm(w, kb)                                 # (num_g, 32)
            part = mmw(attn_b, woutl[b * OUT_CHANNELS:(b + 1) * OUT_CHANNELS, :])
            acc = part if acc is None else acc + part
        xo = mm(gsel_ref[...], acc) + boutl_ref[...]           # (N, 32)

        # ---- global_max_pool with finite additive mask bias ---------------------
        mb = mbias_ref[...]                                    # (N, num_graphs)
        rows = [jnp.max(xo + mb[:, g:g + 1], axis=0, keepdims=True)
                for g in range(num_graphs)]
        pooled = jnp.concatenate(rows, axis=0)                 # (num_graphs, 32)

        # ---- ffn3 (soft prompt) --------------------------------------------------
        o_ref[...] = mmw(pooled, wf3_ref[...]) + bf3_ref[...]  # (num_graphs, token_dim)

    vmem_spec = pl.BlockSpec(memory_space=pltpu.MemorySpace.VMEM)
    # TODO(synk): at realistic graph sizes add a grid over options/edges with
    # dimension_semantics=("parallel", ...) so v7x's two TensorCores split the work
    # and the dense (N,E) one-hot matrices are tiled; at these KB-scale shapes a
    # single fused VMEM-resident call is fastest on all generations.
    soft_prompt = pl.pallas_call(
        kernel,
        out_shape=jax.ShapeDtypeStruct((num_graphs, TOKEN_DIM), jnp.float32),
        in_specs=[vmem_spec] * len(operands),
        out_specs=vmem_spec,
        compiler_params=pltpu.CompilerParams(vmem_limit_bytes=32 * 1024 * 1024),
    )(*operands)

    return soft_prompt.reshape(num_groups, OPTION_NUM, TOKEN_DIM)


# -----------------------------------------------------------------------------
if __name__ == "__main__":
    key = jax.random.PRNGKey(0)
    num_entities = 50
    num_groups = 2
    num_graphs = num_groups * OPTION_NUM        # 8 graphs
    nodes_per_graph = 3
    N = num_graphs * nodes_per_graph            # 24 nodes
    E = 40                                      # edges
    T = 8                                       # tokens per option

    kp, k2, k3, k4, k5 = jax.random.split(key, 5)
    params = init_params(kp, num_entities)

    concept_ids = jax.random.randint(k2, (N,), 0, num_entities, dtype=jnp.int32)
    edge_index = jax.random.randint(k3, (2, E), 0, N, dtype=jnp.int32)
    edge_type = jnp.zeros((E,), jnp.int32)      # unused by forward
    sentence_embeddings = jax.random.normal(k4, (num_groups, TOKEN_DIM), jnp.float32)
    # B of token_embedding must equal option_num for output_layer dims to match
    token_embedding = jax.random.normal(k5, (OPTION_NUM, T, TOKEN_DIM), jnp.float32)
    batch = jnp.repeat(jnp.arange(num_graphs, dtype=jnp.int32), nodes_per_graph)

    out = graph_transformer_forward(params, concept_ids, edge_index, edge_type,
                                    sentence_embeddings, token_embedding, batch,
                                    num_graphs=num_graphs)
    out = jax.block_until_ready(out)
    assert out.shape == (num_groups, OPTION_NUM, TOKEN_DIM)
    assert bool(jnp.all(jnp.isfinite(out)))
    print("KERNEL_OK")
</pallas_src>

<mosaic_0001>
module attributes {stable_mosaic.version = 11 : i64} {
  func.func @kernel(%arg0: memref<24x16xf32, #tpu.memory_space<vmem>>, %arg1: memref<24x48xf32, #tpu.memory_space<vmem>>, %arg2: memref<40x24xf32, #tpu.memory_space<vmem>>, %arg3: memref<40x24xf32, #tpu.memory_space<vmem>>, %arg4: memref<24x40xf32, #tpu.memory_space<vmem>>, %arg5: memref<32x4xf32, #tpu.memory_space<vmem>>, %arg6: memref<16x128xbf16, #tpu.memory_space<vmem>>, %arg7: memref<1x128xf32, #tpu.memory_space<vmem>>, %arg8: memref<48x32xbf16, #tpu.memory_space<vmem>>, %arg9: memref<1x32xf32, #tpu.memory_space<vmem>>, %arg10: memref<32x32xbf16, #tpu.memory_space<vmem>>, %arg11: memref<1x32xf32, #tpu.memory_space<vmem>>, %arg12: memref<32x96xbf16, #tpu.memory_space<vmem>>, %arg13: memref<1x96xf32, #tpu.memory_space<vmem>>, %arg14: memref<48x32xbf16, #tpu.memory_space<vmem>>, %arg15: memref<1x32xf32, #tpu.memory_space<vmem>>, %arg16: memref<32x32xbf16, #tpu.memory_space<vmem>>, %arg17: memref<1x32xf32, #tpu.memory_space<vmem>>, %arg18: memref<32x96xbf16, #tpu.memory_space<vmem>>, %arg19: memref<1x96xf32, #tpu.memory_space<vmem>>, %arg20: memref<48x32xbf16, #tpu.memory_space<vmem>>, %arg21: memref<1x32xf32, #tpu.memory_space<vmem>>, %arg22: memref<32x32xbf16, #tpu.memory_space<vmem>>, %arg23: memref<1x32xf32, #tpu.memory_space<vmem>>, %arg24: memref<32x32xbf16, #tpu.memory_space<vmem>>, %arg25: memref<1x32xf32, #tpu.memory_space<vmem>>, %arg26: memref<32x48xf32, #tpu.memory_space<vmem>>, %arg27: memref<48x32xbf16, #tpu.memory_space<vmem>>, %arg28: memref<1x32xf32, #tpu.memory_space<vmem>>, %arg29: memref<24x2xf32, #tpu.memory_space<vmem>>, %arg30: memref<128x32xbf16, #tpu.memory_space<vmem>>, %arg31: memref<1x32xf32, #tpu.memory_space<vmem>>, %arg32: memref<24x8xf32, #tpu.memory_space<vmem>>, %arg33: memref<32x48xbf16, #tpu.memory_space<vmem>>, %arg34: memref<1x48xf32, #tpu.memory_space<vmem>>, %arg35: memref<8x48xf32, #tpu.memory_space<vmem>>) attributes {dimension_semantics = [], scalar_prefetch = 0 : i64, scratch_operands = 0 : i64, tpu.core_type = #tpu.core_type<tc>} {
    %c0 = arith.constant 0 : index
    %c0_0 = arith.constant 0 : index
    %0 = vector.load %arg0[%c0, %c0_0] : memref<24x16xf32, #tpu.memory_space<vmem>>, vector<24x16xf32>
    %c0_1 = arith.constant 0 : index
    %c0_2 = arith.constant 0 : index
    %1 = vector.load %arg1[%c0_1, %c0_2] : memref<24x48xf32, #tpu.memory_space<vmem>>, vector<24x48xf32>
    %c0_3 = arith.constant 0 : index
    %c0_4 = arith.constant 0 : index
    %2 = vector.load %arg2[%c0_3, %c0_4] : memref<40x24xf32, #tpu.memory_space<vmem>>, vector<40x24xf32>
    %c0_5 = arith.constant 0 : index
    %c0_6 = arith.constant 0 : index
    %3 = vector.load %arg3[%c0_5, %c0_6] : memref<40x24xf32, #tpu.memory_space<vmem>>, vector<40x24xf32>
    %c0_7 = arith.constant 0 : index
    %c0_8 = arith.constant 0 : index
    %4 = vector.load %arg4[%c0_7, %c0_8] : memref<24x40xf32, #tpu.memory_space<vmem>>, vector<24x40xf32>
    %c0_9 = arith.constant 0 : index
    %c0_10 = arith.constant 0 : index
    %5 = vector.load %arg5[%c0_9, %c0_10] : memref<32x4xf32, #tpu.memory_space<vmem>>, vector<32x4xf32>
    %c0_11 = arith.constant 0 : index
    %c0_12 = arith.constant 0 : index
    %6 = vector.load %arg6[%c0_11, %c0_12] : memref<16x128xbf16, #tpu.memory_space<vmem>>, vector<16x128xbf16>
    %7 = arith.truncf %0 : vector<24x16xf32> to vector<24x16xbf16>
    %cst = arith.constant dense<0.000000e+00> : vector<24x128xf32>
    %8 = tpu.matmul %7, %6, %cst {dimension_numbers = #tpu.dot_dimension_numbers<[1], [0], [0], [1], [0, 0, 1, 1], [], []>} : vector<24x16xbf16>, vector<16x128xbf16>, vector<24x128xf32> -> vector<24x128xf32>
    %c0_13 = arith.constant 0 : index
    %c0_14 = arith.constant 0 : index
    %9 = vector.load %arg7[%c0_13, %c0_14] : memref<1x128xf32, #tpu.memory_space<vmem>>, vector<1x128xf32>
    %10 = vector.broadcast %9 : vector<1x128xf32> to vector<24x128xf32>
    %11 = arith.addf %8, %10 : vector<24x128xf32>
    %12 = vector.extract_strided_slice %11 {offsets = [0, 0], sizes = [24, 32], strides = [1, 1]} : vector<24x128xf32> to vector<24x32xf32>
    %13 = vector.extract_strided_slice %11 {offsets = [0, 32], sizes = [24, 32], strides = [1, 1]} : vector<24x128xf32> to vector<24x32xf32>
    %14 = vector.extract_strided_slice %11 {offsets = [0, 64], sizes = [24, 32], strides = [1, 1]} : vector<24x128xf32> to vector<24x32xf32>
    %15 = vector.extract_strided_slice %11 {offsets = [0, 96], sizes = [24, 32], strides = [1, 1]} : vector<24x128xf32> to vector<24x32xf32>
    %c0_15 = arith.constant 0 : index
    %c0_16 = arith.constant 0 : index
    %16 = vector.load %arg8[%c0_15, %c0_16] : memref<48x32xbf16, #tpu.memory_space<vmem>>, vector<48x32xbf16>
    %17 = arith.truncf %1 : vector<24x48xf32> to vector<24x48xbf16>
    %cst_17 = arith.constant dense<0.000000e+00> : vector<24x32xf32>
    %18 = tpu.matmul %17, %16, %cst_17 {dimension_numbers = #tpu.dot_dimension_numbers<[1], [0], [0], [1], [0, 0, 1, 1], [], []>} : vector<24x48xbf16>, vector<48x32xbf16>, vector<24x32xf32> -> vector<24x32xf32>
    %c0_18 = arith.constant 0 : index
    %c0_19 = arith.constant 0 : index
    %19 = vector.load %arg9[%c0_18, %c0_19] : memref<1x32xf32, #tpu.memory_space<vmem>>, vector<1x32xf32>
    %20 = vector.broadcast %19 : vector<1x32xf32> to vector<24x32xf32>
    %21 = arith.addf %18, %20 : vector<24x32xf32>
    %cst_20 = arith.constant dense<0.000000e+00> : vector<40x32xf32>
    %22 = tpu.matmul %2, %12, %cst_20 {dimension_numbers = #tpu.dot_dimension_numbers<[1], [0], [0], [1], [0, 0, 1, 1], [], []>} : vector<40x24xf32>, vector<24x32xf32>, vector<40x32xf32> -> vector<40x32xf32>
    %cst_21 = arith.constant dense<0.000000e+00> : vector<40x32xf32>
    %23 = tpu.matmul %3, %13, %cst_21 {dimension_numbers = #tpu.dot_dimension_numbers<[1], [0], [0], [1], [0, 0, 1, 1], [], []>} : vector<40x24xf32>, vector<24x32xf32>, vector<40x32xf32> -> vector<40x32xf32>
    %cst_22 = arith.constant dense<0.000000e+00> : vector<40x32xf32>
    %24 = tpu.matmul %3, %14, %cst_22 {dimension_numbers = #tpu.dot_dimension_numbers<[1], [0], [0], [1], [0, 0, 1, 1], [], []>} : vector<40x24xf32>, vector<24x32xf32>, vector<40x32xf32> -> vector<40x32xf32>
    %cst_23 = arith.constant dense<0.000000e+00> : vector<40x32xf32>
    %25 = tpu.matmul %2, %21, %cst_23 {dimension_numbers = #tpu.dot_dimension_numbers<[1], [0], [0], [1], [0, 0, 1, 1], [], []>} : vector<40x24xf32>, vector<24x32xf32>, vector<40x32xf32> -> vector<40x32xf32>
    %cst_24 = arith.constant dense<0.000000e+00> : vector<40x32xf32>
    %26 = tpu.matmul %3, %21, %cst_24 {dimension_numbers = #tpu.dot_dimension_numbers<[1], [0], [0], [1], [0, 0, 1, 1], [], []>} : vector<40x24xf32>, vector<24x32xf32>, vector<40x32xf32> -> vector<40x32xf32>
    %27 = arith.addf %22, %25 : vector<40x32xf32>
    %28 = arith.mulf %27, %23 : vector<40x32xf32>
    %29 = arith.mulf %22, %26 : vector<40x32xf32>
    %30 = arith.addf %28, %29 : vector<40x32xf32>
    %cst_25 = arith.constant dense<0.000000e+00> : vector<40x4xf32>
    %31 = tpu.matmul %30, %5, %cst_25 {dimension_numbers = #tpu.dot_dimension_numbers<[1], [0], [0], [1], [0, 0, 1, 1], [], []>} : vector<40x32xf32>, vector<32x4xf32>, vector<40x4xf32> -> vector<40x4xf32>
    %cst_26 = arith.constant 0.117851131 : f32
    %32 = vector.broadcast %cst_26 : f32 to vector<40x4xf32>
    %33 = arith.mulf %31, %32 : vector<40x4xf32>
    %cst_27 = arith.constant 0.000000e+00 : f32
    %34 = vector.broadcast %cst_27 : f32 to vector<40x4xf32>
    %35 = arith.cmpf oge, %33, %34 : vector<40x4xf32>
    %cst_28 = arith.constant 2.000000e-01 : f32
    %36 = vector.broadcast %cst_28 : f32 to vector<40x4xf32>
    %37 = arith.mulf %36, %33 : vector<40x4xf32>
    %38 = arith.select %35, %33, %37 : vector<40x4xi1>, vector<40x4xf32>
    %cst_29 = arith.constant dense<0xFF800000> : vector<4xf32>
    %39 = vector.multi_reduction <maximumf>, %38, %cst_29 [0] : vector<40x4xf32> to vector<4xf32>
    %40 = vector.shape_cast %39 : vector<4xf32> to vector<1x4xf32>
    %41 = vector.broadcast %40 : vector<1x4xf32> to vector<40x4xf32>
    %42 = arith.subf %38, %41 : vector<40x4xf32>
    %43 = math.exp %42 : vector<40x4xf32>
    %cst_30 = arith.constant dense<0.000000e+00> : vector<4xf32>
    %44 = vector.multi_reduction <add>, %43, %cst_30 [0] : vector<40x4xf32> to vector<4xf32>
    %45 = vector.shape_cast %44 : vector<4xf32> to vector<1x4xf32>
    %46 = tpu.reciprocal %45 {approx = true} : vector<1x4xf32> -> vector<1x4xf32>
    %47 = vector.broadcast %46 : vector<1x4xf32> to vector<40x4xf32>
    %48 = arith.mulf %43, %47 : vector<40x4xf32>
    %cst_31 = arith.constant dense<0.000000e+00> : vector<40x32xf32>
    %49 = tpu.matmul %48, %5, %cst_31 {dimension_numbers = #tpu.dot_dimension_numbers<[1], [1], [0], [0], [0, 0, 1, 0], [], []>} : vector<40x4xf32>, vector<32x4xf32>, vector<40x32xf32> -> vector<40x32xf32>
    %50 = arith.mulf %24, %49 : vector<40x32xf32>
    %cst_32 = arith.constant dense<0.000000e+00> : vector<24x32xf32>
    %51 = tpu.matmul %4, %50, %cst_32 {dimension_numbers = #tpu.dot_dimension_numbers<[1], [0], [0], [1], [0, 0, 1, 1], [], []>} : vector<24x40xf32>, vector<40x32xf32>, vector<24x32xf32> -> vector<24x32xf32>
    %c0_33 = arith.constant 0 : index
    %c0_34 = arith.constant 0 : index
    %52 = vector.load %arg10[%c0_33, %c0_34] : memref<32x32xbf16, #tpu.memory_space<vmem>>, vector<32x32xbf16>
    %53 = arith.truncf %51 : vector<24x32xf32> to vector<24x32xbf16>
    %cst_35 = arith.constant dense<0.000000e+00> : vector<24x32xf32>
    %54 = tpu.matmul %53, %52, %cst_35 {dimension_numbers = #tpu.dot_dimension_numbers<[1], [0], [0], [1], [0, 0, 1, 1], [], []>} : vector<24x32xbf16>, vector<32x32xbf16>, vector<24x32xf32> -> vector<24x32xf32>
    %c0_36 = arith.constant 0 : index
    %c0_37 = arith.constant 0 : index
    %55 = vector.load %arg11[%c0_36, %c0_37] : memref<1x32xf32, #tpu.memory_space<vmem>>, vector<1x32xf32>
    %56 = vector.broadcast %55 : vector<1x32xf32> to vector<24x32xf32>
    %57 = arith.addf %54, %56 : vector<24x32xf32>
    %58 = arith.addf %57, %15 : vector<24x32xf32>
    %c0_38 = arith.constant 0 : index
    %c0_39 = arith.constant 0 : index
    %59 = vector.load %arg12[%c0_38, %c0_39] : memref<32x96xbf16, #tpu.memory_space<vmem>>, vector<32x96xbf16>
    %60 = arith.truncf %58 : vector<24x32xf32> to vector<24x32xbf16>
    %cst_40 = arith.constant dense<0.000000e+00> : vector<24x96xf32>
    %61 = tpu.matmul %60, %59, %cst_40 {dimension_numbers = #tpu.dot_dimension_numbers<[1], [0], [0], [1], [0, 0, 1, 1], [], []>} : vector<24x32xbf16>, vector<32x96xbf16>, vector<24x96xf32> -> vector<24x96xf32>
    %c0_41 = arith.constant 0 : index
    %c0_42 = arith.constant 0 : index
    %62 = vector.load %arg13[%c0_41, %c0_42] : memref<1x96xf32, #tpu.memory_space<vmem>>, vector<1x96xf32>
    %63 = vector.broadcast %62 : vector<1x96xf32> to vector<24x96xf32>
    %64 = arith.addf %61, %63 : vector<24x96xf32>
    %65 = vector.extract_strided_slice %64 {offsets = [0, 0], sizes = [24, 32], strides = [1, 1]} : vector<24x96xf32> to vector<24x32xf32>
    %66 = vector.extract_strided_slice %64 {offsets = [0, 32], sizes = [24, 32], strides = [1, 1]} : vector<24x96xf32> to vector<24x32xf32>
    %67 = vector.extract_strided_slice %64 {offsets = [0, 64], sizes = [24, 32], strides = [1, 1]} : vector<24x96xf32> to vector<24x32xf32>
    %c0_43 = arith.constant 0 : index
    %c0_44 = arith.constant 0 : index
    %68 = vector.load %arg14[%c0_43, %c0_44] : memref<48x32xbf16, #tpu.memory_space<vmem>>, vector<48x32xbf16>
    %69 = arith.truncf %1 : vector<24x48xf32> to vector<24x48xbf16>
    %cst_45 = arith.constant dense<0.000000e+00> : vector<24x32xf32>
    %70 = tpu.matmul %69, %68, %cst_45 {dimension_numbers = #tpu.dot_dimension_numbers<[1], [0], [0], [1], [0, 0, 1, 1], [], []>} : vector<24x48xbf16>, vector<48x32xbf16>, vector<24x32xf32> -> vector<24x32xf32>
    %c0_46 = arith.constant 0 : index
    %c0_47 = arith.constant 0 : index
    %71 = vector.load %arg15[%c0_46, %c0_47] : memref<1x32xf32, #tpu.memory_space<vmem>>, vector<1x32xf32>
    %72 = vector.broadcast %71 : vector<1x32xf32> to vector<24x32xf32>
    %73 = arith.addf %70, %72 : vector<24x32xf32>
    %cst_48 = arith.constant dense<0.000000e+00> : vector<40x32xf32>
    %74 = tpu.matmul %2, %65, %cst_48 {dimension_numbers = #tpu.dot_dimension_numbers<[1], [0], [0], [1], [0, 0, 1, 1], [], []>} : vector<40x24xf32>, vector<24x32xf32>, vector<40x32xf32> -> vector<40x32xf32>
    %cst_49 = arith.constant dense<0.000000e+00> : vector<40x32xf32>
    %75 = tpu.matmul %3, %66, %cst_49 {dimension_numbers = #tpu.dot_dimension_numbers<[1], [0], [0], [1], [0, 0, 1, 1], [], []>} : vector<40x24xf32>, vector<24x32xf32>, vector<40x32xf32> -> vector<40x32xf32>
    %cst_50 = arith.constant dense<0.000000e+00> : vector<40x32xf32>
    %76 = tpu.matmul %3, %67, %cst_50 {dimension_numbers = #tpu.dot_dimension_numbers<[1], [0], [0], [1], [0, 0, 1, 1], [], []>} : vector<40x24xf32>, vector<24x32xf32>, vector<40x32xf32> -> vector<40x32xf32>
    %cst_51 = arith.constant dense<0.000000e+00> : vector<40x32xf32>
    %77 = tpu.matmul %2, %73, %cst_51 {dimension_numbers = #tpu.dot_dimension_numbers<[1], [0], [0], [1], [0, 0, 1, 1], [], []>} : vector<40x24xf32>, vector<24x32xf32>, vector<40x32xf32> -> vector<40x32xf32>
    %cst_52 = arith.constant dense<0.000000e+00> : vector<40x32xf32>
    %78 = tpu.matmul %3, %73, %cst_52 {dimension_numbers = #tpu.dot_dimension_numbers<[1], [0], [0], [1], [0, 0, 1, 1], [], []>} : vector<40x24xf32>, vector<24x32xf32>, vector<40x32xf32> -> vector<40x32xf32>
    %79 = arith.addf %74, %77 : vector<40x32xf32>
    %80 = arith.mulf %79, %75 : vector<40x32xf32>
    %81 = arith.mulf %74, %78 : vector<40x32xf32>
    %82 = arith.addf %80, %81 : vector<40x32xf32>
    %cst_53 = arith.constant dense<0.000000e+00> : vector<40x4xf32>
    %83 = tpu.matmul %82, %5, %cst_53 {dimension_numbers = #tpu.dot_dimension_numbers<[1], [0], [0], [1], [0, 0, 1, 1], [], []>} : vector<40x32xf32>, vector<32x4xf32>, vector<40x4xf32> -> vector<40x4xf32>
    %cst_54 = arith.constant 0.117851131 : f32
    %84 = vector.broadcast %cst_54 : f32 to vector<40x4xf32>
    %85 = arith.mulf %83, %84 : vector<40x4xf32>
    %cst_55 = arith.constant 0.000000e+00 : f32
    %86 = vector.broadcast %cst_55 : f32 to vector<40x4xf32>
    %87 = arith.cmpf oge, %85, %86 : vector<40x4xf32>
    %cst_56 = arith.constant 2.000000e-01 : f32
    %88 = vector.broadcast %cst_56 : f32 to vector<40x4xf32>
    %89 = arith.mulf %88, %85 : vector<40x4xf32>
    %90 = arith.select %87, %85, %89 : vector<40x4xi1>, vector<40x4xf32>
    %cst_57 = arith.constant dense<0xFF800000> : vector<4xf32>
    %91 = vector.multi_reduction <maximumf>, %90, %cst_57 [0] : vector<40x4xf32> to vector<4xf32>
    %92 = vector.shape_cast %91 : vector<4xf32> to vector<1x4xf32>
    %93 = vector.broadcast %92 : vector<1x4xf32> to vector<40x4xf32>
    %94 = arith.subf %90, %93 : vector<40x4xf32>
    %95 = math.exp %94 : vector<40x4xf32>
    %cst_58 = arith.constant dense<0.000000e+00> : vector<4xf32>
    %96 = vector.multi_reduction <add>, %95, %cst_58 [0] : vector<40x4xf32> to vector<4xf32>
    %97 = vector.shape_cast %96 : vector<4xf32> to vector<1x4xf32>
    %98 = tpu.reciprocal %97 {approx = true} : vector<1x4xf32> -> vector<1x4xf32>
    %99 = vector.broadcast %98 : vector<1x4xf32> to vector<40x4xf32>
    %100 = arith.mulf %95, %99 : vector<40x4xf32>
    %cst_59 = arith.constant dense<0.000000e+00> : vector<40x32xf32>
    %101 = tpu.matmul %100, %5, %cst_59 {dimension_numbers = #tpu.dot_dimension_numbers<[1], [1], [0], [0], [0, 0, 1, 0], [], []>} : vector<40x4xf32>, vector<32x4xf32>, vector<40x32xf32> -> vector<40x32xf32>
    %102 = arith.mulf %76, %101 : vector<40x32xf32>
    %cst_60 = arith.constant dense<0.000000e+00> : vector<24x32xf32>
    %103 = tpu.matmul %4, %102, %cst_60 {dimension_numbers = #tpu.dot_dimension_numbers<[1], [0], [0], [1], [0, 0, 1, 1], [], []>} : vector<24x40xf32>, vector<40x32xf32>, vector<24x32xf32> -> vector<24x32xf32>
    %c0_61 = arith.constant 0 : index
    %c0_62 = arith.constant 0 : index
    %104 = vector.load %arg16[%c0_61, %c0_62] : memref<32x32xbf16, #tpu.memory_space<vmem>>, vector<32x32xbf16>
    %105 = arith.truncf %103 : vector<24x32xf32> to vector<24x32xbf16>
    %cst_63 = arith.constant dense<0.000000e+00> : vector<24x32xf32>
    %106 = tpu.matmul %105, %104, %cst_63 {dimension_numbers = #tpu.dot_dimension_numbers<[1], [0], [0], [1], [0, 0, 1, 1], [], []>} : vector<24x32xbf16>, vector<32x32xbf16>, vector<24x32xf32> -> vector<24x32xf32>
    %c0_64 = arith.constant 0 : index
    %c0_65 = arith.constant 0 : index
    %107 = vector.load %arg17[%c0_64, %c0_65] : memref<1x32xf32, #tpu.memory_space<vmem>>, vector<1x32xf32>
    %108 = vector.broadcast %107 : vector<1x32xf32> to vector<24x32xf32>
    %109 = arith.addf %106, %108 : vector<24x32xf32>
    %110 = arith.addf %109, %58 : vector<24x32xf32>
    %c0_66 = arith.constant 0 : index
    %c0_67 = arith.constant 0 : index
    %111 = vector.load %arg18[%c0_66, %c0_67] : memref<32x96xbf16, #tpu.memory_space<vmem>>, vector<32x96xbf16>
    %112 = arith.truncf %110 : vector<24x32xf32> to vector<24x32xbf16>
    %cst_68 = arith.constant dense<0.000000e+00> : vector<24x96xf32>
    %113 = tpu.matmul %112, %111, %cst_68 {dimension_numbers = #tpu.dot_dimension_numbers<[1], [0], [0], [1], [0, 0, 1, 1], [], []>} : vector<24x32xbf16>, vector<32x96xbf16>, vector<24x96xf32> -> vector<24x96xf32>
    %c0_69 = arith.constant 0 : index
    %c0_70 = arith.constant 0 : index
    %114 = vector.load %arg19[%c0_69, %c0_70] : memref<1x96xf32, #tpu.memory_space<vmem>>, vector<1x96xf32>
    %115 = vector.broadcast %114 : vector<1x96xf32> to vector<24x96xf32>
    %116 = arith.addf %113, %115 : vector<24x96xf32>
    %117 = vector.extract_strided_slice %116 {offsets = [0, 0], sizes = [24, 32], strides = [1, 1]} : vector<24x96xf32> to vector<24x32xf32>
    %118 = vector.extract_strided_slice %116 {offsets = [0, 32], sizes = [24, 32], strides = [1, 1]} : vector<24x96xf32> to vector<24x32xf32>
    %119 = vector.extract_strided_slice %116 {offsets = [0, 64], sizes = [24, 32], strides = [1, 1]} : vector<24x96xf32> to vector<24x32xf32>
    %c0_71 = arith.constant 0 : index
    %c0_72 = arith.constant 0 : index
    %120 = vector.load %arg20[%c0_71, %c0_72] : memref<48x32xbf16, #tpu.memory_space<vmem>>, vector<48x32xbf16>
    %121 = arith.truncf %1 : vector<24x48xf32> to vector<24x48xbf16>
    %cst_73 = arith.constant dense<0.000000e+00> : vector<24x32xf32>
    %122 = tpu.matmul %121, %120, %cst_73 {dimension_numbers = #tpu.dot_dimension_numbers<[1], [0], [0], [1], [0, 0, 1, 1], [], []>} : vector<24x48xbf16>, vector<48x32xbf16>, vector<24x32xf32> -> vector<24x32xf32>
    %c0_74 = arith.constant 0 : index
    %c0_75 = arith.constant 0 : index
    %123 = vector.load %arg21[%c0_74, %c0_75] : memref<1x32xf32, #tpu.memory_space<vmem>>, vector<1x32xf32>
    %124 = vector.broadcast %123 : vector<1x32xf32> to vector<24x32xf32>
    %125 = arith.addf %122, %124 : vector<24x32xf32>
    %cst_76 = arith.constant dense<0.000000e+00> : vector<40x32xf32>
    %126 = tpu.matmul %2, %117, %cst_76 {dimension_numbers = #tpu.dot_dimension_numbers<[1], [0], [0], [1], [0, 0, 1, 1], [], []>} : vector<40x24xf32>, vector<24x32xf32>, vector<40x32xf32> -> vector<40x32xf32>
    %cst_77 = arith.constant dense<0.000000e+00> : vector<40x32xf32>
    %127 = tpu.matmul %3, %118, %cst_77 {dimension_numbers = #tpu.dot_dimension_numbers<[1], [0], [0], [1], [0, 0, 1, 1], [], []>} : vector<40x24xf32>, vector<24x32xf32>, vector<40x32xf32> -> vector<40x32xf32>
    %cst_78 = arith.constant dense<0.000000e+00> : vector<40x32xf32>
    %128 = tpu.matmul %3, %119, %cst_78 {dimension_numbers = #tpu.dot_dimension_numbers<[1], [0], [0], [1], [0, 0, 1, 1], [], []>} : vector<40x24xf32>, vector<24x32xf32>, vector<40x32xf32> -> vector<40x32xf32>
    %cst_79 = arith.constant dense<0.000000e+00> : vector<40x32xf32>
    %129 = tpu.matmul %2, %125, %cst_79 {dimension_numbers = #tpu.dot_dimension_numbers<[1], [0], [0], [1], [0, 0, 1, 1], [], []>} : vector<40x24xf32>, vector<24x32xf32>, vector<40x32xf32> -> vector<40x32xf32>
    %cst_80 = arith.constant dense<0.000000e+00> : vector<40x32xf32>
    %130 = tpu.matmul %3, %125, %cst_80 {dimension_numbers = #tpu.dot_dimension_numbers<[1], [0], [0], [1], [0, 0, 1, 1], [], []>} : vector<40x24xf32>, vector<24x32xf32>, vector<40x32xf32> -> vector<40x32xf32>
    %131 = arith.addf %126, %129 : vector<40x32xf32>
    %132 = arith.mulf %131, %127 : vector<40x32xf32>
    %133 = arith.mulf %126, %130 : vector<40x32xf32>
    %134 = arith.addf %132, %133 : vector<40x32xf32>
    %cst_81 = arith.constant dense<0.000000e+00> : vector<40x4xf32>
    %135 = tpu.matmul %134, %5, %cst_81 {dimension_numbers = #tpu.dot_dimension_numbers<[1], [0], [0], [1], [0, 0, 1, 1], [], []>} : vector<40x32xf32>, vector<32x4xf32>, vector<40x4xf32> -> vector<40x4xf32>
    %cst_82 = arith.constant 0.117851131 : f32
    %136 = vector.broadcast %cst_82 : f32 to vector<40x4xf32>
    %137 = arith.mulf %135, %136 : vector<40x4xf32>
    %cst_83 = arith.constant 0.000000e+00 : f32
    %138 = vector.broadcast %cst_83 : f32 to vector<40x4xf32>
    %139 = arith.cmpf oge, %137, %138 : vector<40x4xf32>
    %cst_84 = arith.constant 2.000000e-01 : f32
    %140 = vector.broadcast %cst_84 : f32 to vector<40x4xf32>
    %141 = arith.mulf %140, %137 : vector<40x4xf32>
    %142 = arith.select %139, %137, %141 : vector<40x4xi1>, vector<40x4xf32>
    %cst_85 = arith.constant dense<0xFF800000> : vector<4xf32>
    %143 = vector.multi_reduction <maximumf>, %142, %cst_85 [0] : vector<40x4xf32> to vector<4xf32>
    %144 = vector.shape_cast %143 : vector<4xf32> to vector<1x4xf32>
    %145 = vector.broadcast %144 : vector<1x4xf32> to vector<40x4xf32>
    %146 = arith.subf %142, %145 : vector<40x4xf32>
    %147 = math.exp %146 : vector<40x4xf32>
    %cst_86 = arith.constant dense<0.000000e+00> : vector<4xf32>
    %148 = vector.multi_reduction <add>, %147, %cst_86 [0] : vector<40x4xf32> to vector<4xf32>
    %149 = vector.shape_cast %148 : vector<4xf32> to vector<1x4xf32>
    %150 = tpu.reciprocal %149 {approx = true} : vector<1x4xf32> -> vector<1x4xf32>
    %151 = vector.broadcast %150 : vector<1x4xf32> to vector<40x4xf32>
    %152 = arith.mulf %147, %151 : vector<40x4xf32>
    %cst_87 = arith.constant dense<0.000000e+00> : vector<40x32xf32>
    %153 = tpu.matmul %152, %5, %cst_87 {dimension_numbers = #tpu.dot_dimension_numbers<[1], [1], [0], [0], [0, 0, 1, 0], [], []>} : vector<40x4xf32>, vector<32x4xf32>, vector<40x32xf32> -> vector<40x32xf32>
    %154 = arith.mulf %128, %153 : vector<40x32xf32>
    %cst_88 = arith.constant dense<0.000000e+00> : vector<24x32xf32>
    %155 = tpu.matmul %4, %154, %cst_88 {dimension_numbers = #tpu.dot_dimension_numbers<[1], [0], [0], [1], [0, 0, 1, 1], [], []>} : vector<24x40xf32>, vector<40x32xf32>, vector<24x32xf32> -> vector<24x32xf32>
    %c0_89 = arith.constant 0 : index
    %c0_90 = arith.constant 0 : index
    %156 = vector.load %arg22[%c0_89, %c0_90] : memref<32x32xbf16, #tpu.memory_space<vmem>>, vector<32x32xbf16>
    %157 = arith.truncf %155 : vector<24x32xf32> to vector<24x32xbf16>
    %cst_91 = arith.constant dense<0.000000e+00> : vector<24x32xf32>
    %158 = tpu.matmul %157, %156, %cst_91 {dimension_numbers = #tpu.dot_dimension_numbers<[1], [0], [0], [1], [0, 0, 1, 1], [], []>} : vector<24x32xbf16>, vector<32x32xbf16>, vector<24x32xf32> -> vector<24x32xf32>
    %c0_92 = arith.constant 0 : index
    %c0_93 = arith.constant 0 : index
    %159 = vector.load %arg23[%c0_92, %c0_93] : memref<1x32xf32, #tpu.memory_space<vmem>>, vector<1x32xf32>
    %160 = vector.broadcast %159 : vector<1x32xf32> to vector<24x32xf32>
    %161 = arith.addf %158, %160 : vector<24x32xf32>
    %162 = arith.addf %161, %110 : vector<24x32xf32>
    %c0_94 = arith.constant 0 : index
    %c0_95 = arith.constant 0 : index
    %163 = vector.load %arg24[%c0_94, %c0_95] : memref<32x32xbf16, #tpu.memory_space<vmem>>, vector<32x32xbf16>
    %164 = arith.truncf %162 : vector<24x32xf32> to vector<24x32xbf16>
    %cst_96 = arith.constant dense<0.000000e+00> : vector<24x32xf32>
    %165 = tpu.matmul %164, %163, %cst_96 {dimension_numbers = #tpu.dot_dimension_numbers<[1], [0], [0], [1], [0, 0, 1, 1], [], []>} : vector<24x32xbf16>, vector<32x32xbf16>, vector<24x32xf32> -> vector<24x32xf32>
    %c0_97 = arith.constant 0 : index
    %c0_98 = arith.constant 0 : index
    %166 = vector.load %arg25[%c0_97, %c0_98] : memref<1x32xf32, #tpu.memory_space<vmem>>, vector<1x32xf32>
    %167 = vector.broadcast %166 : vector<1x32xf32> to vector<24x32xf32>
    %168 = arith.addf %165, %167 : vector<24x32xf32>
    %c0_99 = arith.constant 0 : index
    %c0_100 = arith.constant 0 : index
    %169 = vector.load %arg26[%c0_99, %c0_100] : memref<32x48xf32, #tpu.memory_space<vmem>>, vector<32x48xf32>
    %c0_101 = arith.constant 0 : index
    %c0_102 = arith.constant 0 : index
    %170 = vector.load %arg27[%c0_101, %c0_102] : memref<48x32xbf16, #tpu.memory_space<vmem>>, vector<48x32xbf16>
    %171 = arith.truncf %169 : vector<32x48xf32> to vector<32x48xbf16>
    %cst_103 = arith.constant dense<0.000000e+00> : vector<32x32xf32>
    %172 = tpu.matmul %171, %170, %cst_103 {dimension_numbers = #tpu.dot_dimension_numbers<[1], [0], [0], [1], [0, 0, 1, 1], [], []>} : vector<32x48xbf16>, vector<48x32xbf16>, vector<32x32xf32> -> vector<32x32xf32>
    %c0_104 = arith.constant 0 : index
    %c0_105 = arith.constant 0 : index
    %173 = vector.load %arg28[%c0_104, %c0_105] : memref<1x32xf32, #tpu.memory_space<vmem>>, vector<1x32xf32>
    %174 = vector.broadcast %173 : vector<1x32xf32> to vector<32x32xf32>
    %175 = arith.addf %172, %174 : vector<32x32xf32>
    %176 = vector.extract_strided_slice %168 {offsets = [0, 0], sizes = [2, 32], strides = [1, 1]} : vector<24x32xf32> to vector<2x32xf32>
    %c0_106 = arith.constant 0 : index
    %c0_107 = arith.constant 0 : index
    %177 = vector.load %arg30[%c0_106, %c0_107] : memref<128x32xbf16, #tpu.memory_space<vmem>>, vector<128x32xbf16>
    %178 = vector.extract_strided_slice %175 {offsets = [0, 0], sizes = [8, 32], strides = [1, 1]} : vector<32x32xf32> to vector<8x32xf32>
    %cst_108 = arith.constant dense<0.000000e+00> : vector<2x8xf32>
    %179 = tpu.matmul %176, %178, %cst_108 {dimension_numbers = #tpu.dot_dimension_numbers<[1], [1], [0], [0], [0, 0, 1, 0], [], []>} : vector<2x32xf32>, vector<8x32xf32>, vector<2x8xf32> -> vector<2x8xf32>
    %cst_109 = arith.constant 0.176776692 : f32
    %180 = vector.broadcast %cst_109 : f32 to vector<2x8xf32>
    %181 = arith.mulf %179, %180 : vector<2x8xf32>
    %cst_110 = arith.constant dense<0xFF800000> : vector<2xf32>
    %182 = vector.multi_reduction <maximumf>, %181, %cst_110 [1] : vector<2x8xf32> to vector<2xf32>
    %183 = vector.shape_cast %182 : vector<2xf32> to vector<2x1xf32>
    %184 = vector.broadcast %183 : vector<2x1xf32> to vector<2x8xf32>
    %185 = arith.subf %181, %184 : vector<2x8xf32>
    %186 = math.exp %185 : vector<2x8xf32>
    %cst_111 = arith.constant dense<0.000000e+00> : vector<2xf32>
    %187 = vector.multi_reduction <add>, %186, %cst_111 [1] : vector<2x8xf32> to vector<2xf32>
    %188 = vector.shape_cast %187 : vector<2xf32> to vector<2x1xf32>
    %189 = tpu.reciprocal %188 {approx = true} : vector<2x1xf32> -> vector<2x1xf32>
    %190 = vector.broadcast %189 : vector<2x1xf32> to vector<2x8xf32>
    %191 = arith.mulf %186, %190 : vector<2x8xf32>
    %cst_112 = arith.constant dense<0.000000e+00> : vector<2x32xf32>
    %192 = tpu.matmul %191, %178, %cst_112 {dimension_numbers = #tpu.dot_dimension_numbers<[1], [0], [0], [1], [0, 0, 1, 1], [], []>} : vector<2x8xf32>, vector<8x32xf32>, vector<2x32xf32> -> vector<2x32xf32>
    %193 = vector.extract_strided_slice %177 {offsets = [0, 0], sizes = [32, 32], strides = [1, 1]} : vector<128x32xbf16> to vector<32x32xbf16>
    %194 = arith.truncf %192 : vector<2x32xf32> to vector<2x32xbf16>
    %cst_113 = arith.constant dense<0.000000e+00> : vector<2x32xf32>
    %195 = tpu.matmul %194, %193, %cst_113 {dimension_numbers = #tpu.dot_dimension_numbers<[1], [0], [0], [1], [0, 0, 1, 1], [], []>} : vector<2x32xbf16>, vector<32x32xbf16>, vector<2x32xf32> -> vector<2x32xf32>
    %196 = vector.extract_strided_slice %175 {offsets = [8, 0], sizes = [8, 32], strides = [1, 1]} : vector<32x32xf32> to vector<8x32xf32>
    %cst_114 = arith.constant dense<0.000000e+00> : vector<2x8xf32>
    %197 = tpu.matmul %176, %196, %cst_114 {dimension_numbers = #tpu.dot_dimension_numbers<[1], [1], [0], [0], [0, 0, 1, 0], [], []>} : vector<2x32xf32>, vector<8x32xf32>, vector<2x8xf32> -> vector<2x8xf32>
    %cst_115 = arith.constant 0.176776692 : f32
    %198 = vector.broadcast %cst_115 : f32 to vector<2x8xf32>
    %199 = arith.mulf %197, %198 : vector<2x8xf32>
    %cst_116 = arith.constant dense<0xFF800000> : vector<2xf32>
    %200 = vector.multi_reduction <maximumf>, %199, %cst_116 [1] : vector<2x8xf32> to vector<2xf32>
    %201 = vector.shape_cast %200 : vector<2xf32> to vector<2x1xf32>
    %202 = vector.broadcast %201 : vector<2x1xf32> to vector<2x8xf32>
    %203 = arith.subf %199, %202 : vector<2x8xf32>
    %204 = math.exp %203 : vector<2x8xf32>
    %cst_117 = arith.constant dense<0.000000e+00> : vector<2xf32>
    %205 = vector.multi_reduction <add>, %204, %cst_117 [1] : vector<2x8xf32> to vector<2xf32>
    %206 = vector.shape_cast %205 : vector<2xf32> to vector<2x1xf32>
    %207 = tpu.reciprocal %206 {approx = true} : vector<2x1xf32> -> vector<2x1xf32>
    %208 = vector.broadcast %207 : vector<2x1xf32> to vector<2x8xf32>
    %209 = arith.mulf %204, %208 : vector<2x8xf32>
    %cst_118 = arith.constant dense<0.000000e+00> : vector<2x32xf32>
    %210 = tpu.matmul %209, %196, %cst_118 {dimension_numbers = #tpu.dot_dimension_numbers<[1], [0], [0], [1], [0, 0, 1, 1], [], []>} : vector<2x8xf32>, vector<8x32xf32>, vector<2x32xf32> -> vector<2x32xf32>
    %211 = vector.extract_strided_slice %177 {offsets = [32, 0], sizes = [32, 32], strides = [1, 1]} : vector<128x32xbf16> to vector<32x32xbf16>
    %212 = arith.truncf %210 : vector<2x32xf32> to vector<2x32xbf16>
    %cst_119 = arith.constant dense<0.000000e+00> : vector<2x32xf32>
    %213 = tpu.matmul %212, %211, %cst_119 {dimension_numbers = #tpu.dot_dimension_numbers<[1], [0], [0], [1], [0, 0, 1, 1], [], []>} : vector<2x32xbf16>, vector<32x32xbf16>, vector<2x32xf32> -> vector<2x32xf32>
    %214 = arith.addf %195, %213 : vector<2x32xf32>
    %215 = vector.extract_strided_slice %175 {offsets = [16, 0], sizes = [8, 32], strides = [1, 1]} : vector<32x32xf32> to vector<8x32xf32>
    %cst_120 = arith.constant dense<0.000000e+00> : vector<2x8xf32>
    %216 = tpu.matmul %176, %215, %cst_120 {dimension_numbers = #tpu.dot_dimension_numbers<[1], [1], [0], [0], [0, 0, 1, 0], [], []>} : vector<2x32xf32>, vector<8x32xf32>, vector<2x8xf32> -> vector<2x8xf32>
    %cst_121 = arith.constant 0.176776692 : f32
    %217 = vector.broadcast %cst_121 : f32 to vector<2x8xf32>
    %218 = arith.mulf %216, %217 : vector<2x8xf32>
    %cst_122 = arith.constant dense<0xFF800000> : vector<2xf32>
    %219 = vector.multi_reduction <maximumf>, %218, %cst_122 [1] : vector<2x8xf32> to vector<2xf32>
    %220 = vector.shape_cast %219 : vector<2xf32> to vector<2x1xf32>
    %221 = vector.broadcast %220 : vector<2x1xf32> to vector<2x8xf32>
    %222 = arith.subf %218, %221 : vector<2x8xf32>
    %223 = math.exp %222 : vector<2x8xf32>
    %cst_123 = arith.constant dense<0.000000e+00> : vector<2xf32>
    %224 = vector.multi_reduction <add>, %223, %cst_123 [1] : vector<2x8xf32> to vector<2xf32>
    %225 = vector.shape_cast %224 : vector<2xf32> to vector<2x1xf32>
    %226 = tpu.reciprocal %225 {approx = true} : vector<2x1xf32> -> vector<2x1xf32>
    %227 = vector.broadcast %226 : vector<2x1xf32> to vector<2x8xf32>
    %228 = arith.mulf %223, %227 : vector<2x8xf32>
    %cst_124 = arith.constant dense<0.000000e+00> : vector<2x32xf32>
    %229 = tpu.matmul %228, %215, %cst_124 {dimension_numbers = #tpu.dot_dimension_numbers<[1], [0], [0], [1], [0, 0, 1, 1], [], []>} : vector<2x8xf32>, vector<8x32xf32>, vector<2x32xf32> -> vector<2x32xf32>
    %230 = vector.extract_strided_slice %177 {offsets = [64, 0], sizes = [32, 32], strides = [1, 1]} : vector<128x32xbf16> to vector<32x32xbf16>
    %231 = arith.truncf %229 : vector<2x32xf32> to vector<2x32xbf16>
    %cst_125 = arith.constant dense<0.000000e+00> : vector<2x32xf32>
    %232 = tpu.matmul %231, %230, %cst_125 {dimension_numbers = #tpu.dot_dimension_numbers<[1], [0], [0], [1], [0, 0, 1, 1], [], []>} : vector<2x32xbf16>, vector<32x32xbf16>, vector<2x32xf32> -> vector<2x32xf32>
    %233 = arith.addf %214, %232 : vector<2x32xf32>
    %234 = vector.extract_strided_slice %175 {offsets = [24, 0], sizes = [8, 32], strides = [1, 1]} : vector<32x32xf32> to vector<8x32xf32>
    %cst_126 = arith.constant dense<0.000000e+00> : vector<2x8xf32>
    %235 = tpu.matmul %176, %234, %cst_126 {dimension_numbers = #tpu.dot_dimension_numbers<[1], [1], [0], [0], [0, 0, 1, 0], [], []>} : vector<2x32xf32>, vector<8x32xf32>, vector<2x8xf32> -> vector<2x8xf32>
    %cst_127 = arith.constant 0.176776692 : f32
    %236 = vector.broadcast %cst_127 : f32 to vector<2x8xf32>
    %237 = arith.mulf %235, %236 : vector<2x8xf32>
    %cst_128 = arith.constant dense<0xFF800000> : vector<2xf32>
    %238 = vector.multi_reduction <maximumf>, %237, %cst_128 [1] : vector<2x8xf32> to vector<2xf32>
    %239 = vector.shape_cast %238 : vector<2xf32> to vector<2x1xf32>
    %240 = vector.broadcast %239 : vector<2x1xf32> to vector<2x8xf32>
    %241 = arith.subf %237, %240 : vector<2x8xf32>
    %242 = math.exp %241 : vector<2x8xf32>
    %cst_129 = arith.constant dense<0.000000e+00> : vector<2xf32>
    %243 = vector.multi_reduction <add>, %242, %cst_129 [1] : vector<2x8xf32> to vector<2xf32>
    %244 = vector.shape_cast %243 : vector<2xf32> to vector<2x1xf32>
    %245 = tpu.reciprocal %244 {approx = true} : vector<2x1xf32> -> vector<2x1xf32>
    %246 = vector.broadcast %245 : vector<2x1xf32> to vector<2x8xf32>
    %247 = arith.mulf %242, %246 : vector<2x8xf32>
    %cst_130 = arith.constant dense<0.000000e+00> : vector<2x32xf32>
    %248 = tpu.matmul %247, %234, %cst_130 {dimension_numbers = #tpu.dot_dimension_numbers<[1], [0], [0], [1], [0, 0, 1, 1], [], []>} : vector<2x8xf32>, vector<8x32xf32>, vector<2x32xf32> -> vector<2x32xf32>
    %249 = vector.extract_strided_slice %177 {offsets = [96, 0], sizes = [32, 32], strides = [1, 1]} : vector<128x32xbf16> to vector<32x32xbf16>
    %250 = arith.truncf %248 : vector<2x32xf32> to vector<2x32xbf16>
    %cst_131 = arith.constant dense<0.000000e+00> : vector<2x32xf32>
    %251 = tpu.matmul %250, %249, %cst_131 {dimension_numbers = #tpu.dot_dimension_numbers<[1], [0], [0], [1], [0, 0, 1, 1], [], []>} : vector<2x32xbf16>, vector<32x32xbf16>, vector<2x32xf32> -> vector<2x32xf32>
    %252 = arith.addf %233, %251 : vector<2x32xf32>
    %c0_132 = arith.constant 0 : index
    %c0_133 = arith.constant 0 : index
    %253 = vector.load %arg29[%c0_132, %c0_133] : memref<24x2xf32, #tpu.memory_space<vmem>>, vector<24x2xf32>
    %cst_134 = arith.constant dense<0.000000e+00> : vector<24x32xf32>
    %254 = tpu.matmul %253, %252, %cst_134 {dimension_numbers = #tpu.dot_dimension_numbers<[1], [0], [0], [1], [0, 0, 1, 1], [], []>} : vector<24x2xf32>, vector<2x32xf32>, vector<24x32xf32> -> vector<24x32xf32>
    %c0_135 = arith.constant 0 : index
    %c0_136 = arith.constant 0 : index
    %255 = vector.load %arg31[%c0_135, %c0_136] : memref<1x32xf32, #tpu.memory_space<vmem>>, vector<1x32xf32>
    %256 = vector.broadcast %255 : vector<1x32xf32> to vector<24x32xf32>
    %257 = arith.addf %254, %256 : vector<24x32xf32>
    %c0_137 = arith.constant 0 : index
    %c0_138 = arith.constant 0 : index
    %258 = vector.load %arg32[%c0_137, %c0_138] : memref<24x8xf32, #tpu.memory_space<vmem>>, vector<24x8xf32>
    %259 = vector.extract_strided_slice %258 {offsets = [0, 0], sizes = [24, 1], strides = [1, 1]} : vector<24x8xf32> to vector<24x1xf32>
    %260 = vector.broadcast %259 : vector<24x1xf32> to vector<24x32xf32>
    %261 = arith.addf %257, %260 : vector<24x32xf32>
    %cst_139 = arith.constant dense<0xFF800000> : vector<32xf32>
    %262 = vector.multi_reduction <maximumf>, %261, %cst_139 [0] : vector<24x32xf32> to vector<32xf32>
    %263 = vector.shape_cast %262 : vector<32xf32> to vector<1x32xf32>
    %264 = vector.extract_strided_slice %258 {offsets = [0, 1], sizes = [24, 1], strides = [1, 1]} : vector<24x8xf32> to vector<24x1xf32>
    %265 = vector.broadcast %264 : vector<24x1xf32> to vector<24x32xf32>
    %266 = arith.addf %257, %265 : vector<24x32xf32>
    %cst_140 = arith.constant dense<0xFF800000> : vector<32xf32>
    %267 = vector.multi_reduction <maximumf>, %266, %cst_140 [0] : vector<24x32xf32> to vector<32xf32>
    %268 = vector.shape_cast %267 : vector<32xf32> to vector<1x32xf32>
    %269 = vector.extract_strided_slice %258 {offsets = [0, 2], sizes = [24, 1], strides = [1, 1]} : vector<24x8xf32> to vector<24x1xf32>
    %270 = vector.broadcast %269 : vector<24x1xf32> to vector<24x32xf32>
    %271 = arith.addf %257, %270 : vector<24x32xf32>
    %cst_141 = arith.constant dense<0xFF800000> : vector<32xf32>
    %272 = vector.multi_reduction <maximumf>, %271, %cst_141 [0] : vector<24x32xf32> to vector<32xf32>
    %273 = vector.shape_cast %272 : vector<32xf32> to vector<1x32xf32>
    %274 = vector.extract_strided_slice %258 {offsets = [0, 3], sizes = [24, 1], strides = [1, 1]} : vector<24x8xf32> to vector<24x1xf32>
    %275 = vector.broadcast %274 : vector<24x1xf32> to vector<24x32xf32>
    %276 = arith.addf %257, %275 : vector<24x32xf32>
    %cst_142 = arith.constant dense<0xFF800000> : vector<32xf32>
    %277 = vector.multi_reduction <maximumf>, %276, %cst_142 [0] : vector<24x32xf32> to vector<32xf32>
    %278 = vector.shape_cast %277 : vector<32xf32> to vector<1x32xf32>
    %279 = vector.extract_strided_slice %258 {offsets = [0, 4], sizes = [24, 1], strides = [1, 1]} : vector<24x8xf32> to vector<24x1xf32>
    %280 = vector.broadcast %279 : vector<24x1xf32> to vector<24x32xf32>
    %281 = arith.addf %257, %280 : vector<24x32xf32>
    %cst_143 = arith.constant dense<0xFF800000> : vector<32xf32>
    %282 = vector.multi_reduction <maximumf>, %281, %cst_143 [0] : vector<24x32xf32> to vector<32xf32>
    %283 = vector.shape_cast %282 : vector<32xf32> to vector<1x32xf32>
    %284 = vector.extract_strided_slice %258 {offsets = [0, 5], sizes = [24, 1], strides = [1, 1]} : vector<24x8xf32> to vector<24x1xf32>
    %285 = vector.broadcast %284 : vector<24x1xf32> to vector<24x32xf32>
    %286 = arith.addf %257, %285 : vector<24x32xf32>
    %cst_144 = arith.constant dense<0xFF800000> : vector<32xf32>
    %287 = vector.multi_reduction <maximumf>, %286, %cst_144 [0] : vector<24x32xf32> to vector<32xf32>
    %288 = vector.shape_cast %287 : vector<32xf32> to vector<1x32xf32>
    %289 = vector.extract_strided_slice %258 {offsets = [0, 6], sizes = [24, 1], strides = [1, 1]} : vector<24x8xf32> to vector<24x1xf32>
    %290 = vector.broadcast %289 : vector<24x1xf32> to vector<24x32xf32>
    %291 = arith.addf %257, %290 : vector<24x32xf32>
    %cst_145 = arith.constant dense<0xFF800000> : vector<32xf32>
    %292 = vector.multi_reduction <maximumf>, %291, %cst_145 [0] : vector<24x32xf32> to vector<32xf32>
    %293 = vector.shape_cast %292 : vector<32xf32> to vector<1x32xf32>
    %294 = vector.extract_strided_slice %258 {offsets = [0, 7], sizes = [24, 1], strides = [1, 1]} : vector<24x8xf32> to vector<24x1xf32>
    %295 = vector.broadcast %294 : vector<24x1xf32> to vector<24x32xf32>
    %296 = arith.addf %257, %295 : vector<24x32xf32>
    %cst_146 = arith.constant dense<0xFF800000> : vector<32xf32>
    %297 = vector.multi_reduction <maximumf>, %296, %cst_146 [0] : vector<24x32xf32> to vector<32xf32>
    %298 = vector.shape_cast %297 : vector<32xf32> to vector<1x32xf32>
    %299 = tpu.concatenate %263, %268, %273, %278, %283, %288, %293, %298 in 0 : vector<1x32xf32>, vector<1x32xf32>, vector<1x32xf32>, vector<1x32xf32>, vector<1x32xf32>, vector<1x32xf32>, vector<1x32xf32>, vector<1x32xf32> -> vector<8x32xf32>
    %c0_147 = arith.constant 0 : index
    %c0_148 = arith.constant 0 : index
    %300 = vector.load %arg33[%c0_147, %c0_148] : memref<32x48xbf16, #tpu.memory_space<vmem>>, vector<32x48xbf16>
    %301 = arith.truncf %299 : vector<8x32xf32> to vector<8x32xbf16>
    %cst_149 = arith.constant dense<0.000000e+00> : vector<8x48xf32>
    %302 = tpu.matmul %301, %300, %cst_149 {dimension_numbers = #tpu.dot_dimension_numbers<[1], [0], [0], [1], [0, 0, 1, 1], [], []>} : vector<8x32xbf16>, vector<32x48xbf16>, vector<8x48xf32> -> vector<8x48xf32>
    %c0_150 = arith.constant 0 : index
    %c0_151 = arith.constant 0 : index
    %303 = vector.load %arg34[%c0_150, %c0_151] : memref<1x48xf32, #tpu.memory_space<vmem>>, vector<1x48xf32>
    %304 = vector.broadcast %303 : vector<1x48xf32> to vector<8x48xf32>
    %305 = arith.addf %302, %304 : vector<8x48xf32>
    %c0_152 = arith.constant 0 : index
    %c0_153 = arith.constant 0 : index
    %306 = vector.load %arg35[%c0_152, %c0_153] : memref<8x48xf32, #tpu.memory_space<vmem>>, vector<8x48xf32>
    tpu.vector_store %arg35[%c0_152, %c0_153], %305 {strides = array<i32>} : memref<8x48xf32, #tpu.memory_space<vmem>>, vector<8x48xf32>,
    return
  }
}

</mosaic_0001>

<llo_original>
// kernel: graph_transformer_forward.1
$region0: #{graph_transformer_forward.1}
  #allocation0 [shape = 'u32[]', space=smem, size = 0x4, offset = 0x4, fixed_abs, tag = 'smem constant byte address 0x4 - core index']
  #allocation1 [shape = 'u32[72,128]{1,0:T(1,128)}', space=vmem, size = 0x9000, scoped, tag = 'internal scratch']
  %s0 = inlined_call_operand.smem [shape: u32[36], index: -1, kind: input, shape index: {}]
  %s1 = sld [smem:[%s0]]
  %s2 = scalar_lea.smem %s0, 1
  %s3 = sld [smem:[%s2]]
  %s4 = scalar_lea.smem %s0, 2
  %s5 = sld [smem:[%s4]]
  %s6 = scalar_lea.smem %s0, 3
  %s7 = sld [smem:[%s6]]
  %s8 = scalar_lea.smem %s0, 4
  %s9 = sld [smem:[%s8]]
  %s10 = scalar_lea.smem %s0, 5
  %s11 = sld [smem:[%s10]]
  %s12 = scalar_lea.smem %s0, 6
  %s13 = sld [smem:[%s12]]
  %s14 = scalar_lea.smem %s0, 7
  %s15 = sld [smem:[%s14]]
  %s16 = scalar_lea.smem %s0, 8
  %s17 = sld [smem:[%s16]]
  %s18 = scalar_lea.smem %s0, 9
  %s19 = sld [smem:[%s18]]
  %s20 = scalar_lea.smem %s0, 10
  %s21 = sld [smem:[%s20]]
  %s22 = scalar_lea.smem %s0, 11
  %s23 = sld [smem:[%s22]]
  %s24 = scalar_lea.smem %s0, 12
  %s25 = sld [smem:[%s24]]
  %s26 = scalar_lea.smem %s0, 13
  %s27 = sld [smem:[%s26]]
  %s28 = scalar_lea.smem %s0, 14
  %s29 = sld [smem:[%s28]]
  %s30 = scalar_lea.smem %s0, 15
  %s31 = sld [smem:[%s30]]
  %s32 = scalar_lea.smem %s0, 16
  %s33 = sld [smem:[%s32]]
  %s34 = scalar_lea.smem %s0, 17
  %s35 = sld [smem:[%s34]]
  %s36 = scalar_lea.smem %s0, 18
  %s37 = sld [smem:[%s36]]
  %s38 = scalar_lea.smem %s0, 19
  %s39 = sld [smem:[%s38]]
  %s40 = scalar_lea.smem %s0, 20
  %s41 = sld [smem:[%s40]]
  %s42 = scalar_lea.smem %s0, 21
  %s43 = sld [smem:[%s42]]
  %s44 = scalar_lea.smem %s0, 22
  %s45 = sld [smem:[%s44]]
  %s46 = scalar_lea.smem %s0, 23
  %s47 = sld [smem:[%s46]]
  %s48 = scalar_lea.smem %s0, 24
  %s49 = sld [smem:[%s48]]
  %s50 = scalar_lea.smem %s0, 25
  %s51 = sld [smem:[%s50]]
  %s52 = scalar_lea.smem %s0, 26
  %s53 = sld [smem:[%s52]]
  %s54 = scalar_lea.smem %s0, 27
  %s55 = sld [smem:[%s54]]
  %s56 = scalar_lea.smem %s0, 28
  %s57 = sld [smem:[%s56]]
  %s58 = scalar_lea.smem %s0, 29
  %s59 = sld [smem:[%s58]]
  %s60 = scalar_lea.smem %s0, 30
  %s61 = sld [smem:[%s60]]
  %s62 = scalar_lea.smem %s0, 31
  %s63 = sld [smem:[%s62]]
  %s64 = scalar_lea.smem %s0, 32
  %s65 = sld [smem:[%s64]]
  %s66 = scalar_lea.smem %s0, 33
  %s67 = sld [smem:[%s66]]
  %s68 = scalar_lea.smem %s0, 34
  %s69 = sld [smem:[%s68]]
  %s70 = scalar_lea.smem %s0, 35
  %s71 = sld [smem:[%s70]]
  %s72 = sld [smem:[#allocation0]]
  $region150: #{graph_transformer_forward.1} parent=0
    _
  %s74 = ssub.s32 1, %s72
  %s75 = scalar_select 0, %s74, %s72
  $region1: #{graph_transformer_forward.1} parent=0
    #allocation2 [shape = 'u8[4096]{0}', space=vmem, size = 0x1000, scoped, tag = 'output window, operand 0, single buffered']
    #allocation3 [shape = 's32[1]{0}', space=sflag, size = 0x4, scoped, tag = 'scoped memory for graph_transformer_forward.1']
    %76 = vsyncpa [#allocation3], 0
    // Predicated region
    $region2: #{graph_transformer_forward.1} parent=1 // pred_check
      _
    $region3: #{graph_transformer_forward.1} parent=1 // pred_check_branch
      %78 = sbr.rel (0) target = $region5
    $region4: #{graph_transformer_forward.1} parent=1 // pred_region
      _
    $region5: #{graph_transformer_forward.1} parent=1 // pred_fallthru
      _
    // Predicated region
    $region6: #{graph_transformer_forward.1} parent=1 // pred_check
      _
    $region7: #{graph_transformer_forward.1} parent=1 // pred_check_branch
      %80 = sbr.rel (0) target = $region9
    $region8: #{graph_transformer_forward.1} parent=1 // pred_region
      _
    $region9: #{graph_transformer_forward.1} parent=1 // pred_fallthru
      _
    // Predicated region
    $region10: #{graph_transformer_forward.1} parent=1 // pred_check
      _
    $region11: #{graph_transformer_forward.1} parent=1 // pred_check_branch
      %82 = sbr.rel (0) target = $region13
    $region12: #{graph_transformer_forward.1} parent=1 // pred_region
      _
    $region13: #{graph_transformer_forward.1} parent=1 // pred_fallthru
      _
    // Predicated region
    $region14: #{graph_transformer_forward.1} parent=1 // pred_check
      _
    $region15: #{graph_transformer_forward.1} parent=1 // pred_check_branch
      %84 = sbr.rel (0) target = $region17
    $region16: #{graph_transformer_forward.1} parent=1 // pred_region
      _
    $region17: #{graph_transformer_forward.1} parent=1 // pred_fallthru
      _
    // Predicated region
    $region18: #{graph_transformer_forward.1} parent=1 // pred_check
      _
    $region19: #{graph_transformer_forward.1} parent=1 // pred_check_branch
      %86 = sbr.rel (0) target = $region21
    $region20: #{graph_transformer_forward.1} parent=1 // pred_region
      _
    $region21: #{graph_transformer_forward.1} parent=1 // pred_fallthru
      _
    // Predicated region
    $region22: #{graph_transformer_forward.1} parent=1 // pred_check
      _
    $region23: #{graph_transformer_forward.1} parent=1 // pred_check_branch
      %88 = sbr.rel (0) target = $region25
    $region24: #{graph_transformer_forward.1} parent=1 // pred_region
      _
    $region25: #{graph_transformer_forward.1} parent=1 // pred_fallthru
      _
    // Predicated region
    $region26: #{graph_transformer_forward.1} parent=1 // pred_check
      _
    $region27: #{graph_transformer_forward.1} parent=1 // pred_check_branch
      %90 = sbr.rel (0) target = $region29
    $region28: #{graph_transformer_forward.1} parent=1 // pred_region
      _
    $region29: #{graph_transformer_forward.1} parent=1 // pred_fallthru
      _
    // Predicated region
    $region30: #{graph_transformer_forward.1} parent=1 // pred_check
      _
    $region31: #{graph_transformer_forward.1} parent=1 // pred_check_branch
      %92 = sbr.rel (0) target = $region33
    $region32: #{graph_transformer_forward.1} parent=1 // pred_region
      _
    $region33: #{graph_transformer_forward.1} parent=1 // pred_fallthru
      _
    // Predicated region
    $region34: #{graph_transformer_forward.1} parent=1 // pred_check
      _
    $region35: #{graph_transformer_forward.1} parent=1 // pred_check_branch
      %94 = sbr.rel (0) target = $region37
    $region36: #{graph_transformer_forward.1} parent=1 // pred_region
      _
    $region37: #{graph_transformer_forward.1} parent=1 // pred_fallthru
      _
    // Predicated region
    $region38: #{graph_transformer_forward.1} parent=1 // pred_check
      _
    $region39: #{graph_transformer_forward.1} parent=1 // pred_check_branch
      %96 = sbr.rel (0) target = $region41
    $region40: #{graph_transformer_forward.1} parent=1 // pred_region
      _
    $region41: #{graph_transformer_forward.1} parent=1 // pred_fallthru
      _
    // Predicated region
    $region42: #{graph_transformer_forward.1} parent=1 // pred_check
      _
    $region43: #{graph_transformer_forward.1} parent=1 // pred_check_branch
      %98 = sbr.rel (0) target = $region45
    $region44: #{graph_transformer_forward.1} parent=1 // pred_region
      _
    $region45: #{graph_transformer_forward.1} parent=1 // pred_fallthru
      _
    // Predicated region
    $region46: #{graph_transformer_forward.1} parent=1 // pred_check
      _
    $region47: #{graph_transformer_forward.1} parent=1 // pred_check_branch
      %100 = sbr.rel (0) target = $region49
    $region48: #{graph_transformer_forward.1} parent=1 // pred_region
      _
    $region49: #{graph_transformer_forward.1} parent=1 // pred_fallthru
      _
    // Predicated region
    $region50: #{graph_transformer_forward.1} parent=1 // pred_check
      _
    $region51: #{graph_transformer_forward.1} parent=1 // pred_check_branch
      %102 = sbr.rel (0) target = $region53
    $region52: #{graph_transformer_forward.1} parent=1 // pred_region
      _
    $region53: #{graph_transformer_forward.1} parent=1 // pred_fallthru
      _
    // Predicated region
    $region54: #{graph_transformer_forward.1} parent=1 // pred_check
      _
    $region55: #{graph_transformer_forward.1} parent=1 // pred_check_branch
      %104 = sbr.rel (0) target = $region57
    $region56: #{graph_transformer_forward.1} parent=1 // pred_region
      _
    $region57: #{graph_transformer_forward.1} parent=1 // pred_fallthru
      _
    // Predicated region
    $region58: #{graph_transformer_forward.1} parent=1 // pred_check
      _
    $region59: #{graph_transformer_forward.1} parent=1 // pred_check_branch
      %106 = sbr.rel (0) target = $region61
    $region60: #{graph_transformer_forward.1} parent=1 // pred_region
      _
    $region61: #{graph_transformer_forward.1} parent=1 // pred_fallthru
      _
    // Predicated region
    $region62: #{graph_transformer_forward.1} parent=1 // pred_check
      _
    $region63: #{graph_transformer_forward.1} parent=1 // pred_check_branch
      %108 = sbr.rel (0) target = $region65
    $region64: #{graph_transformer_forward.1} parent=1 // pred_region
      _
    $region65: #{graph_transformer_forward.1} parent=1 // pred_fallthru
      _
    // Predicated region
    $region66: #{graph_transformer_forward.1} parent=1 // pred_check
      _
    $region67: #{graph_transformer_forward.1} parent=1 // pred_check_branch
      %110 = sbr.rel (0) target = $region69
    $region68: #{graph_transformer_forward.1} parent=1 // pred_region
      _
    $region69: #{graph_transformer_forward.1} parent=1 // pred_fallthru
      _
    // Predicated region
    $region70: #{graph_transformer_forward.1} parent=1 // pred_check
      _
    $region71: #{graph_transformer_forward.1} parent=1 // pred_check_branch
      %112 = sbr.rel (0) target = $region73
    $region72: #{graph_transformer_forward.1} parent=1 // pred_region
      _
    $region73: #{graph_transformer_forward.1} parent=1 // pred_fallthru
      _
    // Predicated region
    $region74: #{graph_transformer_forward.1} parent=1 // pred_check
      _
    $region75: #{graph_transformer_forward.1} parent=1 // pred_check_branch
      %114 = sbr.rel (0) target = $region77
    $region76: #{graph_transformer_forward.1} parent=1 // pred_region
      _
    $region77: #{graph_transformer_forward.1} parent=1 // pred_fallthru
      _
    // Predicated region
    $region78: #{graph_transformer_forward.1} parent=1 // pred_check
      _
    $region79: #{graph_transformer_forward.1} parent=1 // pred_check_branch
      %116 = sbr.rel (0) target = $region81
    $region80: #{graph_transformer_forward.1} parent=1 // pred_region
      _
    $region81: #{graph_transformer_forward.1} parent=1 // pred_fallthru
      _
    // Predicated region
    $region82: #{graph_transformer_forward.1} parent=1 // pred_check
      _
    $region83: #{graph_transformer_forward.1} parent=1 // pred_check_branch
      %118 = sbr.rel (0) target = $region85
    $region84: #{graph_transformer_forward.1} parent=1 // pred_region
      _
    $region85: #{graph_transformer_forward.1} parent=1 // pred_fallthru
      _
    // Predicated region
    $region86: #{graph_transformer_forward.1} parent=1 // pred_check
      _
    $region87: #{graph_transformer_forward.1} parent=1 // pred_check_branch
      %120 = sbr.rel (0) target = $region89
    $region88: #{graph_transformer_forward.1} parent=1 // pred_region
      _
    $region89: #{graph_transformer_forward.1} parent=1 // pred_fallthru
      _
    // Predicated region
    $region90: #{graph_transformer_forward.1} parent=1 // pred_check
      _
    $region91: #{graph_transformer_forward.1} parent=1 // pred_check_branch
      %122 = sbr.rel (0) target = $region93
    $region92: #{graph_transformer_forward.1} parent=1 // pred_region
      _
    $region93: #{graph_transformer_forward.1} parent=1 // pred_fallthru
      _
    // Predicated region
    $region94: #{graph_transformer_forward.1} parent=1 // pred_check
      _
    $region95: #{graph_transformer_forward.1} parent=1 // pred_check_branch
      %124 = sbr.rel (0) target = $region97
    $region96: #{graph_transformer_forward.1} parent=1 // pred_region
      _
    $region97: #{graph_transformer_forward.1} parent=1 // pred_fallthru
      _
    // Predicated region
    $region98: #{graph_transformer_forward.1} parent=1 // pred_check
      _
    $region99: #{graph_transformer_forward.1} parent=1 // pred_check_branch
      %126 = sbr.rel (0) target = $region101
    $region100: #{graph_transformer_forward.1} parent=1 // pred_region
      _
    $region101: #{graph_transformer_forward.1} parent=1 // pred_fallthru
      _
    // Predicated region
    $region102: #{graph_transformer_forward.1} parent=1 // pred_check
      _
    $region103: #{graph_transformer_forward.1} parent=1 // pred_check_branch
      %128 = sbr.rel (0) target = $region105
    $region104: #{graph_transformer_forward.1} parent=1 // pred_region
      _
    $region105: #{graph_transformer_forward.1} parent=1 // pred_fallthru
      _
    // Predicated region
    $region106: #{graph_transformer_forward.1} parent=1 // pred_check
      _
    $region107: #{graph_transformer_forward.1} parent=1 // pred_check_branch
      %130 = sbr.rel (0) target = $region109
    $region108: #{graph_transformer_forward.1} parent=1 // pred_region
      _
    $region109: #{graph_transformer_forward.1} parent=1 // pred_fallthru
      _
    // Predicated region
    $region110: #{graph_transformer_forward.1} parent=1 // pred_check
      _
    $region111: #{graph_transformer_forward.1} parent=1 // pred_check_branch
      %132 = sbr.rel (0) target = $region113
    $region112: #{graph_transformer_forward.1} parent=1 // pred_region
      _
    $region113: #{graph_transformer_forward.1} parent=1 // pred_fallthru
      _
    // Predicated region
    $region114: #{graph_transformer_forward.1} parent=1 // pred_check
      _
    $region115: #{graph_transformer_forward.1} parent=1 // pred_check_branch
      %134 = sbr.rel (0) target = $region117
    $region116: #{graph_transformer_forward.1} parent=1 // pred_region
      _
    $region117: #{graph_transformer_forward.1} parent=1 // pred_fallthru
      _
    // Predicated region
    $region118: #{graph_transformer_forward.1} parent=1 // pred_check
      _
    $region119: #{graph_transformer_forward.1} parent=1 // pred_check_branch
      %136 = sbr.rel (0) target = $region121
    $region120: #{graph_transformer_forward.1} parent=1 // pred_region
      _
    $region121: #{graph_transformer_forward.1} parent=1 // pred_fallthru
      _
    // Predicated region
    $region122: #{graph_transformer_forward.1} parent=1 // pred_check
      _
    $region123: #{graph_transformer_forward.1} parent=1 // pred_check_branch
      %138 = sbr.rel (0) target = $region125
    $region124: #{graph_transformer_forward.1} parent=1 // pred_region
      _
    $region125: #{graph_transformer_forward.1} parent=1 // pred_fallthru
      _
    // Predicated region
    $region126: #{graph_transformer_forward.1} parent=1 // pred_check
      _
    $region127: #{graph_transformer_forward.1} parent=1 // pred_check_branch
      %140 = sbr.rel (0) target = $region129
    $region128: #{graph_transformer_forward.1} parent=1 // pred_region
      _
    $region129: #{graph_transformer_forward.1} parent=1 // pred_fallthru
      _
    // Predicated region
    $region130: #{graph_transformer_forward.1} parent=1 // pred_check
      _
    $region131: #{graph_transformer_forward.1} parent=1 // pred_check_branch
      %142 = sbr.rel (0) target = $region133
    $region132: #{graph_transformer_forward.1} parent=1 // pred_region
      _
    $region133: #{graph_transformer_forward.1} parent=1 // pred_fallthru
      _
    // Predicated region
    $region134: #{graph_transformer_forward.1} parent=1 // pred_check
      _
    $region135: #{graph_transformer_forward.1} parent=1 // pred_check_branch
      %144 = sbr.rel (0) target = $region137
    $region136: #{graph_transformer_forward.1} parent=1 // pred_region
      _
    $region137: #{graph_transformer_forward.1} parent=1 // pred_fallthru
      _
    // Predicated region
    $region138: #{graph_transformer_forward.1} parent=1 // pred_check
      _
    $region139: #{graph_transformer_forward.1} parent=1 // pred_check_branch
      %146 = sbr.rel (0) target = $region141
    $region140: #{graph_transformer_forward.1} parent=1 // pred_region
      _
    $region141: #{graph_transformer_forward.1} parent=1 // pred_fallthru
      _
    %v148 = vld [vmem:[%s1] sm:$0xff]
    %v149 = vld [vmem:[%s1 + $0x8] sm:$0xff]
    %v150 = vld [vmem:[%s1 + $0x10] sm:$0xff]
    %v151 = vld [vmem:[%s3] sm:$0xff]
    %v152 = vld [vmem:[%s3 + $0x8] sm:$0xff]
    %v153 = vld [vmem:[%s3 + $0x10] sm:$0xff]
    %v154 = vld [vmem:[%s5] sm:$0xff]
    %v155 = vld [vmem:[%s5 + $0x8] sm:$0xff]
    %v156 = vld [vmem:[%s5 + $0x10] sm:$0xff]
    %v157 = vld [vmem:[%s5 + $0x18] sm:$0xff]
    %v158 = vld [vmem:[%s5 + $0x20] sm:$0xff]
    %v159 = vld [vmem:[%s7] sm:$0xff]
    %v160 = vld [vmem:[%s7 + $0x8] sm:$0xff]
    %v161 = vld [vmem:[%s7 + $0x10] sm:$0xff]
    %v162 = vld [vmem:[%s7 + $0x18] sm:$0xff]
    %v163 = vld [vmem:[%s7 + $0x20] sm:$0xff]
    %v164 = vld [vmem:[%s9] sm:$0xff]
    %v165 = vld [vmem:[%s9 + $0x8] sm:$0xff]
    %v166 = vld [vmem:[%s9 + $0x10] sm:$0xff]
    %v167 = vld [vmem:[%s11] sm:$0xff]
    %v168 = vld [vmem:[%s11 + $0x8] sm:$0xff]
    %v169 = vld [vmem:[%s11 + $0x10] sm:$0xff]
    %v170 = vld [vmem:[%s11 + $0x18] sm:$0xff]
    %v171 = vld [vmem:[%s13] sm:$0xf]
    %v172 = vld [vmem:[%s13 + $0x4] sm:$0xf]
    %v173 = vpack.c.bf16 %v149, %v148
    %v174 = vpack.c.bf16 %v150, %v150
    %v175 = vld [vmem:[%s15] sm:$0x1]
    %v177 = vperm.slane %v175, 0
    %v181 = vunpack.c.l.b16 %v171
    %v182 = vunpack.c.l.b16 %v172
    %v183 = vpack.c.b16 %v182, %v181
    %vm185 = vcmask 130048
    %v187 = vsel %vm185, %v173, 0
    %v190 = vsel %vm185, %v174, 0
    %192 = vmatpush.bf16.msra.mxu0 0
    %193 = vmatpush.bf16.msra.mxu0 0
    %194 = vmatpush.bf16.msra.mxu0 0
    %195 = vmatpush.bf16.msra.mxu0 0
    %196 = vmatpush.bf16.msra.mxu0 0
    %197 = vmatpush.bf16.msra.mxu0 0
    %198 = vmatpush.bf16.msra.mxu0 0
    %199 = vmatpush.bf16.msra.mxu0 %v183
    %200 = vmatmul.bf16.gmra.mxu0 %v187
    %v201 = vpop.f32.mrf.mxu0
    %v202 = vadd.f32 %v177, %v201
    %v203 = vpop.f32.mrf.mxu0
    %v204 = vadd.f32 %v177, %v203
    %205 = vmatmul.bf16.gmra.mxu0 %v190
    %v206 = vpop.f32.mrf.mxu0
    %v207 = vadd.f32 %v177, %v206
    %v208 = vpop.f32.mrf.mxu0
    %209 = vdwg.mxu0
    %v210 = vld [vmem:[%s17] sm:$0xf]
    %v211 = vld [vmem:[%s17 + $0x4] sm:$0xf]
    %v212 = vld [vmem:[%s17 + $0x8] sm:$0xf]
    %v213 = vld [vmem:[%s17 + $0xc] sm:$0xf]
    %v214 = vld [vmem:[%s17 + $0x10] sm:$0xf]
    %v215 = vld [vmem:[%s17 + $0x14] sm:$0xf]
    %v216 = vpack.c.bf16 %v152, %v151
    %v217 = vpack.c.bf16 %v153, %v153
    %v218 = vld [vmem:[%s19] sm:$0x1]
    %v220 = vperm.slane %v218, 0
    %v228 = vunpack.c.l.b16 %v210
    %v229 = vunpack.c.l.b16 %v211
    %v230 = vunpack.c.l.b16 %v212
    %v231 = vunpack.c.l.b16 %v213
    %v232 = vunpack.c.l.b16 %v214
    %v233 = vunpack.c.l.b16 %v215
    %v234 = vpack.c.b16 %v229, %v228
    %v235 = vpack.c.b16 %v231, %v230
    %v236 = vpack.c.b16 %v233, %v232
    %vm240 = vcmask 392192
    %v242 = vsel %vm240, %v216, 0
    %v245 = vsel %vm240, %v217, 0
    %247 = vmatpush.bf16.msra.mxu0 0
    %248 = vmatpush.bf16.msra.mxu0 0
    %249 = vmatpush.bf16.msra.mxu0 0
    %250 = vmatpush.bf16.msra.mxu0 0
    %251 = vmatpush.bf16.msra.mxu0 0
    %252 = vmatpush.bf16.msra.mxu0 %v236
    %253 = vmatpush.bf16.msra.mxu0 %v235
    %254 = vmatpush.bf16.msra.mxu0 %v234
    %255 = vmatmul.bf16.gmra.mxu0 %v242
    %v256 = vpop.f32.mrf.mxu0
    %v257 = vadd.f32 %v220, %v256
    %v258 = vpop.f32.mrf.mxu0
    %v259 = vadd.f32 %v220, %v258
    %260 = vmatmul.bf16.gmra.mxu0 %v245
    %v261 = vpop.f32.mrf.mxu0
    %v262 = vadd.f32 %v220, %v261
    %v263 = vpop.f32.mrf.mxu0
    %264 = vdwg.mxu0
    %vm265 = vcmask 195584
    %v267 = vsel %vm265, %v154, 0
    %v270 = vsel %vm265, %v155, 0
    %v273 = vsel %vm265, %v156, 0
    %v276 = vsel %vm265, %v157, 0
    %v279 = vsel %vm265, %v158, 0
    %281 = vmatpush.msra.mxu0 0.0
    %282 = vmatpush.msra.mxu0 0.0
    %283 = vmatpush.msra.mxu0 0.0
    %284 = vmatpush.msra.mxu0 0.0
    %285 = vmatpush.msra.mxu0 0.0
    %286 = vmatpush.msra.mxu0 0.0
    %287 = vmatpush.msra.mxu0 0.0
    %288 = vmatpush.msra.mxu0 0.0
    %289 = vmatpush.msra.mxu0 0.0
    %290 = vmatpush.msra.mxu0 0.0
    %291 = vmatpush.msra.mxu0 0.0
    %292 = vmatpush.msra.mxu0 0.0
    %293 = vmatpush.msra.mxu0 0.0
    %294 = vmatpush.msra.mxu0 %v207
    %295 = vmatpush.msra.mxu0 %v204
    %296 = vmatpush.msra.mxu0 %v202
    %297 = vmatmul.f32.gmra.mxu0 %v267
    %v298 = vpop.f32.mrf.mxu0
    %v299 = vadd.f32 0.0, %v298
    %300 = vmatmul.f32.gmra.mxu0 %v270
    %v301 = vpop.f32.mrf.mxu0
    %v302 = vadd.f32 0.0, %v301
    %303 = vmatmul.f32.gmra.mxu0 %v273
    %v304 = vpop.f32.mrf.mxu0
    %v305 = vadd.f32 0.0, %v304
    %306 = vmatmul.f32.gmra.mxu0 %v276
    %v307 = vpop.f32.mrf.mxu0
    %v308 = vadd.f32 0.0, %v307
    %309 = vmatmul.f32.gmra.mxu0 %v279
    %v310 = vpop.f32.mrf.mxu0
    %v311 = vadd.f32 0.0, %v310
    %312 = vdwg.mxu0
    %316 = vrot.lane.b32.xlu0 %v202, 96
    %v317 = vpop.permute.xlu0 %316
    %318 = vrot.lane.b32.xlu0 %v204, 96
    %v319 = vpop.permute.xlu0 %318
    %320 = vrot.lane.b32.xlu0 %v207, 96
    %v321 = vpop.permute.xlu0 %320
    %v326 = vsel %vm265, %v159, 0
    %v329 = vsel %vm265, %v160, 0
    %v332 = vsel %vm265, %v161, 0
    %v335 = vsel %vm265, %v162, 0
    %v338 = vsel %vm265, %v163, 0
    %340 = vmatpush.msra.mxu0 0.0
    %341 = vmatpush.msra.mxu0 0.0
    %342 = vmatpush.msra.mxu0 0.0
    %343 = vmatpush.msra.mxu0 0.0
    %344 = vmatpush.msra.mxu0 0.0
    %345 = vmatpush.msra.mxu0 0.0
    %346 = vmatpush.msra.mxu0 0.0
    %347 = vmatpush.msra.mxu0 0.0
    %348 = vmatpush.msra.mxu0 0.0
    %349 = vmatpush.msra.mxu0 0.0
    %350 = vmatpush.msra.mxu0 0.0
    %351 = vmatpush.msra.mxu0 0.0
    %352 = vmatpush.msra.mxu0 0.0
    %353 = vmatpush.msra.mxu0 %v321
    %354 = vmatpush.msra.mxu0 %v319
    %355 = vmatpush.msra.mxu0 %v317
    %356 = vmatmul.f32.gmra.mxu0 %v326
    %v357 = vpop.f32.mrf.mxu0
    %v358 = vadd.f32 0.0, %v357
    %359 = vmatmul.f32.gmra.mxu0 %v329
    %v360 = vpop.f32.mrf.mxu0
    %v361 = vadd.f32 0.0, %v360
    %362 = vmatmul.f32.gmra.mxu0 %v332
    %v363 = vpop.f32.mrf.mxu0
    %v364 = vadd.f32 0.0, %v363
    %365 = vmatmul.f32.gmra.mxu0 %v335
    %v366 = vpop.f32.mrf.mxu0
    %v367 = vadd.f32 0.0, %v366
    %368 = vmatmul.f32.gmra.mxu0 %v338
    %v369 = vpop.f32.mrf.mxu0
    %v370 = vadd.f32 0.0, %v369
    %371 = vdwg.mxu0
    %372 = vrot.lane.b32.xlu0 %v202, 64
    %v373 = vpop.permute.xlu0 %372
    %374 = vrot.lane.b32.xlu0 %v204, 64
    %v375 = vpop.permute.xlu0 %374
    %376 = vrot.lane.b32.xlu0 %v207, 64
    %v377 = vpop.permute.xlu0 %376
    %381 = vmatpush.msra.mxu0 0.0
    %382 = vmatpush.msra.mxu0 0.0
    %383 = vmatpush.msra.mxu0 0.0
    %384 = vmatpush.msra.mxu0 0.0
    %385 = vmatpush.msra.mxu0 0.0
    %386 = vmatpush.msra.mxu0 0.0
    %387 = vmatpush.msra.mxu0 0.0
    %388 = vmatpush.msra.mxu0 0.0
    %389 = vmatpush.msra.mxu0 0.0
    %390 = vmatpush.msra.mxu0 0.0
    %391 = vmatpush.msra.mxu0 0.0
    %392 = vmatpush.msra.mxu0 0.0
    %393 = vmatpush.msra.mxu0 0.0
    %394 = vmatpush.msra.mxu0 %v377
    %395 = vmatpush.msra.mxu0 %v375
    %396 = vmatpush.msra.mxu0 %v373
    %397 = vmatmul.f32.gmra.mxu0 %v326
    %v398 = vpop.f32.mrf.mxu0
    %v399 = vadd.f32 0.0, %v398
    %400 = vmatmul.f32.gmra.mxu0 %v329
    %v401 = vpop.f32.mrf.mxu0
    %v402 = vadd.f32 0.0, %v401
    %403 = vmatmul.f32.gmra.mxu0 %v332
    %v404 = vpop.f32.mrf.mxu0
    %v405 = vadd.f32 0.0, %v404
    %406 = vmatmul.f32.gmra.mxu0 %v335
    %v407 = vpop.f32.mrf.mxu0
    %v408 = vadd.f32 0.0, %v407
    %409 = vmatmul.f32.gmra.mxu0 %v338
    %v410 = vpop.f32.mrf.mxu0
    %v411 = vadd.f32 0.0, %v410
    %412 = vdwg.mxu0
    %413 = vmatpush.msra.mxu0 0.0
    %414 = vmatpush.msra.mxu0 0.0
    %415 = vmatpush.msra.mxu0 0.0
    %416 = vmatpush.msra.mxu0 0.0
    %417 = vmatpush.msra.mxu0 0.0
    %418 = vmatpush.msra.mxu0 0.0
    %419 = vmatpush.msra.mxu0 0.0
    %420 = vmatpush.msra.mxu0 0.0
    %421 = vmatpush.msra.mxu0 0.0
    %422 = vmatpush.msra.mxu0 0.0
    %423 = vmatpush.msra.mxu0 0.0
    %424 = vmatpush.msra.mxu0 0.0
    %425 = vmatpush.msra.mxu0 0.0
    %426 = vmatpush.msra.mxu0 %v262
    %427 = vmatpush.msra.mxu0 %v259
    %428 = vmatpush.msra.mxu0 %v257
    %429 = vmatmul.f32.gmra.mxu0 %v267
    %v430 = vpop.f32.mrf.mxu0
    %v431 = vadd.f32 0.0, %v430
    %432 = vmatmul.f32.gmra.mxu0 %v270
    %v433 = vpop.f32.mrf.mxu0
    %v434 = vadd.f32 0.0, %v433
    %435 = vmatmul.f32.gmra.mxu0 %v273
    %v436 = vpop.f32.mrf.mxu0
    %v437 = vadd.f32 0.0, %v436
    %438 = vmatmul.f32.gmra.mxu0 %v276
    %v439 = vpop.f32.mrf.mxu0
    %v440 = vadd.f32 0.0, %v439
    %441 = vmatmul.f32.gmra.mxu0 %v279
    %v442 = vpop.f32.mrf.mxu0
    %v443 = vadd.f32 0.0, %v442
    %444 = vdwg.mxu0
    %445 = vmatpush.msra.mxu0 0.0
    %446 = vmatpush.msra.mxu0 0.0
    %447 = vmatpush.msra.mxu0 0.0
    %448 = vmatpush.msra.mxu0 0.0
    %449 = vmatpush.msra.mxu0 0.0
    %450 = vmatpush.msra.mxu0 0.0
    %451 = vmatpush.msra.mxu0 0.0
    %452 = vmatpush.msra.mxu0 0.0
    %453 = vmatpush.msra.mxu0 0.0
    %454 = vmatpush.msra.mxu0 0.0
    %455 = vmatpush.msra.mxu0 0.0
    %456 = vmatpush.msra.mxu0 0.0
    %457 = vmatpush.msra.mxu0 0.0
    %458 = vmatpush.msra.mxu0 %v262
    %459 = vmatpush.msra.mxu0 %v259
    %460 = vmatpush.msra.mxu0 %v257
    %461 = vmatmul.f32.gmra.mxu0 %v326
    %v462 = vpop.f32.mrf.mxu0
    %v463 = vadd.f32 0.0, %v462
    %464 = vmatmul.f32.gmra.mxu0 %v329
    %v465 = vpop.f32.mrf.mxu0
    %v466 = vadd.f32 0.0, %v465
    %467 = vmatmul.f32.gmra.mxu0 %v332
    %v468 = vpop.f32.mrf.mxu0
    %v469 = vadd.f32 0.0, %v468
    %470 = vmatmul.f32.gmra.mxu0 %v335
    %v471 = vpop.f32.mrf.mxu0
    %v472 = vadd.f32 0.0, %v471
    %473 = vmatmul.f32.gmra.mxu0 %v338
    %v474 = vpop.f32.mrf.mxu0
    %v475 = vadd.f32 0.0, %v474
    %476 = vdwg.mxu0
    %v477 = vadd.f32 %v299, %v431
    %v478 = vadd.f32 %v302, %v434
    %v479 = vadd.f32 %v305, %v437
    %v480 = vadd.f32 %v308, %v440
    %v481 = vadd.f32 %v311, %v443
    %v482 = vmul.f32 %v477, %v358
    %v483 = vmul.f32 %v478, %v361
    %v484 = vmul.f32 %v479, %v364
    %v485 = vmul.f32 %v480, %v367
    %v486 = vmul.f32 %v481, %v370
    %v487 = vmul.f32 %v299, %v463
    %v488 = vmul.f32 %v302, %v466
    %v489 = vmul.f32 %v305, %v469
    %v490 = vmul.f32 %v308, %v472
    %v491 = vmul.f32 %v311, %v475
    %v492 = vadd.f32 %v482, %v487
    %v493 = vadd.f32 %v483, %v488
    %v494 = vadd.f32 %v484, %v489
    %v495 = vadd.f32 %v485, %v490
    %v496 = vadd.f32 %v486, %v491
    %vm497 = vcmask 261120
    %v499 = vsel %vm497, %v492, 0
    %v502 = vsel %vm497, %v493, 0
    %v505 = vsel %vm497, %v494, 0
    %v508 = vsel %vm497, %v495, 0
    %v511 = vsel %vm497, %v496, 0
    %513 = vmatpush.msra.mxu0 0.0
    %514 = vmatpush.msra.mxu0 0.0
    %515 = vmatpush.msra.mxu0 0.0
    %516 = vmatpush.msra.mxu0 0.0
    %517 = vmatpush.msra.mxu0 0.0
    %518 = vmatpush.msra.mxu0 0.0
    %519 = vmatpush.msra.mxu0 0.0
    %520 = vmatpush.msra.mxu0 0.0
    %521 = vmatpush.msra.mxu0 0.0
    %522 = vmatpush.msra.mxu0 0.0
    %523 = vmatpush.msra.mxu0 0.0
    %524 = vmatpush.msra.mxu0 0.0
    %525 = vmatpush.msra.mxu0 %v170
    %526 = vmatpush.msra.mxu0 %v169
    %527 = vmatpush.msra.mxu0 %v168
    %528 = vmatpush.msra.mxu0 %v167
    %529 = vmatmul.f32.gmra.mxu0 %v499
    %v530 = vpop.f32.mrf.mxu0
    %v531 = vadd.f32 0.0, %v530
    %532 = vmatmul.f32.gmra.mxu0 %v502
    %v533 = vpop.f32.mrf.mxu0
    %v534 = vadd.f32 0.0, %v533
    %535 = vmatmul.f32.gmra.mxu0 %v505
    %v536 = vpop.f32.mrf.mxu0
    %v537 = vadd.f32 0.0, %v536
    %538 = vmatmul.f32.gmra.mxu0 %v508
    %v539 = vpop.f32.mrf.mxu0
    %v540 = vadd.f32 0.0, %v539
    %541 = vmatmul.f32.gmra.mxu0 %v511
    %v542 = vpop.f32.mrf.mxu0
    %v543 = vadd.f32 0.0, %v542
    %544 = vdwg.mxu0
    %v545 = vmul.f32 %v531, 0.11785113
    %v546 = vmul.f32 %v534, 0.11785113
    %v547 = vmul.f32 %v537, 0.11785113
    %v548 = vmul.f32 %v540, 0.11785113
    %v549 = vmul.f32 %v543, 0.11785113
    %vm550 = vcmp.ge.f32.partialorder %v545, 0.0
    %vm551 = vcmp.ge.f32.partialorder %v546, 0.0
    %vm552 = vcmp.ge.f32.partialorder %v547, 0.0
    %vm553 = vcmp.ge.f32.partialorder %v548, 0.0
    %vm554 = vcmp.ge.f32.partialorder %v549, 0.0
    %v555 = vmul.f32 %v545, 0.2
    %v556 = vmul.f32 %v546, 0.2
    %v557 = vmul.f32 %v547, 0.2
    %v558 = vmul.f32 %v548, 0.2
    %v559 = vmul.f32 %v549, 0.2
    %v560 = vsel %vm550, %v545, %v555
    %v561 = vsel %vm551, %v546, %v556
    %v562 = vsel %vm552, %v547, %v557
    %v563 = vsel %vm553, %v548, %v558
    %v564 = vsel %vm554, %v549, %v559
    %vm565 = vcmask 31744
    %v566 = vsel %vm565, %v560, -inf
    %v567 = vsel %vm565, %v561, -inf
    %v568 = vsel %vm565, %v562, -inf
    %v569 = vsel %vm565, %v563, -inf
    %v570 = vsel %vm565, %v564, -inf
    %v571 = vmax.f32 %v566, %v570
    %v572 = vmax.f32 %v571, %v567
    %v573 = vmax.f32 %v568, %v569
    %v574 = vmax.f32 %v572, %v573
    %v575 = vrot.slane %v574, 4
    %v576 = vmax.f32 %v574, %v575
    %v577 = vrot.slane %v576, 2
    %v578 = vmax.f32 %v576, %v577
    %v579 = vrot.slane %v578, 1
    %v580 = vmax.f32 %v578, %v579
    %v581 = vsub.f32 %v560, %v580
    %v582 = vsub.f32 %v561, %v580
    %v583 = vsub.f32 %v562, %v580
    %v584 = vsub.f32 %v563, %v580
    %v585 = vsub.f32 %v564, %v580
    %v586 = vmul.f32 %v581, 1.442695
    %v587 = vpow.pop %v586
    %v588 = vmul.f32 %v582, 1.442695
    %v589 = vpow.pop %v588
    %v590 = vmul.f32 %v583, 1.442695
    %v591 = vpow.pop %v590
    %v592 = vmul.f32 %v584, 1.442695
    %v593 = vpow.pop %v592
    %v594 = vmul.f32 %v585, 1.442695
    %v595 = vpow.pop %v594
    %v596 = vsel %vm565, %v587, 0.0
    %v597 = vsel %vm565, %v589, 0.0
    %v598 = vadd.f32 %v596, %v597
    %v599 = vsel %vm565, %v591, 0.0
    %v600 = vadd.f32 %v598, %v599
    %v601 = vsel %vm565, %v593, 0.0
    %v602 = vadd.f32 %v600, %v601
    %v603 = vsel %vm565, %v595, 0.0
    %v604 = vadd.f32 %v602, %v603
    %v605 = vrot.slane %v604, 4
    %v606 = vadd.f32 %v604, %v605
    %v607 = vrot.slane %v606, 2
    %v608 = vadd.f32 %v606, %v607
    %v609 = vrot.slane %v608, 1
    %v610 = vadd.f32 %v608, %v609
    %v611 = vrcp.pop %v610
    %v612 = vmul.f32 %v587, %v611
    %v613 = vmul.f32 %v589, %v611
    %v614 = vmul.f32 %v591, %v611
    %v615 = vmul.f32 %v593, %v611
    %v616 = vmul.f32 %v595, %v611
    %v618 = vsel %vm565, %v612, 0
    %v621 = vsel %vm565, %v613, 0
    %v624 = vsel %vm565, %v614, 0
    %v627 = vsel %vm565, %v615, 0
    %v630 = vsel %vm565, %v616, 0
    %v633 = vsel %vm565, %v167, 0
    %v636 = vsel %vm565, %v168, 0
    %v639 = vsel %vm565, %v169, 0
    %v642 = vsel %vm565, %v170, 0
    %644 = vmatpush.xpose.msra.mxu0 0.0
    %645 = vmatpush.xpose.msra.mxu0 0.0
    %646 = vmatpush.xpose.msra.mxu0 0.0
    %647 = vmatpush.xpose.msra.mxu0 0.0
    %648 = vmatpush.xpose.msra.mxu0 0.0
    %649 = vmatpush.xpose.msra.mxu0 0.0
    %650 = vmatpush.xpose.msra.mxu0 0.0
    %651 = vmatpush.xpose.msra.mxu0 0.0
    %652 = vmatpush.xpose.msra.mxu0 0.0
    %653 = vmatpush.xpose.msra.mxu0 0.0
    %654 = vmatpush.xpose.msra.mxu0 0.0
    %655 = vmatpush.xpose.msra.mxu0 0.0
    %656 = vmatpush.xpose.msra.mxu0 %v642
    %657 = vmatpush.xpose.msra.mxu0 %v639
    %658 = vmatpush.xpose.msra.mxu0 %v636
    %659 = vmatpush.xpose.msra.mxu0 %v633
    %660 = vmatmul.f32.gmra.mxu0 %v618
    %v661 = vpop.f32.mrf.mxu0
    %v662 = vadd.f32 0.0, %v661
    %663 = vmatmul.f32.gmra.mxu0 %v621
    %v664 = vpop.f32.mrf.mxu0
    %v665 = vadd.f32 0.0, %v664
    %666 = vmatmul.f32.gmra.mxu0 %v624
    %v667 = vpop.f32.mrf.mxu0
    %v668 = vadd.f32 0.0, %v667
    %669 = vmatmul.f32.gmra.mxu0 %v627
    %v670 = vpop.f32.mrf.mxu0
    %v671 = vadd.f32 0.0, %v670
    %672 = vmatmul.f32.gmra.mxu0 %v630
    %v673 = vpop.f32.mrf.mxu0
    %v674 = vadd.f32 0.0, %v673
    %675 = vdwg.mxu0
    %v676 = vmul.f32 %v399, %v662
    %v677 = vmul.f32 %v402, %v665
    %v678 = vmul.f32 %v405, %v668
    %v679 = vmul.f32 %v408, %v671
    %v680 = vmul.f32 %v411, %v674
    %vm681 = vcmask 326656
    %v683 = vsel %vm681, %v164, 0
    %v686 = vsel %vm681, %v165, 0
    %v689 = vsel %vm681, %v166, 0
    %691 = vmatpush.msra.mxu0 0.0
    %692 = vmatpush.msra.mxu0 0.0
    %693 = vmatpush.msra.mxu0 0.0
    %694 = vmatpush.msra.mxu0 0.0
    %695 = vmatpush.msra.mxu0 0.0
    %696 = vmatpush.msra.mxu0 0.0
    %697 = vmatpush.msra.mxu0 0.0
    %698 = vmatpush.msra.mxu0 0.0
    %699 = vmatpush.msra.mxu0 0.0
    %700 = vmatpush.msra.mxu0 0.0
    %701 = vmatpush.msra.mxu0 0.0
    %702 = vmatpush.msra.mxu0 %v680
    %703 = vmatpush.msra.mxu0 %v679
    %704 = vmatpush.msra.mxu0 %v678
    %705 = vmatpush.msra.mxu0 %v677
    %706 = vmatpush.msra.mxu0 %v676
    %707 = vmatmul.f32.gmra.mxu0 %v683
    %v708 = vpop.f32.mrf.mxu0
    %v709 = vadd.f32 0.0, %v708
    %710 = vmatmul.f32.gmra.mxu0 %v686
    %v711 = vpop.f32.mrf.mxu0
    %v712 = vadd.f32 0.0, %v711
    %713 = vmatmul.f32.gmra.mxu0 %v689
    %v714 = vpop.f32.mrf.mxu0
    %v715 = vadd.f32 0.0, %v714
    %716 = vdwg.mxu0
    %v717 = vld [vmem:[%s21] sm:$0xf]
    %v718 = vld [vmem:[%s21 + $0x4] sm:$0xf]
    %v719 = vld [vmem:[%s21 + $0x8] sm:$0xf]
    %v720 = vld [vmem:[%s21 + $0xc] sm:$0xf]
    %v721 = vpack.c.bf16 %v712, %v709
    %v722 = vpack.c.bf16 %v715, %v715
    %v723 = vld [vmem:[%s23] sm:$0x1]
    %v725 = vperm.slane %v723, 0
    %v731 = vunpack.c.l.b16 %v717
    %v732 = vunpack.c.l.b16 %v718
    %v733 = vunpack.c.l.b16 %v719
    %v734 = vunpack.c.l.b16 %v720
    %v735 = vpack.c.b16 %v732, %v731
    %v736 = vpack.c.b16 %v734, %v733
    %v740 = vsel %vm497, %v721, 0
    %v743 = vsel %vm497, %v722, 0
    %745 = vmatpush.bf16.msra.mxu0 0
    %746 = vmatpush.bf16.msra.mxu0 0
    %747 = vmatpush.bf16.msra.mxu0 0
    %748 = vmatpush.bf16.msra.mxu0 0
    %749 = vmatpush.bf16.msra.mxu0 0
    %750 = vmatpush.bf16.msra.mxu0 0
    %751 = vmatpush.bf16.msra.mxu0 %v736
    %752 = vmatpush.bf16.msra.mxu0 %v735
    %753 = vmatmul.bf16.gmra.mxu0 %v740
    %v754 = vpop.f32.mrf.mxu0
    %v755 = vadd.f32 %v725, %v754
    %v756 = vpop.f32.mrf.mxu0
    %v757 = vadd.f32 %v725, %v756
    %758 = vmatmul.bf16.gmra.mxu0 %v743
    %v759 = vpop.f32.mrf.mxu0
    %v760 = vadd.f32 %v725, %v759
    %v761 = vpop.f32.mrf.mxu0
    %762 = vdwg.mxu0
    %763 = vrot.lane.b32.xlu0 %v202, 32
    %v764 = vpop.permute.xlu0 %763
    %765 = vrot.lane.b32.xlu0 %v204, 32
    %v766 = vpop.permute.xlu0 %765
    %767 = vrot.lane.b32.xlu0 %v207, 32
    %v768 = vpop.permute.xlu0 %767
    %v772 = vadd.f32 %v755, %v764
    %v773 = vadd.f32 %v757, %v766
    %v774 = vadd.f32 %v760, %v768
    %v775 = vld [vmem:[%s25] sm:$0xf]
    %v776 = vld [vmem:[%s25 + $0x4] sm:$0xf]
    %v777 = vld [vmem:[%s25 + $0x8] sm:$0xf]
    %v778 = vld [vmem:[%s25 + $0xc] sm:$0xf]
    %v779 = vpack.c.bf16 %v773, %v772
    %v780 = vpack.c.bf16 %v774, %v774
    %v781 = vld [vmem:[%s27] sm:$0x1]
    %v783 = vperm.slane %v781, 0
    %v789 = vunpack.c.l.b16 %v775
    %v790 = vunpack.c.l.b16 %v776
    %v791 = vunpack.c.l.b16 %v777
    %v792 = vunpack.c.l.b16 %v778
    %v793 = vpack.c.b16 %v790, %v789
    %v794 = vpack.c.b16 %v792, %v791
    %v798 = vsel %vm497, %v779, 0
    %v801 = vsel %vm497, %v780, 0
    %803 = vmatpush.bf16.msra.mxu0 0
    %804 = vmatpush.bf16.msra.mxu0 0
    %805 = vmatpush.bf16.msra.mxu0 0
    %806 = vmatpush.bf16.msra.mxu0 0
    %807 = vmatpush.bf16.msra.mxu0 0
    %808 = vmatpush.bf16.msra.mxu0 0
    %809 = vmatpush.bf16.msra.mxu0 %v794
    %810 = vmatpush.bf16.msra.mxu0 %v793
    %811 = vmatmul.bf16.gmra.mxu0 %v798
    %v812 = vpop.f32.mrf.mxu0
    %v813 = vadd.f32 %v783, %v812
    %v814 = vpop.f32.mrf.mxu0
    %v815 = vadd.f32 %v783, %v814
    %816 = vmatmul.bf16.gmra.mxu0 %v801
    %v817 = vpop.f32.mrf.mxu0
    %v818 = vadd.f32 %v783, %v817
    %v819 = vpop.f32.mrf.mxu0
    %820 = vdwg.mxu0
    %v821 = vld [vmem:[%s29] sm:$0xf]
    %v822 = vld [vmem:[%s29 + $0x4] sm:$0xf]
    %v823 = vld [vmem:[%s29 + $0x8] sm:$0xf]
    %v824 = vld [vmem:[%s29 + $0xc] sm:$0xf]
    %v825 = vld [vmem:[%s29 + $0x10] sm:$0xf]
    %v826 = vld [vmem:[%s29 + $0x14] sm:$0xf]
    %v827 = vld [vmem:[%s31] sm:$0x1]
    %v829 = vperm.slane %v827, 0
    %v837 = vunpack.c.l.b16 %v821
    %v838 = vunpack.c.l.b16 %v822
    %v839 = vunpack.c.l.b16 %v823
    %v840 = vunpack.c.l.b16 %v824
    %v841 = vunpack.c.l.b16 %v825
    %v842 = vunpack.c.l.b16 %v826
    %v843 = vpack.c.b16 %v838, %v837
    %v844 = vpack.c.b16 %v840, %v839
    %v845 = vpack.c.b16 %v842, %v841
    %849 = vmatpush.bf16.msra.mxu0 0
    %850 = vmatpush.bf16.msra.mxu0 0
    %851 = vmatpush.bf16.msra.mxu0 0
    %852 = vmatpush.bf16.msra.mxu0 0
    %853 = vmatpush.bf16.msra.mxu0 0
    %854 = vmatpush.bf16.msra.mxu0 %v845
    %855 = vmatpush.bf16.msra.mxu0 %v844
    %856 = vmatpush.bf16.msra.mxu0 %v843
    %857 = vmatmul.bf16.gmra.mxu0 %v242
    %v858 = vpop.f32.mrf.mxu0
    %v859 = vadd.f32 %v829, %v858
    %v860 = vpop.f32.mrf.mxu0
    %v861 = vadd.f32 %v829, %v860
    %862 = vmatmul.bf16.gmra.mxu0 %v245
    %v863 = vpop.f32.mrf.mxu0
    %v864 = vadd.f32 %v829, %v863
    %v865 = vpop.f32.mrf.mxu0
    %866 = vdwg.mxu0
    %867 = vmatpush.msra.mxu0 0.0
    %868 = vmatpush.msra.mxu0 0.0
    %869 = vmatpush.msra.mxu0 0.0
    %870 = vmatpush.msra.mxu0 0.0
    %871 = vmatpush.msra.mxu0 0.0
    %872 = vmatpush.msra.mxu0 0.0
    %873 = vmatpush.msra.mxu0 0.0
    %874 = vmatpush.msra.mxu0 0.0
    %875 = vmatpush.msra.mxu0 0.0
    %876 = vmatpush.msra.mxu0 0.0
    %877 = vmatpush.msra.mxu0 0.0
    %878 = vmatpush.msra.mxu0 0.0
    %879 = vmatpush.msra.mxu0 0.0
    %880 = vmatpush.msra.mxu0 %v818
    %881 = vmatpush.msra.mxu0 %v815
    %882 = vmatpush.msra.mxu0 %v813
    %883 = vmatmul.f32.gmra.mxu0 %v267
    %v884 = vpop.f32.mrf.mxu0
    %v885 = vadd.f32 0.0, %v884
    %886 = vmatmul.f32.gmra.mxu0 %v270
    %v887 = vpop.f32.mrf.mxu0
    %v888 = vadd.f32 0.0, %v887
    %889 = vmatmul.f32.gmra.mxu0 %v273
    %v890 = vpop.f32.mrf.mxu0
    %v891 = vadd.f32 0.0, %v890
    %892 = vmatmul.f32.gmra.mxu0 %v276
    %v893 = vpop.f32.mrf.mxu0
    %v894 = vadd.f32 0.0, %v893
    %895 = vmatmul.f32.gmra.mxu0 %v279
    %v896 = vpop.f32.mrf.mxu0
    %v897 = vadd.f32 0.0, %v896
    %898 = vdwg.mxu0
    %902 = vrot.lane.b32.xlu0 %v813, 96
    %v903 = vpop.permute.xlu0 %902
    %904 = vrot.lane.b32.xlu0 %v815, 96
    %v905 = vpop.permute.xlu0 %904
    %906 = vrot.lane.b32.xlu0 %v818, 96
    %v907 = vpop.permute.xlu0 %906
    %911 = vmatpush.msra.mxu0 0.0
    %912 = vmatpush.msra.mxu0 0.0
    %913 = vmatpush.msra.mxu0 0.0
    %914 = vmatpush.msra.mxu0 0.0
    %915 = vmatpush.msra.mxu0 0.0
    %916 = vmatpush.msra.mxu0 0.0
    %917 = vmatpush.msra.mxu0 0.0
    %918 = vmatpush.msra.mxu0 0.0
    %919 = vmatpush.msra.mxu0 0.0
    %920 = vmatpush.msra.mxu0 0.0
    %921 = vmatpush.msra.mxu0 0.0
    %922 = vmatpush.msra.mxu0 0.0
    %923 = vmatpush.msra.mxu0 0.0
    %924 = vmatpush.msra.mxu0 %v907
    %925 = vmatpush.msra.mxu0 %v905
    %926 = vmatpush.msra.mxu0 %v903
    %927 = vmatmul.f32.gmra.mxu0 %v326
    %v928 = vpop.f32.mrf.mxu0
    %v929 = vadd.f32 0.0, %v928
    %930 = vmatmul.f32.gmra.mxu0 %v329
    %v931 = vpop.f32.mrf.mxu0
    %v932 = vadd.f32 0.0, %v931
    %933 = vmatmul.f32.gmra.mxu0 %v332
    %v934 = vpop.f32.mrf.mxu0
    %v935 = vadd.f32 0.0, %v934
    %936 = vmatmul.f32.gmra.mxu0 %v335
    %v937 = vpop.f32.mrf.mxu0
    %v938 = vadd.f32 0.0, %v937
    %939 = vmatmul.f32.gmra.mxu0 %v338
    %v940 = vpop.f32.mrf.mxu0
    %v941 = vadd.f32 0.0, %v940
    %942 = vdwg.mxu0
    %943 = vrot.lane.b32.xlu0 %v813, 64
    %v944 = vpop.permute.xlu0 %943
    %945 = vrot.lane.b32.xlu0 %v815, 64
    %v946 = vpop.permute.xlu0 %945
    %947 = vrot.lane.b32.xlu0 %v818, 64
    %v948 = vpop.permute.xlu0 %947
    %952 = vmatpush.msra.mxu0 0.0
    %953 = vmatpush.msra.mxu0 0.0
    %954 = vmatpush.msra.mxu0 0.0
    %955 = vmatpush.msra.mxu0 0.0
    %956 = vmatpush.msra.mxu0 0.0
    %957 = vmatpush.msra.mxu0 0.0
    %958 = vmatpush.msra.mxu0 0.0
    %959 = vmatpush.msra.mxu0 0.0
    %960 = vmatpush.msra.mxu0 0.0
    %961 = vmatpush.msra.mxu0 0.0
    %962 = vmatpush.msra.mxu0 0.0
    %963 = vmatpush.msra.mxu0 0.0
    %964 = vmatpush.msra.mxu0 0.0
    %965 = vmatpush.msra.mxu0 %v948
    %966 = vmatpush.msra.mxu0 %v946
    %967 = vmatpush.msra.mxu0 %v944
    %968 = vmatmul.f32.gmra.mxu0 %v326
    %v969 = vpop.f32.mrf.mxu0
    %v970 = vadd.f32 0.0, %v969
    %971 = vmatmul.f32.gmra.mxu0 %v329
    %v972 = vpop.f32.mrf.mxu0
    %v973 = vadd.f32 0.0, %v972
    %974 = vmatmul.f32.gmra.mxu0 %v332
    %v975 = vpop.f32.mrf.mxu0
    %v976 = vadd.f32 0.0, %v975
    %977 = vmatmul.f32.gmra.mxu0 %v335
    %v978 = vpop.f32.mrf.mxu0
    %v979 = vadd.f32 0.0, %v978
    %980 = vmatmul.f32.gmra.mxu0 %v338
    %v981 = vpop.f32.mrf.mxu0
    %v982 = vadd.f32 0.0, %v981
    %983 = vdwg.mxu0
    %984 = vmatpush.msra.mxu0 0.0
    %985 = vmatpush.msra.mxu0 0.0
    %986 = vmatpush.msra.mxu0 0.0
    %987 = vmatpush.msra.mxu0 0.0
    %988 = vmatpush.msra.mxu0 0.0
    %989 = vmatpush.msra.mxu0 0.0
    %990 = vmatpush.msra.mxu0 0.0
    %991 = vmatpush.msra.mxu0 0.0
    %992 = vmatpush.msra.mxu0 0.0
    %993 = vmatpush.msra.mxu0 0.0
    %994 = vmatpush.msra.mxu0 0.0
    %995 = vmatpush.msra.mxu0 0.0
    %996 = vmatpush.msra.mxu0 0.0
    %997 = vmatpush.msra.mxu0 %v864
    %998 = vmatpush.msra.mxu0 %v861
    %999 = vmatpush.msra.mxu0 %v859
    %1000 = vmatmul.f32.gmra.mxu0 %v267
    %v1001 = vpop.f32.mrf.mxu0
    %v1002 = vadd.f32 0.0, %v1001
    %1003 = vmatmul.f32.gmra.mxu0 %v270
    %v1004 = vpop.f32.mrf.mxu0
    %v1005 = vadd.f32 0.0, %v1004
    %1006 = vmatmul.f32.gmra.mxu0 %v273
    %v1007 = vpop.f32.mrf.mxu0
    %v1008 = vadd.f32 0.0, %v1007
    %1009 = vmatmul.f32.gmra.mxu0 %v276
    %v1010 = vpop.f32.mrf.mxu0
    %v1011 = vadd.f32 0.0, %v1010
    %1012 = vmatmul.f32.gmra.mxu0 %v279
    %v1013 = vpop.f32.mrf.mxu0
    %v1014 = vadd.f32 0.0, %v1013
    %1015 = vdwg.mxu0
    %1016 = vmatpush.msra.mxu0 0.0
    %1017 = vmatpush.msra.mxu0 0.0
    %1018 = vmatpush.msra.mxu0 0.0
    %1019 = vmatpush.msra.mxu0 0.0
    %1020 = vmatpush.msra.mxu0 0.0
    %1021 = vmatpush.msra.mxu0 0.0
    %1022 = vmatpush.msra.mxu0 0.0
    %1023 = vmatpush.msra.mxu0 0.0
    %1024 = vmatpush.msra.mxu0 0.0
    %1025 = vmatpush.msra.mxu0 0.0
    %1026 = vmatpush.msra.mxu0 0.0
    %1027 = vmatpush.msra.mxu0 0.0
    %1028 = vmatpush.msra.mxu0 0.0
    %1029 = vmatpush.msra.mxu0 %v864
    %1030 = vmatpush.msra.mxu0 %v861
    %1031 = vmatpush.msra.mxu0 %v859
    %1032 = vmatmul.f32.gmra.mxu0 %v326
    %v1033 = vpop.f32.mrf.mxu0
    %v1034 = vadd.f32 0.0, %v1033
    %1035 = vmatmul.f32.gmra.mxu0 %v329
    %v1036 = vpop.f32.mrf.mxu0
    %v1037 = vadd.f32 0.0, %v1036
    %1038 = vmatmul.f32.gmra.mxu0 %v332
    %v1039 = vpop.f32.mrf.mxu0
    %v1040 = vadd.f32 0.0, %v1039
    %1041 = vmatmul.f32.gmra.mxu0 %v335
    %v1042 = vpop.f32.mrf.mxu0
    %v1043 = vadd.f32 0.0, %v1042
    %1044 = vmatmul.f32.gmra.mxu0 %v338
    %v1045 = vpop.f32.mrf.mxu0
    %v1046 = vadd.f32 0.0, %v1045
    %1047 = vdwg.mxu0
    %v1048 = vadd.f32 %v885, %v1002
    %v1049 = vadd.f32 %v888, %v1005
    %v1050 = vadd.f32 %v891, %v1008
    %v1051 = vadd.f32 %v894, %v1011
    %v1052 = vadd.f32 %v897, %v1014
    %v1053 = vmul.f32 %v1048, %v929
    %v1054 = vmul.f32 %v1049, %v932
    %v1055 = vmul.f32 %v1050, %v935
    %v1056 = vmul.f32 %v1051, %v938
    %v1057 = vmul.f32 %v1052, %v941
    %v1058 = vmul.f32 %v885, %v1034
    %v1059 = vmul.f32 %v888, %v1037
    %v1060 = vmul.f32 %v891, %v1040
    %v1061 = vmul.f32 %v894, %v1043
    %v1062 = vmul.f32 %v897, %v1046
    %v1063 = vadd.f32 %v1053, %v1058
    %v1064 = vadd.f32 %v1054, %v1059
    %v1065 = vadd.f32 %v1055, %v1060
    %v1066 = vadd.f32 %v1056, %v1061
    %v1067 = vadd.f32 %v1057, %v1062
    %v1069 = vsel %vm497, %v1063, 0
    %v1072 = vsel %vm497, %v1064, 0
    %v1075 = vsel %vm497, %v1065, 0
    %v1078 = vsel %vm497, %v1066, 0
    %v1081 = vsel %vm497, %v1067, 0
    %1083 = vmatpush.msra.mxu0 0.0
    %1084 = vmatpush.msra.mxu0 0.0
    %1085 = vmatpush.msra.mxu0 0.0
    %1086 = vmatpush.msra.mxu0 0.0
    %1087 = vmatpush.msra.mxu0 0.0
    %1088 = vmatpush.msra.mxu0 0.0
    %1089 = vmatpush.msra.mxu0 0.0
    %1090 = vmatpush.msra.mxu0 0.0
    %1091 = vmatpush.msra.mxu0 0.0
    %1092 = vmatpush.msra.mxu0 0.0
    %1093 = vmatpush.msra.mxu0 0.0
    %1094 = vmatpush.msra.mxu0 0.0
    %1095 = vmatpush.msra.mxu0 %v170
    %1096 = vmatpush.msra.mxu0 %v169
    %1097 = vmatpush.msra.mxu0 %v168
    %1098 = vmatpush.msra.mxu0 %v167
    %1099 = vmatmul.f32.gmra.mxu0 %v1069
    %v1100 = vpop.f32.mrf.mxu0
    %v1101 = vadd.f32 0.0, %v1100
    %1102 = vmatmul.f32.gmra.mxu0 %v1072
    %v1103 = vpop.f32.mrf.mxu0
    %v1104 = vadd.f32 0.0, %v1103
    %1105 = vmatmul.f32.gmra.mxu0 %v1075
    %v1106 = vpop.f32.mrf.mxu0
    %v1107 = vadd.f32 0.0, %v1106
    %1108 = vmatmul.f32.gmra.mxu0 %v1078
    %v1109 = vpop.f32.mrf.mxu0
    %v1110 = vadd.f32 0.0, %v1109
    %1111 = vmatmul.f32.gmra.mxu0 %v1081
    %v1112 = vpop.f32.mrf.mxu0
    %v1113 = vadd.f32 0.0, %v1112
    %1114 = vdwg.mxu0
    %v1115 = vmul.f32 %v1101, 0.11785113
    %v1116 = vmul.f32 %v1104, 0.11785113
    %v1117 = vmul.f32 %v1107, 0.11785113
    %v1118 = vmul.f32 %v1110, 0.11785113
    %v1119 = vmul.f32 %v1113, 0.11785113
    %vm1120 = vcmp.ge.f32.partialorder %v1115, 0.0
    %vm1121 = vcmp.ge.f32.partialorder %v1116, 0.0
    %vm1122 = vcmp.ge.f32.partialorder %v1117, 0.0
    %vm1123 = vcmp.ge.f32.partialorder %v1118, 0.0
    %vm1124 = vcmp.ge.f32.partialorder %v1119, 0.0
    %v1125 = vmul.f32 %v1115, 0.2
    %v1126 = vmul.f32 %v1116, 0.2
    %v1127 = vmul.f32 %v1117, 0.2
    %v1128 = vmul.f32 %v1118, 0.2
    %v1129 = vmul.f32 %v1119, 0.2
    %v1130 = vsel %vm1120, %v1115, %v1125
    %v1131 = vsel %vm1121, %v1116, %v1126
    %v1132 = vsel %vm1122, %v1117, %v1127
    %v1133 = vsel %vm1123, %v1118, %v1128
    %v1134 = vsel %vm1124, %v1119, %v1129
    %v1135 = vsel %vm565, %v1130, -inf
    %v1136 = vsel %vm565, %v1131, -inf
    %v1137 = vsel %vm565, %v1132, -inf
    %v1138 = vsel %vm565, %v1133, -inf
    %v1139 = vsel %vm565, %v1134, -inf
    %v1140 = vmax.f32 %v1135, %v1139
    %v1141 = vmax.f32 %v1140, %v1136
    %v1142 = vmax.f32 %v1137, %v1138
    %v1143 = vmax.f32 %v1141, %v1142
    %v1144 = vrot.slane %v1143, 4
    %v1145 = vmax.f32 %v1143, %v1144
    %v1146 = vrot.slane %v1145, 2
    %v1147 = vmax.f32 %v1145, %v1146
    %v1148 = vrot.slane %v1147, 1
    %v1149 = vmax.f32 %v1147, %v1148
    %v1150 = vsub.f32 %v1130, %v1149
    %v1151 = vsub.f32 %v1131, %v1149
    %v1152 = vsub.f32 %v1132, %v1149
    %v1153 = vsub.f32 %v1133, %v1149
    %v1154 = vsub.f32 %v1134, %v1149
    %v1155 = vmul.f32 %v1150, 1.442695
    %v1156 = vpow.pop %v1155
    %v1157 = vmul.f32 %v1151, 1.442695
    %v1158 = vpow.pop %v1157
    %v1159 = vmul.f32 %v1152, 1.442695
    %v1160 = vpow.pop %v1159
    %v1161 = vmul.f32 %v1153, 1.442695
    %v1162 = vpow.pop %v1161
    %v1163 = vmul.f32 %v1154, 1.442695
    %v1164 = vpow.pop %v1163
    %v1165 = vsel %vm565, %v1156, 0.0
    %v1166 = vsel %vm565, %v1158, 0.0
    %v1167 = vadd.f32 %v1165, %v1166
    %v1168 = vsel %vm565, %v1160, 0.0
    %v1169 = vadd.f32 %v1167, %v1168
    %v1170 = vsel %vm565, %v1162, 0.0
    %v1171 = vadd.f32 %v1169, %v1170
    %v1172 = vsel %vm565, %v1164, 0.0
    %v1173 = vadd.f32 %v1171, %v1172
    %v1174 = vrot.slane %v1173, 4
    %v1175 = vadd.f32 %v1173, %v1174
    %v1176 = vrot.slane %v1175, 2
    %v1177 = vadd.f32 %v1175, %v1176
    %v1178 = vrot.slane %v1177, 1
    %v1179 = vadd.f32 %v1177, %v1178
    %v1180 = vrcp.pop %v1179
    %v1181 = vmul.f32 %v1156, %v1180
    %v1182 = vmul.f32 %v1158, %v1180
    %v1183 = vmul.f32 %v1160, %v1180
    %v1184 = vmul.f32 %v1162, %v1180
    %v1185 = vmul.f32 %v1164, %v1180
    %v1187 = vsel %vm565, %v1181, 0
    %v1190 = vsel %vm565, %v1182, 0
    %v1193 = vsel %vm565, %v1183, 0
    %v1196 = vsel %vm565, %v1184, 0
    %v1199 = vsel %vm565, %v1185, 0
    %1201 = vmatpush.xpose.msra.mxu0 0.0
    %1202 = vmatpush.xpose.msra.mxu0 0.0
    %1203 = vmatpush.xpose.msra.mxu0 0.0
    %1204 = vmatpush.xpose.msra.mxu0 0.0
    %1205 = vmatpush.xpose.msra.mxu0 0.0
    %1206 = vmatpush.xpose.msra.mxu0 0.0
    %1207 = vmatpush.xpose.msra.mxu0 0.0
    %1208 = vmatpush.xpose.msra.mxu0 0.0
    %1209 = vmatpush.xpose.msra.mxu0 0.0
    %1210 = vmatpush.xpose.msra.mxu0 0.0
    %1211 = vmatpush.xpose.msra.mxu0 0.0
    %1212 = vmatpush.xpose.msra.mxu0 0.0
    %1213 = vmatpush.xpose.msra.mxu0 %v642
    %1214 = vmatpush.xpose.msra.mxu0 %v639
    %1215 = vmatpush.xpose.msra.mxu0 %v636
    %1216 = vmatpush.xpose.msra.mxu0 %v633
    %1217 = vmatmul.f32.gmra.mxu0 %v1187
    %v1218 = vpop.f32.mrf.mxu0
    %v1219 = vadd.f32 0.0, %v1218
    %1220 = vmatmul.f32.gmra.mxu0 %v1190
    %v1221 = vpop.f32.mrf.mxu0
    %v1222 = vadd.f32 0.0, %v1221
    %1223 = vmatmul.f32.gmra.mxu0 %v1193
    %v1224 = vpop.f32.mrf.mxu0
    %v1225 = vadd.f32 0.0, %v1224
    %1226 = vmatmul.f32.gmra.mxu0 %v1196
    %v1227 = vpop.f32.mrf.mxu0
    %v1228 = vadd.f32 0.0, %v1227
    %1229 = vmatmul.f32.gmra.mxu0 %v1199
    %v1230 = vpop.f32.mrf.mxu0
    %v1231 = vadd.f32 0.0, %v1230
    %1232 = vdwg.mxu0
    %v1233 = vmul.f32 %v970, %v1219
    %v1234 = vmul.f32 %v973, %v1222
    %v1235 = vmul.f32 %v976, %v1225
    %v1236 = vmul.f32 %v979, %v1228
    %v1237 = vmul.f32 %v982, %v1231
    %1238 = vmatpush.msra.mxu0 0.0
    %1239 = vmatpush.msra.mxu0 0.0
    %1240 = vmatpush.msra.mxu0 0.0
    %1241 = vmatpush.msra.mxu0 0.0
    %1242 = vmatpush.msra.mxu0 0.0
    %1243 = vmatpush.msra.mxu0 0.0
    %1244 = vmatpush.msra.mxu0 0.0
    %1245 = vmatpush.msra.mxu0 0.0
    %1246 = vmatpush.msra.mxu0 0.0
    %1247 = vmatpush.msra.mxu0 0.0
    %1248 = vmatpush.msra.mxu0 0.0
    %1249 = vmatpush.msra.mxu0 %v1237
    %1250 = vmatpush.msra.mxu0 %v1236
    %1251 = vmatpush.msra.mxu0 %v1235
    %1252 = vmatpush.msra.mxu0 %v1234
    %1253 = vmatpush.msra.mxu0 %v1233
    %1254 = vmatmul.f32.gmra.mxu0 %v683
    %v1255 = vpop.f32.mrf.mxu0
    %v1256 = vadd.f32 0.0, %v1255
    %1257 = vmatmul.f32.gmra.mxu0 %v686
    %v1258 = vpop.f32.mrf.mxu0
    %v1259 = vadd.f32 0.0, %v1258
    %1260 = vmatmul.f32.gmra.mxu0 %v689
    %v1261 = vpop.f32.mrf.mxu0
    %v1262 = vadd.f32 0.0, %v1261
    %1263 = vdwg.mxu0
    %v1264 = vld [vmem:[%s33] sm:$0xf]
    %v1265 = vld [vmem:[%s33 + $0x4] sm:$0xf]
    %v1266 = vld [vmem:[%s33 + $0x8] sm:$0xf]
    %v1267 = vld [vmem:[%s33 + $0xc] sm:$0xf]
    %v1268 = vpack.c.bf16 %v1259, %v1256
    %v1269 = vpack.c.bf16 %v1262, %v1262
    %v1270 = vld [vmem:[%s35] sm:$0x1]
    %v1272 = vperm.slane %v1270, 0
    %v1278 = vunpack.c.l.b16 %v1264
    %v1279 = vunpack.c.l.b16 %v1265
    %v1280 = vunpack.c.l.b16 %v1266
    %v1281 = vunpack.c.l.b16 %v1267
    %v1282 = vpack.c.b16 %v1279, %v1278
    %v1283 = vpack.c.b16 %v1281, %v1280
    %v1287 = vsel %vm497, %v1268, 0
    %v1290 = vsel %vm497, %v1269, 0
    %1292 = vmatpush.bf16.msra.mxu0 0
    %1293 = vmatpush.bf16.msra.mxu0 0
    %1294 = vmatpush.bf16.msra.mxu0 0
    %1295 = vmatpush.bf16.msra.mxu0 0
    %1296 = vmatpush.bf16.msra.mxu0 0
    %1297 = vmatpush.bf16.msra.mxu0 0
    %1298 = vmatpush.bf16.msra.mxu0 %v1283
    %1299 = vmatpush.bf16.msra.mxu0 %v1282
    %1300 = vmatmul.bf16.gmra.mxu0 %v1287
    %v1301 = vpop.f32.mrf.mxu0
    %v1302 = vadd.f32 %v1272, %v1301
    %v1303 = vpop.f32.mrf.mxu0
    %v1304 = vadd.f32 %v1272, %v1303
    %1305 = vmatmul.bf16.gmra.mxu0 %v1290
    %v1306 = vpop.f32.mrf.mxu0
    %v1307 = vadd.f32 %v1272, %v1306
    %v1308 = vpop.f32.mrf.mxu0
    %1309 = vdwg.mxu0
    %v1310 = vadd.f32 %v1302, %v772
    %v1311 = vadd.f32 %v1304, %v773
    %v1312 = vadd.f32 %v1307, %v774
    %v1313 = vld [vmem:[%s37] sm:$0xf]
    %v1314 = vld [vmem:[%s37 + $0x4] sm:$0xf]
    %v1315 = vld [vmem:[%s37 + $0x8] sm:$0xf]
    %v1316 = vld [vmem:[%s37 + $0xc] sm:$0xf]
    %v1317 = vpack.c.bf16 %v1311, %v1310
    %v1318 = vpack.c.bf16 %v1312, %v1312
    %v1319 = vld [vmem:[%s39] sm:$0x1]
    %v1321 = vperm.slane %v1319, 0
    %v1327 = vunpack.c.l.b16 %v1313
    %v1328 = vunpack.c.l.b16 %v1314
    %v1329 = vunpack.c.l.b16 %v1315
    %v1330 = vunpack.c.l.b16 %v1316
    %v1331 = vpack.c.b16 %v1328, %v1327
    %v1332 = vpack.c.b16 %v1330, %v1329
    %v1336 = vsel %vm497, %v1317, 0
    %v1339 = vsel %vm497, %v1318, 0
    %1341 = vmatpush.bf16.msra.mxu0 0
    %1342 = vmatpush.bf16.msra.mxu0 0
    %1343 = vmatpush.bf16.msra.mxu0 0
    %1344 = vmatpush.bf16.msra.mxu0 0
    %1345 = vmatpush.bf16.msra.mxu0 0
    %1346 = vmatpush.bf16.msra.mxu0 0
    %1347 = vmatpush.bf16.msra.mxu0 %v1332
    %1348 = vmatpush.bf16.msra.mxu0 %v1331
    %1349 = vmatmul.bf16.gmra.mxu0 %v1336
    %v1350 = vpop.f32.mrf.mxu0
    %v1351 = vadd.f32 %v1321, %v1350
    %v1352 = vpop.f32.mrf.mxu0
    %v1353 = vadd.f32 %v1321, %v1352
    %1354 = vmatmul.bf16.gmra.mxu0 %v1339
    %v1355 = vpop.f32.mrf.mxu0
    %v1356 = vadd.f32 %v1321, %v1355
    %v1357 = vpop.f32.mrf.mxu0
    %1358 = vdwg.mxu0
    %v1359 = vld [vmem:[%s41] sm:$0xf]
    %v1360 = vld [vmem:[%s41 + $0x4] sm:$0xf]
    %v1361 = vld [vmem:[%s41 + $0x8] sm:$0xf]
    %v1362 = vld [vmem:[%s41 + $0xc] sm:$0xf]
    %v1363 = vld [vmem:[%s41 + $0x10] sm:$0xf]
    %v1364 = vld [vmem:[%s41 + $0x14] sm:$0xf]
    %v1365 = vld [vmem:[%s43] sm:$0x1]
    %v1367 = vperm.slane %v1365, 0
    %v1375 = vunpack.c.l.b16 %v1359
    %v1376 = vunpack.c.l.b16 %v1360
    %v1377 = vunpack.c.l.b16 %v1361
    %v1378 = vunpack.c.l.b16 %v1362
    %v1379 = vunpack.c.l.b16 %v1363
    %v1380 = vunpack.c.l.b16 %v1364
    %v1381 = vpack.c.b16 %v1376, %v1375
    %v1382 = vpack.c.b16 %v1378, %v1377
    %v1383 = vpack.c.b16 %v1380, %v1379
    %1387 = vmatpush.bf16.msra.mxu0 0
    %1388 = vmatpush.bf16.msra.mxu0 0
    %1389 = vmatpush.bf16.msra.mxu0 0
    %1390 = vmatpush.bf16.msra.mxu0 0
    %1391 = vmatpush.bf16.msra.mxu0 0
    %1392 = vmatpush.bf16.msra.mxu0 %v1383
    %1393 = vmatpush.bf16.msra.mxu0 %v1382
    %1394 = vmatpush.bf16.msra.mxu0 %v1381
    %1395 = vmatmul.bf16.gmra.mxu0 %v242
    %v1396 = vpop.f32.mrf.mxu0
    %v1397 = vadd.f32 %v1367, %v1396
    %v1398 = vpop.f32.mrf.mxu0
    %v1399 = vadd.f32 %v1367, %v1398
    %1400 = vmatmul.bf16.gmra.mxu0 %v245
    %v1401 = vpop.f32.mrf.mxu0
    %v1402 = vadd.f32 %v1367, %v1401
    %v1403 = vpop.f32.mrf.mxu0
    %1404 = vdwg.mxu0
    %1405 = vmatpush.msra.mxu0 0.0
    %1406 = vmatpush.msra.mxu0 0.0
    %1407 = vmatpush.msra.mxu0 0.0
    %1408 = vmatpush.msra.mxu0 0.0
    %1409 = vmatpush.msra.mxu0 0.0
    %1410 = vmatpush.msra.mxu0 0.0
    %1411 = vmatpush.msra.mxu0 0.0
    %1412 = vmatpush.msra.mxu0 0.0
    %1413 = vmatpush.msra.mxu0 0.0
    %1414 = vmatpush.msra.mxu0 0.0
    %1415 = vmatpush.msra.mxu0 0.0
    %1416 = vmatpush.msra.mxu0 0.0
    %1417 = vmatpush.msra.mxu0 0.0
    %1418 = vmatpush.msra.mxu0 %v1356
    %1419 = vmatpush.msra.mxu0 %v1353
    %1420 = vmatpush.msra.mxu0 %v1351
    %1421 = vmatmul.f32.gmra.mxu0 %v267
    %v1422 = vpop.f32.mrf.mxu0
    %v1423 = vadd.f32 0.0, %v1422
    %1424 = vmatmul.f32.gmra.mxu0 %v270
    %v1425 = vpop.f32.mrf.mxu0
    %v1426 = vadd.f32 0.0, %v1425
    %1427 = vmatmul.f32.gmra.mxu0 %v273
    %v1428 = vpop.f32.mrf.mxu0
    %v1429 = vadd.f32 0.0, %v1428
    %1430 = vmatmul.f32.gmra.mxu0 %v276
    %v1431 = vpop.f32.mrf.mxu0
    %v1432 = vadd.f32 0.0, %v1431
    %1433 = vmatmul.f32.gmra.mxu0 %v279
    %v1434 = vpop.f32.mrf.mxu0
    %v1435 = vadd.f32 0.0, %v1434
    %1436 = vdwg.mxu0
    %1440 = vrot.lane.b32.xlu0 %v1351, 96
    %v1441 = vpop.permute.xlu0 %1440
    %1442 = vrot.lane.b32.xlu0 %v1353, 96
    %v1443 = vpop.permute.xlu0 %1442
    %1444 = vrot.lane.b32.xlu0 %v1356, 96
    %v1445 = vpop.permute.xlu0 %1444
    %1449 = vmatpush.msra.mxu0 0.0
    %1450 = vmatpush.msra.mxu0 0.0
    %1451 = vmatpush.msra.mxu0 0.0
    %1452 = vmatpush.msra.mxu0 0.0
    %1453 = vmatpush.msra.mxu0 0.0
    %1454 = vmatpush.msra.mxu0 0.0
    %1455 = vmatpush.msra.mxu0 0.0
    %1456 = vmatpush.msra.mxu0 0.0
    %1457 = vmatpush.msra.mxu0 0.0
    %1458 = vmatpush.msra.mxu0 0.0
    %1459 = vmatpush.msra.mxu0 0.0
    %1460 = vmatpush.msra.mxu0 0.0
    %1461 = vmatpush.msra.mxu0 0.0
    %1462 = vmatpush.msra.mxu0 %v1445
    %1463 = vmatpush.msra.mxu0 %v1443
    %1464 = vmatpush.msra.mxu0 %v1441
    %1465 = vmatmul.f32.gmra.mxu0 %v326
    %v1466 = vpop.f32.mrf.mxu0
    %v1467 = vadd.f32 0.0, %v1466
    %1468 = vmatmul.f32.gmra.mxu0 %v329
    %v1469 = vpop.f32.mrf.mxu0
    %v1470 = vadd.f32 0.0, %v1469
    %1471 = vmatmul.f32.gmra.mxu0 %v332
    %v1472 = vpop.f32.mrf.mxu0
    %v1473 = vadd.f32 0.0, %v1472
    %1474 = vmatmul.f32.gmra.mxu0 %v335
    %v1475 = vpop.f32.mrf.mxu0
    %v1476 = vadd.f32 0.0, %v1475
    %1477 = vmatmul.f32.gmra.mxu0 %v338
    %v1478 = vpop.f32.mrf.mxu0
    %v1479 = vadd.f32 0.0, %v1478
    %1480 = vdwg.mxu0
    %1481 = vrot.lane.b32.xlu0 %v1351, 64
    %v1482 = vpop.permute.xlu0 %1481
    %1483 = vrot.lane.b32.xlu0 %v1353, 64
    %v1484 = vpop.permute.xlu0 %1483
    %1485 = vrot.lane.b32.xlu0 %v1356, 64
    %v1486 = vpop.permute.xlu0 %1485
    %1490 = vmatpush.msra.mxu0 0.0
    %1491 = vmatpush.msra.mxu0 0.0
    %1492 = vmatpush.msra.mxu0 0.0
    %1493 = vmatpush.msra.mxu0 0.0
    %1494 = vmatpush.msra.mxu0 0.0
    %1495 = vmatpush.msra.mxu0 0.0
    %1496 = vmatpush.msra.mxu0 0.0
    %1497 = vmatpush.msra.mxu0 0.0
    %1498 = vmatpush.msra.mxu0 0.0
    %1499 = vmatpush.msra.mxu0 0.0
    %1500 = vmatpush.msra.mxu0 0.0
    %1501 = vmatpush.msra.mxu0 0.0
    %1502 = vmatpush.msra.mxu0 0.0
    %1503 = vmatpush.msra.mxu0 %v1486
    %1504 = vmatpush.msra.mxu0 %v1484
    %1505 = vmatpush.msra.mxu0 %v1482
    %1506 = vmatmul.f32.gmra.mxu0 %v326
    %v1507 = vpop.f32.mrf.mxu0
    %v1508 = vadd.f32 0.0, %v1507
    %1509 = vmatmul.f32.gmra.mxu0 %v329
    %v1510 = vpop.f32.mrf.mxu0
    %v1511 = vadd.f32 0.0, %v1510
    %1512 = vmatmul.f32.gmra.mxu0 %v332
    %v1513 = vpop.f32.mrf.mxu0
    %v1514 = vadd.f32 0.0, %v1513
    %1515 = vmatmul.f32.gmra.mxu0 %v335
    %v1516 = vpop.f32.mrf.mxu0
    %v1517 = vadd.f32 0.0, %v1516
    %1518 = vmatmul.f32.gmra.mxu0 %v338
    %v1519 = vpop.f32.mrf.mxu0
    %v1520 = vadd.f32 0.0, %v1519
    %1521 = vdwg.mxu0
    %1522 = vmatpush.msra.mxu0 0.0
    %1523 = vmatpush.msra.mxu0 0.0
    %1524 = vmatpush.msra.mxu0 0.0
    %1525 = vmatpush.msra.mxu0 0.0
    %1526 = vmatpush.msra.mxu0 0.0
    %1527 = vmatpush.msra.mxu0 0.0
    %1528 = vmatpush.msra.mxu0 0.0
    %1529 = vmatpush.msra.mxu0 0.0
    %1530 = vmatpush.msra.mxu0 0.0
    %1531 = vmatpush.msra.mxu0 0.0
    %1532 = vmatpush.msra.mxu0 0.0
    %1533 = vmatpush.msra.mxu0 0.0
    %1534 = vmatpush.msra.mxu0 0.0
    %1535 = vmatpush.msra.mxu0 %v1402
    %1536 = vmatpush.msra.mxu0 %v1399
    %1537 = vmatpush.msra.mxu0 %v1397
    %1538 = vmatmul.f32.gmra.mxu0 %v267
    %v1539 = vpop.f32.mrf.mxu0
    %v1540 = vadd.f32 0.0, %v1539
    %1541 = vmatmul.f32.gmra.mxu0 %v270
    %v1542 = vpop.f32.mrf.mxu0
    %v1543 = vadd.f32 0.0, %v1542
    %1544 = vmatmul.f32.gmra.mxu0 %v273
    %v1545 = vpop.f32.mrf.mxu0
    %v1546 = vadd.f32 0.0, %v1545
    %1547 = vmatmul.f32.gmra.mxu0 %v276
    %v1548 = vpop.f32.mrf.mxu0
    %v1549 = vadd.f32 0.0, %v1548
    %1550 = vmatmul.f32.gmra.mxu0 %v279
    %v1551 = vpop.f32.mrf.mxu0
    %v1552 = vadd.f32 0.0, %v1551
    %1553 = vdwg.mxu0
    %1554 = vmatpush.msra.mxu0 0.0
    %1555 = vmatpush.msra.mxu0 0.0
    %1556 = vmatpush.msra.mxu0 0.0
    %1557 = vmatpush.msra.mxu0 0.0
    %1558 = vmatpush.msra.mxu0 0.0
    %1559 = vmatpush.msra.mxu0 0.0
    %1560 = vmatpush.msra.mxu0 0.0
    %1561 = vmatpush.msra.mxu0 0.0
    %1562 = vmatpush.msra.mxu0 0.0
    %1563 = vmatpush.msra.mxu0 0.0
    %1564 = vmatpush.msra.mxu0 0.0
    %1565 = vmatpush.msra.mxu0 0.0
    %1566 = vmatpush.msra.mxu0 0.0
    %1567 = vmatpush.msra.mxu0 %v1402
    %1568 = vmatpush.msra.mxu0 %v1399
    %1569 = vmatpush.msra.mxu0 %v1397
    %1570 = vmatmul.f32.gmra.mxu0 %v326
    %v1571 = vpop.f32.mrf.mxu0
    %v1572 = vadd.f32 0.0, %v1571
    %1573 = vmatmul.f32.gmra.mxu0 %v329
    %v1574 = vpop.f32.mrf.mxu0
    %v1575 = vadd.f32 0.0, %v1574
    %1576 = vmatmul.f32.gmra.mxu0 %v332
    %v1577 = vpop.f32.mrf.mxu0
    %v1578 = vadd.f32 0.0, %v1577
    %1579 = vmatmul.f32.gmra.mxu0 %v335
    %v1580 = vpop.f32.mrf.mxu0
    %v1581 = vadd.f32 0.0, %v1580
    %1582 = vmatmul.f32.gmra.mxu0 %v338
    %v1583 = vpop.f32.mrf.mxu0
    %v1584 = vadd.f32 0.0, %v1583
    %1585 = vdwg.mxu0
    %v1586 = vadd.f32 %v1423, %v1540
    %v1587 = vadd.f32 %v1426, %v1543
    %v1588 = vadd.f32 %v1429, %v1546
    %v1589 = vadd.f32 %v1432, %v1549
    %v1590 = vadd.f32 %v1435, %v1552
    %v1591 = vmul.f32 %v1586, %v1467
    %v1592 = vmul.f32 %v1587, %v1470
    %v1593 = vmul.f32 %v1588, %v1473
    %v1594 = vmul.f32 %v1589, %v1476
    %v1595 = vmul.f32 %v1590, %v1479
    %v1596 = vmul.f32 %v1423, %v1572
    %v1597 = vmul.f32 %v1426, %v1575
    %v1598 = vmul.f32 %v1429, %v1578
    %v1599 = vmul.f32 %v1432, %v1581
    %v1600 = vmul.f32 %v1435, %v1584
    %v1601 = vadd.f32 %v1591, %v1596
    %v1602 = vadd.f32 %v1592, %v1597
    %v1603 = vadd.f32 %v1593, %v1598
    %v1604 = vadd.f32 %v1594, %v1599
    %v1605 = vadd.f32 %v1595, %v1600
    %v1607 = vsel %vm497, %v1601, 0
    %v1610 = vsel %vm497, %v1602, 0
    %v1613 = vsel %vm497, %v1603, 0
    %v1616 = vsel %vm497, %v1604, 0
    %v1619 = vsel %vm497, %v1605, 0
    %1621 = vmatpush.msra.mxu0 0.0
    %1622 = vmatpush.msra.mxu0 0.0
    %1623 = vmatpush.msra.mxu0 0.0
    %1624 = vmatpush.msra.mxu0 0.0
    %1625 = vmatpush.msra.mxu0 0.0
    %1626 = vmatpush.msra.mxu0 0.0
    %1627 = vmatpush.msra.mxu0 0.0
    %1628 = vmatpush.msra.mxu0 0.0
    %1629 = vmatpush.msra.mxu0 0.0
    %1630 = vmatpush.msra.mxu0 0.0
    %1631 = vmatpush.msra.mxu0 0.0
    %1632 = vmatpush.msra.mxu0 0.0
    %1633 = vmatpush.msra.mxu0 %v170
    %1634 = vmatpush.msra.mxu0 %v169
    %1635 = vmatpush.msra.mxu0 %v168
    %1636 = vmatpush.msra.mxu0 %v167
    %1637 = vmatmul.f32.gmra.mxu0 %v1607
    %v1638 = vpop.f32.mrf.mxu0
    %v1639 = vadd.f32 0.0, %v1638
    %1640 = vmatmul.f32.gmra.mxu0 %v1610
    %v1641 = vpop.f32.mrf.mxu0
    %v1642 = vadd.f32 0.0, %v1641
    %1643 = vmatmul.f32.gmra.mxu0 %v1613
    %v1644 = vpop.f32.mrf.mxu0
    %v1645 = vadd.f32 0.0, %v1644
    %1646 = vmatmul.f32.gmra.mxu0 %v1616
    %v1647 = vpop.f32.mrf.mxu0
    %v1648 = vadd.f32 0.0, %v1647
    %1649 = vmatmul.f32.gmra.mxu0 %v1619
    %v1650 = vpop.f32.mrf.mxu0
    %v1651 = vadd.f32 0.0, %v1650
    %1652 = vdwg.mxu0
    %v1653 = vmul.f32 %v1639, 0.11785113
    %v1654 = vmul.f32 %v1642, 0.11785113
    %v1655 = vmul.f32 %v1645, 0.11785113
    %v1656 = vmul.f32 %v1648, 0.11785113
    %v1657 = vmul.f32 %v1651, 0.11785113
    %vm1658 = vcmp.ge.f32.partialorder %v1653, 0.0
    %vm1659 = vcmp.ge.f32.partialorder %v1654, 0.0
    %vm1660 = vcmp.ge.f32.partialorder %v1655, 0.0
    %vm1661 = vcmp.ge.f32.partialorder %v1656, 0.0
    %vm1662 = vcmp.ge.f32.partialorder %v1657, 0.0
    %v1663 = vmul.f32 %v1653, 0.2
    %v1664 = vmul.f32 %v1654, 0.2
    %v1665 = vmul.f32 %v1655, 0.2
    %v1666 = vmul.f32 %v1656, 0.2
    %v1667 = vmul.f32 %v1657, 0.2
    %v1668 = vsel %vm1658, %v1653, %v1663
    %v1669 = vsel %vm1659, %v1654, %v1664
    %v1670 = vsel %vm1660, %v1655, %v1665
    %v1671 = vsel %vm1661, %v1656, %v1666
    %v1672 = vsel %vm1662, %v1657, %v1667
    %v1673 = vsel %vm565, %v1668, -inf
    %v1674 = vsel %vm565, %v1669, -inf
    %v1675 = vsel %vm565, %v1670, -inf
    %v1676 = vsel %vm565, %v1671, -inf
    %v1677 = vsel %vm565, %v1672, -inf
    %v1678 = vmax.f32 %v1673, %v1677
    %v1679 = vmax.f32 %v1678, %v1674
    %v1680 = vmax.f32 %v1675, %v1676
    %v1681 = vmax.f32 %v1679, %v1680
    %v1682 = vrot.slane %v1681, 4
    %v1683 = vmax.f32 %v1681, %v1682
    %v1684 = vrot.slane %v1683, 2
    %v1685 = vmax.f32 %v1683, %v1684
    %v1686 = vrot.slane %v1685, 1
    %v1687 = vmax.f32 %v1685, %v1686
    %v1688 = vsub.f32 %v1668, %v1687
    %v1689 = vsub.f32 %v1669, %v1687
    %v1690 = vsub.f32 %v1670, %v1687
    %v1691 = vsub.f32 %v1671, %v1687
    %v1692 = vsub.f32 %v1672, %v1687
    %v1693 = vmul.f32 %v1688, 1.442695
    %v1694 = vpow.pop %v1693
    %v1695 = vmul.f32 %v1689, 1.442695
    %v1696 = vpow.pop %v1695
    %v1697 = vmul.f32 %v1690, 1.442695
    %v1698 = vpow.pop %v1697
    %v1699 = vmul.f32 %v1691, 1.442695
    %v1700 = vpow.pop %v1699
    %v1701 = vmul.f32 %v1692, 1.442695
    %v1702 = vpow.pop %v1701
    %v1703 = vsel %vm565, %v1694, 0.0
    %v1704 = vsel %vm565, %v1696, 0.0
    %v1705 = vadd.f32 %v1703, %v1704
    %v1706 = vsel %vm565, %v1698, 0.0
    %v1707 = vadd.f32 %v1705, %v1706
    %v1708 = vsel %vm565, %v1700, 0.0
    %v1709 = vadd.f32 %v1707, %v1708
    %v1710 = vsel %vm565, %v1702, 0.0
    %v1711 = vadd.f32 %v1709, %v1710
    %v1712 = vrot.slane %v1711, 4
    %v1713 = vadd.f32 %v1711, %v1712
    %v1714 = vrot.slane %v1713, 2
    %v1715 = vadd.f32 %v1713, %v1714
    %v1716 = vrot.slane %v1715, 1
    %v1717 = vadd.f32 %v1715, %v1716
    %v1718 = vrcp.pop %v1717
    %v1719 = vmul.f32 %v1694, %v1718
    %v1720 = vmul.f32 %v1696, %v1718
    %v1721 = vmul.f32 %v1698, %v1718
    %v1722 = vmul.f32 %v1700, %v1718
    %v1723 = vmul.f32 %v1702, %v1718
    %v1725 = vsel %vm565, %v1719, 0
    %v1728 = vsel %vm565, %v1720, 0
    %v1731 = vsel %vm565, %v1721, 0
    %v1734 = vsel %vm565, %v1722, 0
    %v1737 = vsel %vm565, %v1723, 0
    %1739 = vmatpush.xpose.msra.mxu0 0.0
    %1740 = vmatpush.xpose.msra.mxu0 0.0
    %1741 = vmatpush.xpose.msra.mxu0 0.0
    %1742 = vmatpush.xpose.msra.mxu0 0.0
    %1743 = vmatpush.xpose.msra.mxu0 0.0
    %1744 = vmatpush.xpose.msra.mxu0 0.0
    %1745 = vmatpush.xpose.msra.mxu0 0.0
    %1746 = vmatpush.xpose.msra.mxu0 0.0
    %1747 = vmatpush.xpose.msra.mxu0 0.0
    %1748 = vmatpush.xpose.msra.mxu0 0.0
    %1749 = vmatpush.xpose.msra.mxu0 0.0
    %1750 = vmatpush.xpose.msra.mxu0 0.0
    %1751 = vmatpush.xpose.msra.mxu0 %v642
    %1752 = vmatpush.xpose.msra.mxu0 %v639
    %1753 = vmatpush.xpose.msra.mxu0 %v636
    %1754 = vmatpush.xpose.msra.mxu0 %v633
    %1755 = vmatmul.f32.gmra.mxu0 %v1725
    %v1756 = vpop.f32.mrf.mxu0
    %v1757 = vadd.f32 0.0, %v1756
    %1758 = vmatmul.f32.gmra.mxu0 %v1728
    %v1759 = vpop.f32.mrf.mxu0
    %v1760 = vadd.f32 0.0, %v1759
    %1761 = vmatmul.f32.gmra.mxu0 %v1731
    %v1762 = vpop.f32.mrf.mxu0
    %v1763 = vadd.f32 0.0, %v1762
    %1764 = vmatmul.f32.gmra.mxu0 %v1734
    %v1765 = vpop.f32.mrf.mxu0
    %v1766 = vadd.f32 0.0, %v1765
    %1767 = vmatmul.f32.gmra.mxu0 %v1737
    %v1768 = vpop.f32.mrf.mxu0
    %v1769 = vadd.f32 0.0, %v1768
    %1770 = vdwg.mxu0
    %v1771 = vmul.f32 %v1508, %v1757
    %v1772 = vmul.f32 %v1511, %v1760
    %v1773 = vmul.f32 %v1514, %v1763
    %v1774 = vmul.f32 %v1517, %v1766
    %v1775 = vmul.f32 %v1520, %v1769
    %1776 = vmatpush.msra.mxu0 0.0
    %1777 = vmatpush.msra.mxu0 0.0
    %1778 = vmatpush.msra.mxu0 0.0
    %1779 = vmatpush.msra.mxu0 0.0
    %1780 = vmatpush.msra.mxu0 0.0
    %1781 = vmatpush.msra.mxu0 0.0
    %1782 = vmatpush.msra.mxu0 0.0
    %1783 = vmatpush.msra.mxu0 0.0
    %1784 = vmatpush.msra.mxu0 0.0
    %1785 = vmatpush.msra.mxu0 0.0
    %1786 = vmatpush.msra.mxu0 0.0
    %1787 = vmatpush.msra.mxu0 %v1775
    %1788 = vmatpush.msra.mxu0 %v1774
    %1789 = vmatpush.msra.mxu0 %v1773
    %1790 = vmatpush.msra.mxu0 %v1772
    %1791 = vmatpush.msra.mxu0 %v1771
    %1792 = vmatmul.f32.gmra.mxu0 %v683
    %v1793 = vpop.f32.mrf.mxu0
    %v1794 = vadd.f32 0.0, %v1793
    %1795 = vmatmul.f32.gmra.mxu0 %v686
    %v1796 = vpop.f32.mrf.mxu0
    %v1797 = vadd.f32 0.0, %v1796
    %1798 = vmatmul.f32.gmra.mxu0 %v689
    %v1799 = vpop.f32.mrf.mxu0
    %v1800 = vadd.f32 0.0, %v1799
    %1801 = vdwg.mxu0
    %v1802 = vld [vmem:[%s45] sm:$0xf]
    %v1803 = vld [vmem:[%s45 + $0x4] sm:$0xf]
    %v1804 = vld [vmem:[%s45 + $0x8] sm:$0xf]
    %v1805 = vld [vmem:[%s45 + $0xc] sm:$0xf]
    %v1806 = vpack.c.bf16 %v1797, %v1794
    %v1807 = vpack.c.bf16 %v1800, %v1800
    %v1808 = vld [vmem:[%s47] sm:$0x1]
    %v1810 = vperm.slane %v1808, 0
    %v1816 = vunpack.c.l.b16 %v1802
    %v1817 = vunpack.c.l.b16 %v1803
    %v1818 = vunpack.c.l.b16 %v1804
    %v1819 = vunpack.c.l.b16 %v1805
    %v1820 = vpack.c.b16 %v1817, %v1816
    %v1821 = vpack.c.b16 %v1819, %v1818
    %v1825 = vsel %vm497, %v1806, 0
    %v1828 = vsel %vm497, %v1807, 0
    %1830 = vmatpush.bf16.msra.mxu0 0
    %1831 = vmatpush.bf16.msra.mxu0 0
    %1832 = vmatpush.bf16.msra.mxu0 0
    %1833 = vmatpush.bf16.msra.mxu0 0
    %1834 = vmatpush.bf16.msra.mxu0 0
    %1835 = vmatpush.bf16.msra.mxu0 0
    %1836 = vmatpush.bf16.msra.mxu0 %v1821
    %1837 = vmatpush.bf16.msra.mxu0 %v1820
    %1838 = vmatmul.bf16.gmra.mxu0 %v1825
    %v1839 = vpop.f32.mrf.mxu0
    %v1840 = vadd.f32 %v1810, %v1839
    %v1841 = vpop.f32.mrf.mxu0
    %v1842 = vadd.f32 %v1810, %v1841
    %1843 = vmatmul.bf16.gmra.mxu0 %v1828
    %v1844 = vpop.f32.mrf.mxu0
    %v1845 = vadd.f32 %v1810, %v1844
    %v1846 = vpop.f32.mrf.mxu0
    %1847 = vdwg.mxu0
    %v1848 = vadd.f32 %v1840, %v1310
    %v1849 = vadd.f32 %v1842, %v1311
    %v1850 = vadd.f32 %v1845, %v1312
    %v1851 = vld [vmem:[%s49] sm:$0xf]
    %v1852 = vld [vmem:[%s49 + $0x4] sm:$0xf]
    %v1853 = vld [vmem:[%s49 + $0x8] sm:$0xf]
    %v1854 = vld [vmem:[%s49 + $0xc] sm:$0xf]
    %v1855 = vpack.c.bf16 %v1849, %v1848
    %v1856 = vpack.c.bf16 %v1850, %v1850
    %v1857 = vld [vmem:[%s51] sm:$0x1]
    %v1859 = vperm.slane %v1857, 0
    %v1865 = vunpack.c.l.b16 %v1851
    %v1866 = vunpack.c.l.b16 %v1852
    %v1867 = vunpack.c.l.b16 %v1853
    %v1868 = vunpack.c.l.b16 %v1854
    %v1869 = vpack.c.b16 %v1866, %v1865
    %v1870 = vpack.c.b16 %v1868, %v1867
    %v1874 = vsel %vm497, %v1855, 0
    %v1877 = vsel %vm497, %v1856, 0
    %1879 = vmatpush.bf16.msra.mxu0 0
    %1880 = vmatpush.bf16.msra.mxu0 0
    %1881 = vmatpush.bf16.msra.mxu0 0
    %1882 = vmatpush.bf16.msra.mxu0 0
    %1883 = vmatpush.bf16.msra.mxu0 0
    %1884 = vmatpush.bf16.msra.mxu0 0
    %1885 = vmatpush.bf16.msra.mxu0 %v1870
    %1886 = vmatpush.bf16.msra.mxu0 %v1869
    %1887 = vmatmul.bf16.gmra.mxu0 %v1874
    %v1888 = vpop.f32.mrf.mxu0
    %v1889 = vadd.f32 %v1859, %v1888
    %v1890 = vpop.f32.mrf.mxu0
    %1891 = vmatmul.bf16.gmra.mxu0 %v1877
    %v1892 = vpop.f32.mrf.mxu0
    %v1893 = vpop.f32.mrf.mxu0
    %1894 = vdwg.mxu0
    %v1895 = vld [vmem:[%s53] sm:$0xff]
    %v1896 = vld [vmem:[%s53 + $0x8] sm:$0xff]
    %v1897 = vld [vmem:[%s53 + $0x10] sm:$0xff]
    %v1898 = vld [vmem:[%s53 + $0x18] sm:$0xff]
    %v1899 = vld [vmem:[%s55] sm:$0xf]
    %v1900 = vld [vmem:[%s55 + $0x4] sm:$0xf]
    %v1901 = vld [vmem:[%s55 + $0x8] sm:$0xf]
    %v1902 = vld [vmem:[%s55 + $0xc] sm:$0xf]
    %v1903 = vld [vmem:[%s55 + $0x10] sm:$0xf]
    %v1904 = vld [vmem:[%s55 + $0x14] sm:$0xf]
    %v1905 = vpack.c.bf16 %v1896, %v1895
    %v1906 = vpack.c.bf16 %v1898, %v1897
    %v1907 = vld [vmem:[%s57] sm:$0x1]
    %v1909 = vperm.slane %v1907, 0
    %v1917 = vunpack.c.l.b16 %v1899
    %v1918 = vunpack.c.l.b16 %v1900
    %v1919 = vunpack.c.l.b16 %v1901
    %v1920 = vunpack.c.l.b16 %v1902
    %v1921 = vunpack.c.l.b16 %v1903
    %v1922 = vunpack.c.l.b16 %v1904
    %v1923 = vpack.c.b16 %v1918, %v1917
    %v1924 = vpack.c.b16 %v1920, %v1919
    %v1925 = vpack.c.b16 %v1922, %v1921
    %v1930 = vsel %vm240, %v1905, 0
    %v1933 = vsel %vm240, %v1906, 0
    %1935 = vmatpush.bf16.msra.mxu0 0
    %1936 = vmatpush.bf16.msra.mxu0 0
    %1937 = vmatpush.bf16.msra.mxu0 0
    %1938 = vmatpush.bf16.msra.mxu0 0
    %1939 = vmatpush.bf16.msra.mxu0 0
    %1940 = vmatpush.bf16.msra.mxu0 %v1925
    %1941 = vmatpush.bf16.msra.mxu0 %v1924
    %1942 = vmatpush.bf16.msra.mxu0 %v1923
    %1943 = vmatmul.bf16.gmra.mxu0 %v1930
    %v1944 = vpop.f32.mrf.mxu0
    %v1945 = vadd.f32 %v1909, %v1944
    %v1946 = vpop.f32.mrf.mxu0
    %v1947 = vadd.f32 %v1909, %v1946
    %1948 = vmatmul.bf16.gmra.mxu0 %v1933
    %v1949 = vpop.f32.mrf.mxu0
    %v1950 = vadd.f32 %v1909, %v1949
    %v1951 = vpop.f32.mrf.mxu0
    %v1952 = vadd.f32 %v1909, %v1951
    %1953 = vdwg.mxu0
    %v1954 = vld [vmem:[%s61] sm:$0xf]
    %v1955 = vld [vmem:[%s61 + $0x4] sm:$0xf]
    %v1956 = vld [vmem:[%s61 + $0x8] sm:$0xf]
    %v1957 = vld [vmem:[%s61 + $0xc] sm:$0xf]
    %v1958 = vld [vmem:[%s61 + $0x10] sm:$0xf]
    %v1959 = vld [vmem:[%s61 + $0x14] sm:$0xf]
    %v1960 = vld [vmem:[%s61 + $0x18] sm:$0xf]
    %v1961 = vld [vmem:[%s61 + $0x1c] sm:$0xf]
    %v1962 = vld [vmem:[%s61 + $0x20] sm:$0xf]
    %v1963 = vld [vmem:[%s61 + $0x24] sm:$0xf]
    %v1964 = vld [vmem:[%s61 + $0x28] sm:$0xf]
    %v1965 = vld [vmem:[%s61 + $0x2c] sm:$0xf]
    %v1966 = vld [vmem:[%s61 + $0x30] sm:$0xf]
    %v1967 = vld [vmem:[%s61 + $0x34] sm:$0xf]
    %v1968 = vld [vmem:[%s61 + $0x38] sm:$0xf]
    %v1969 = vld [vmem:[%s61 + $0x3c] sm:$0xf]
    %v1971 = vsel %vm497, %v1889, 0
    %v1974 = vsel %vm497, %v1945, 0
    %1976 = vmatpush.xpose.msra.mxu0 0.0
    %1977 = vmatpush.xpose.msra.mxu0 0.0
    %1978 = vmatpush.xpose.msra.mxu0 0.0
    %1979 = vmatpush.xpose.msra.mxu0 0.0
    %1980 = vmatpush.xpose.msra.mxu0 0.0
    %1981 = vmatpush.xpose.msra.mxu0 0.0
    %1982 = vmatpush.xpose.msra.mxu0 0.0
    %1983 = vmatpush.xpose.msra.mxu0 0.0
    %1984 = vmatpush.xpose.msra.mxu0 0.0
    %1985 = vmatpush.xpose.msra.mxu0 0.0
    %1986 = vmatpush.xpose.msra.mxu0 0.0
    %1987 = vmatpush.xpose.msra.mxu0 0.0
    %1988 = vmatpush.xpose.msra.mxu0 0.0
    %1989 = vmatpush.xpose.msra.mxu0 0.0
    %1990 = vmatpush.xpose.msra.mxu0 0.0
    %1991 = vmatpush.xpose.msra.mxu0 %v1974
    %1992 = vmatmul.f32.gmra.mxu0 %v1971
    %v1993 = vpop.f32.mrf.mxu0
    %v1994 = vadd.f32 0.0, %v1993
    %1995 = vdwg.mxu0
    %v1996 = vmul.f32 %v1994, 0.17677669
    %vm1997 = vcmask 58368
    %v1998 = vsel %vm1997, %v1996, -inf
    %1999 = vmax.xlane.f32.xlu0 %v1998
    %v2000 = vpop.xlane.xlu0 %1999
    %v2001 = vsub.f32 %v1996, %v2000
    %v2002 = vmul.f32 %v2001, 1.442695
    %v2003 = vpow.pop %v2002
    %v2004 = vsel %vm1997, %v2003, 0.0
    %2005 = vadd.xlane.f32.xlu0 %v2004
    %v2006 = vpop.xlane.xlu0 %2005
    %v2007 = vrcp.pop %v2006
    %v2008 = vmul.f32 %v2003, %v2007
    %vm2009 = vcmask 64512
    %v2011 = vsel %vm2009, %v2008, 0
    %2013 = vmatpush.msra.mxu0 0.0
    %2014 = vmatpush.msra.mxu0 0.0
    %2015 = vmatpush.msra.mxu0 0.0
    %2016 = vmatpush.msra.mxu0 0.0
    %2017 = vmatpush.msra.mxu0 0.0
    %2018 = vmatpush.msra.mxu0 0.0
    %2019 = vmatpush.msra.mxu0 0.0
    %2020 = vmatpush.msra.mxu0 0.0
    %2021 = vmatpush.msra.mxu0 0.0
    %2022 = vmatpush.msra.mxu0 0.0
    %2023 = vmatpush.msra.mxu0 0.0
    %2024 = vmatpush.msra.mxu0 0.0
    %2025 = vmatpush.msra.mxu0 0.0
    %2026 = vmatpush.msra.mxu0 0.0
    %2027 = vmatpush.msra.mxu0 0.0
    %2028 = vmatpush.msra.mxu0 %v1945
    %2029 = vmatmul.f32.gmra.mxu0 %v2011
    %v2030 = vpop.f32.mrf.mxu0
    %v2031 = vadd.f32 0.0, %v2030
    %2032 = vdwg.mxu0
    %v2033 = vpack.c.bf16 %v2031, %v2031
    %v2035 = vsel %vm497, %v1947, 0
    %2037 = vmatpush.xpose.msra.mxu0 0.0
    %2038 = vmatpush.xpose.msra.mxu0 0.0
    %2039 = vmatpush.xpose.msra.mxu0 0.0
    %2040 = vmatpush.xpose.msra.mxu0 0.0
    %2041 = vmatpush.xpose.msra.mxu0 0.0
    %2042 = vmatpush.xpose.msra.mxu0 0.0
    %2043 = vmatpush.xpose.msra.mxu0 0.0
    %2044 = vmatpush.xpose.msra.mxu0 0.0
    %2045 = vmatpush.xpose.msra.mxu0 0.0
    %2046 = vmatpush.xpose.msra.mxu0 0.0
    %2047 = vmatpush.xpose.msra.mxu0 0.0
    %2048 = vmatpush.xpose.msra.mxu0 0.0
    %2049 = vmatpush.xpose.msra.mxu0 0.0
    %2050 = vmatpush.xpose.msra.mxu0 0.0
    %2051 = vmatpush.xpose.msra.mxu0 0.0
    %2052 = vmatpush.xpose.msra.mxu0 %v2035
    %2053 = vmatmul.f32.gmra.mxu0 %v1971
    %v2054 = vpop.f32.mrf.mxu0
    %v2055 = vadd.f32 0.0, %v2054
    %2056 = vdwg.mxu0
    %v2057 = vmul.f32 %v2055, 0.17677669
    %v2058 = vsel %vm1997, %v2057, -inf
    %2059 = vmax.xlane.f32.xlu0 %v2058
    %v2060 = vpop.xlane.xlu0 %2059
    %v2061 = vsub.f32 %v2057, %v2060
    %v2062 = vmul.f32 %v2061, 1.442695
    %v2063 = vpow.pop %v2062
    %v2064 = vsel %vm1997, %v2063, 0.0
    %2065 = vadd.xlane.f32.xlu0 %v2064
    %v2066 = vpop.xlane.xlu0 %2065
    %v2067 = vrcp.pop %v2066
    %v2068 = vmul.f32 %v2063, %v2067
    %v2070 = vsel %vm2009, %v2068, 0
    %2072 = vmatpush.msra.mxu0 0.0
    %2073 = vmatpush.msra.mxu0 0.0
    %2074 = vmatpush.msra.mxu0 0.0
    %2075 = vmatpush.msra.mxu0 0.0
    %2076 = vmatpush.msra.mxu0 0.0
    %2077 = vmatpush.msra.mxu0 0.0
    %2078 = vmatpush.msra.mxu0 0.0
    %2079 = vmatpush.msra.mxu0 0.0
    %2080 = vmatpush.msra.mxu0 0.0
    %2081 = vmatpush.msra.mxu0 0.0
    %2082 = vmatpush.msra.mxu0 0.0
    %2083 = vmatpush.msra.mxu0 0.0
    %2084 = vmatpush.msra.mxu0 0.0
    %2085 = vmatpush.msra.mxu0 0.0
    %2086 = vmatpush.msra.mxu0 0.0
    %2087 = vmatpush.msra.mxu0 %v1947
    %2088 = vmatmul.f32.gmra.mxu0 %v2070
    %v2089 = vpop.f32.mrf.mxu0
    %v2090 = vadd.f32 0.0, %v2089
    %2091 = vdwg.mxu0
    %v2092 = vpack.c.bf16 %v2090, %v2090
    %v2097 = vunpack.c.l.b16 %v1958
    %v2098 = vunpack.c.l.b16 %v1959
    %v2099 = vunpack.c.l.b16 %v1960
    %v2100 = vunpack.c.l.b16 %v1961
    %v2101 = vpack.c.b16 %v2098, %v2097
    %v2102 = vpack.c.b16 %v2100, %v2099
    %v2106 = vsel %vm497, %v2092, 0
    %2108 = vmatpush.bf16.msra.mxu0 0
    %2109 = vmatpush.bf16.msra.mxu0 0
    %2110 = vmatpush.bf16.msra.mxu0 0
    %2111 = vmatpush.bf16.msra.mxu0 0
    %2112 = vmatpush.bf16.msra.mxu0 0
    %2113 = vmatpush.bf16.msra.mxu0 0
    %2114 = vmatpush.bf16.msra.mxu0 %v2102
    %2115 = vmatpush.bf16.msra.mxu0 %v2101
    %2116 = vmatmul.bf16.gmra.mxu0 %v2106
    %v2117 = vpop.f32.mrf.mxu0
    %v2118 = vadd.f32 0.0, %v2117
    %v2119 = vpop.f32.mrf.mxu0
    %2120 = vdwg.mxu0
    %v2125 = vunpack.c.l.b16 %v1954
    %v2126 = vunpack.c.l.b16 %v1955
    %v2127 = vunpack.c.l.b16 %v1956
    %v2128 = vunpack.c.l.b16 %v1957
    %v2129 = vpack.c.b16 %v2126, %v2125
    %v2130 = vpack.c.b16 %v2128, %v2127
    %v2134 = vsel %vm497, %v2033, 0
    %2136 = vmatpush.bf16.msra.mxu0 0
    %2137 = vmatpush.bf16.msra.mxu0 0
    %2138 = vmatpush.bf16.msra.mxu0 0
    %2139 = vmatpush.bf16.msra.mxu0 0
    %2140 = vmatpush.bf16.msra.mxu0 0
    %2141 = vmatpush.bf16.msra.mxu0 0
    %2142 = vmatpush.bf16.msra.mxu0 %v2130
    %2143 = vmatpush.bf16.msra.mxu0 %v2129
    %2144 = vmatmul.bf16.gmra.mxu0 %v2134
    %v2145 = vpop.f32.mrf.mxu0
    %v2146 = vadd.f32 %v2118, %v2145
    %v2147 = vpop.f32.mrf.mxu0
    %2148 = vdwg.mxu0
    %v2150 = vsel %vm497, %v1950, 0
    %2152 = vmatpush.xpose.msra.mxu0 0.0
    %2153 = vmatpush.xpose.msra.mxu0 0.0
    %2154 = vmatpush.xpose.msra.mxu0 0.0
    %2155 = vmatpush.xpose.msra.mxu0 0.0
    %2156 = vmatpush.xpose.msra.mxu0 0.0
    %2157 = vmatpush.xpose.msra.mxu0 0.0
    %2158 = vmatpush.xpose.msra.mxu0 0.0
    %2159 = vmatpush.xpose.msra.mxu0 0.0
    %2160 = vmatpush.xpose.msra.mxu0 0.0
    %2161 = vmatpush.xpose.msra.mxu0 0.0
    %2162 = vmatpush.xpose.msra.mxu0 0.0
    %2163 = vmatpush.xpose.msra.mxu0 0.0
    %2164 = vmatpush.xpose.msra.mxu0 0.0
    %2165 = vmatpush.xpose.msra.mxu0 0.0
    %2166 = vmatpush.xpose.msra.mxu0 0.0
    %2167 = vmatpush.xpose.msra.mxu0 %v2150
    %2168 = vmatmul.f32.gmra.mxu0 %v1971
    %v2169 = vpop.f32.mrf.mxu0
    %v2170 = vadd.f32 0.0, %v2169
    %2171 = vdwg.mxu0
    %v2172 = vmul.f32 %v2170, 0.17677669
    %v2173 = vsel %vm1997, %v2172, -inf
    %2174 = vmax.xlane.f32.xlu0 %v2173
    %v2175 = vpop.xlane.xlu0 %2174
    %v2176 = vsub.f32 %v2172, %v2175
    %v2177 = vmul.f32 %v2176, 1.442695
    %v2178 = vpow.pop %v2177
    %v2179 = vsel %vm1997, %v2178, 0.0
    %2180 = vadd.xlane.f32.xlu0 %v2179
    %v2181 = vpop.xlane.xlu0 %2180
    %v2182 = vrcp.pop %v2181
    %v2183 = vmul.f32 %v2178, %v2182
    %v2185 = vsel %vm2009, %v2183, 0
    %2187 = vmatpush.msra.mxu0 0.0
    %2188 = vmatpush.msra.mxu0 0.0
    %2189 = vmatpush.msra.mxu0 0.0
    %2190 = vmatpush.msra.mxu0 0.0
    %2191 = vmatpush.msra.mxu0 0.0
    %2192 = vmatpush.msra.mxu0 0.0
    %2193 = vmatpush.msra.mxu0 0.0
    %2194 = vmatpush.msra.mxu0 0.0
    %2195 = vmatpush.msra.mxu0 0.0
    %2196 = vmatpush.msra.mxu0 0.0
    %2197 = vmatpush.msra.mxu0 0.0
    %2198 = vmatpush.msra.mxu0 0.0
    %2199 = vmatpush.msra.mxu0 0.0
    %2200 = vmatpush.msra.mxu0 0.0
    %2201 = vmatpush.msra.mxu0 0.0
    %2202 = vmatpush.msra.mxu0 %v1950
    %2203 = vmatmul.f32.gmra.mxu0 %v2185
    %v2204 = vpop.f32.mrf.mxu0
    %v2205 = vadd.f32 0.0, %v2204
    %2206 = vdwg.mxu0
    %v2207 = vpack.c.bf16 %v2205, %v2205
    %v2212 = vunpack.c.l.b16 %v1962
    %v2213 = vunpack.c.l.b16 %v1963
    %v2214 = vunpack.c.l.b16 %v1964
    %v2215 = vunpack.c.l.b16 %v1965
    %v2216 = vpack.c.b16 %v2213, %v2212
    %v2217 = vpack.c.b16 %v2215, %v2214
    %v2221 = vsel %vm497, %v2207, 0
    %2223 = vmatpush.bf16.msra.mxu0 0
    %2224 = vmatpush.bf16.msra.mxu0 0
    %2225 = vmatpush.bf16.msra.mxu0 0
    %2226 = vmatpush.bf16.msra.mxu0 0
    %2227 = vmatpush.bf16.msra.mxu0 0
    %2228 = vmatpush.bf16.msra.mxu0 0
    %2229 = vmatpush.bf16.msra.mxu0 %v2217
    %2230 = vmatpush.bf16.msra.mxu0 %v2216
    %2231 = vmatmul.bf16.gmra.mxu0 %v2221
    %v2232 = vpop.f32.mrf.mxu0
    %v2233 = vadd.f32 0.0, %v2232
    %v2234 = vpop.f32.mrf.mxu0
    %2235 = vdwg.mxu0
    %v2236 = vadd.f32 %v2146, %v2233
    %v2238 = vsel %vm497, %v1952, 0
    %2240 = vmatpush.xpose.msra.mxu0 0.0
    %2241 = vmatpush.xpose.msra.mxu0 0.0
    %2242 = vmatpush.xpose.msra.mxu0 0.0
    %2243 = vmatpush.xpose.msra.mxu0 0.0
    %2244 = vmatpush.xpose.msra.mxu0 0.0
    %2245 = vmatpush.xpose.msra.mxu0 0.0
    %2246 = vmatpush.xpose.msra.mxu0 0.0
    %2247 = vmatpush.xpose.msra.mxu0 0.0
    %2248 = vmatpush.xpose.msra.mxu0 0.0
    %2249 = vmatpush.xpose.msra.mxu0 0.0
    %2250 = vmatpush.xpose.msra.mxu0 0.0
    %2251 = vmatpush.xpose.msra.mxu0 0.0
    %2252 = vmatpush.xpose.msra.mxu0 0.0
    %2253 = vmatpush.xpose.msra.mxu0 0.0
    %2254 = vmatpush.xpose.msra.mxu0 0.0
    %2255 = vmatpush.xpose.msra.mxu0 %v2238
    %2256 = vmatmul.f32.gmra.mxu0 %v1971
    %v2257 = vpop.f32.mrf.mxu0
    %v2258 = vadd.f32 0.0, %v2257
    %2259 = vdwg.mxu0
    %v2260 = vmul.f32 %v2258, 0.17677669
    %v2261 = vsel %vm1997, %v2260, -inf
    %2262 = vmax.xlane.f32.xlu0 %v2261
    %v2263 = vpop.xlane.xlu0 %2262
    %v2264 = vsub.f32 %v2260, %v2263
    %v2265 = vmul.f32 %v2264, 1.442695
    %v2266 = vpow.pop %v2265
    %v2267 = vsel %vm1997, %v2266, 0.0
    %2268 = vadd.xlane.f32.xlu0 %v2267
    %v2269 = vpop.xlane.xlu0 %2268
    %v2270 = vrcp.pop %v2269
    %v2271 = vmul.f32 %v2266, %v2270
    %v2273 = vsel %vm2009, %v2271, 0
    %2275 = vmatpush.msra.mxu0 0.0
    %2276 = vmatpush.msra.mxu0 0.0
    %2277 = vmatpush.msra.mxu0 0.0
    %2278 = vmatpush.msra.mxu0 0.0
    %2279 = vmatpush.msra.mxu0 0.0
    %2280 = vmatpush.msra.mxu0 0.0
    %2281 = vmatpush.msra.mxu0 0.0
    %2282 = vmatpush.msra.mxu0 0.0
    %2283 = vmatpush.msra.mxu0 0.0
    %2284 = vmatpush.msra.mxu0 0.0
    %2285 = vmatpush.msra.mxu0 0.0
    %2286 = vmatpush.msra.mxu0 0.0
    %2287 = vmatpush.msra.mxu0 0.0
    %2288 = vmatpush.msra.mxu0 0.0
    %2289 = vmatpush.msra.mxu0 0.0
    %2290 = vmatpush.msra.mxu0 %v1952
    %2291 = vmatmul.f32.gmra.mxu0 %v2273
    %v2292 = vpop.f32.mrf.mxu0
    %v2293 = vadd.f32 0.0, %v2292
    %2294 = vdwg.mxu0
    %v2295 = vpack.c.bf16 %v2293, %v2293
    %v2300 = vunpack.c.l.b16 %v1966
    %v2301 = vunpack.c.l.b16 %v1967
    %v2302 = vunpack.c.l.b16 %v1968
    %v2303 = vunpack.c.l.b16 %v1969
    %v2304 = vpack.c.b16 %v2301, %v2300
    %v2305 = vpack.c.b16 %v2303, %v2302
    %v2309 = vsel %vm497, %v2295, 0
    %2311 = vmatpush.bf16.msra.mxu0 0
    %2312 = vmatpush.bf16.msra.mxu0 0
    %2313 = vmatpush.bf16.msra.mxu0 0
    %2314 = vmatpush.bf16.msra.mxu0 0
    %2315 = vmatpush.bf16.msra.mxu0 0
    %2316 = vmatpush.bf16.msra.mxu0 0
    %2317 = vmatpush.bf16.msra.mxu0 %v2305
    %2318 = vmatpush.bf16.msra.mxu0 %v2304
    %2319 = vmatmul.bf16.gmra.mxu0 %v2309
    %v2320 = vpop.f32.mrf.mxu0
    %v2321 = vadd.f32 0.0, %v2320
    %v2322 = vpop.f32.mrf.mxu0
    %2323 = vdwg.mxu0
    %v2324 = vadd.f32 %v2236, %v2321
    %v2325 = vld [vmem:[%s59] sm:$0xff]
    %v2326 = vld [vmem:[%s59 + $0x8] sm:$0xff]
    %v2327 = vld [vmem:[%s59 + $0x10] sm:$0xff]
    %v2328 = vld [vmem:[%s63] sm:$0x1]
    %v2330 = vperm.slane %v2328, 0
    %vm2332 = vcmask 15360
    %v2334 = vsel %vm2332, %v2325, 0
    %v2337 = vsel %vm2332, %v2326, 0
    %v2340 = vsel %vm2332, %v2327, 0
    %vm2342 = vcmask 1041408
    %v2344 = vsel %vm2342, %v2324, 0
    %2346 = vmatpush.msra.mxu0 0.0
    %2347 = vmatpush.msra.mxu0 0.0
    %2348 = vmatpush.msra.mxu0 0.0
    %2349 = vmatpush.msra.mxu0 0.0
    %2350 = vmatpush.msra.mxu0 0.0
    %2351 = vmatpush.msra.mxu0 0.0
    %2352 = vmatpush.msra.mxu0 0.0
    %2353 = vmatpush.msra.mxu0 0.0
    %2354 = vmatpush.msra.mxu0 0.0
    %2355 = vmatpush.msra.mxu0 0.0
    %2356 = vmatpush.msra.mxu0 0.0
    %2357 = vmatpush.msra.mxu0 0.0
    %2358 = vmatpush.msra.mxu0 0.0
    %2359 = vmatpush.msra.mxu0 0.0
    %2360 = vmatpush.msra.mxu0 0.0
    %2361 = vmatpush.msra.mxu0 %v2344
    %2362 = vmatmul.f32.gmra.mxu0 %v2334
    %v2363 = vpop.f32.mrf.mxu0
    %v2364 = vadd.f32 %v2330, %v2363
    %2365 = vmatmul.f32.gmra.mxu0 %v2337
    %v2366 = vpop.f32.mrf.mxu0
    %v2367 = vadd.f32 %v2330, %v2366
    %2368 = vmatmul.f32.gmra.mxu0 %v2340
    %v2369 = vpop.f32.mrf.mxu0
    %v2370 = vadd.f32 %v2330, %v2369
    %2371 = vdwg.mxu0
    %v2372 = vld [vmem:[%s65] sm:$0xff]
    %v2373 = vld [vmem:[%s65 + $0x8] sm:$0xff]
    %v2374 = vld [vmem:[%s65 + $0x10] sm:$0xff]
    %2376 = vset.pattern.permute.xlu0 0
    %2377 = vperm.xlu0 %2376, %v2372
    %v2378 = vpop.permute.xlu0 %2377
    %2381 = vset.pattern.permute.xlu0 0
    %2382 = vperm.xlu0 %2381, %v2373
    %v2383 = vpop.permute.xlu0 %2382
    %2386 = vset.pattern.permute.xlu0 0
    %2387 = vperm.xlu0 %2386, %v2374
    %v2388 = vpop.permute.xlu0 %2387
    %v2390 = vadd.f32 %v2364, %v2378
    %v2391 = vadd.f32 %v2367, %v2383
    %v2392 = vadd.f32 %v2370, %v2388
    %v2393 = vsel %vm497, %v2390, -inf
    %v2394 = vsel %vm497, %v2391, -inf
    %v2395 = vsel %vm497, %v2392, -inf
    %v2396 = vmax.f32 %v2393, %v2394
    %v2397 = vmax.f32 %v2396, %v2395
    %v2398 = vrot.slane %v2397, 4
    %v2399 = vmax.f32 %v2397, %v2398
    %v2400 = vrot.slane %v2399, 2
    %v2401 = vmax.f32 %v2399, %v2400
    %v2402 = vrot.slane %v2401, 1
    %v2403 = vmax.f32 %v2401, %v2402
    %2404 = vset.pattern.permute.xlu0 1
    %2405 = vperm.xlu0 %2404, %v2372
    %v2406 = vpop.permute.xlu0 %2405
    %2408 = vset.pattern.permute.xlu0 1
    %2409 = vperm.xlu0 %2408, %v2373
    %v2410 = vpop.permute.xlu0 %2409
    %2412 = vset.pattern.permute.xlu0 1
    %2413 = vperm.xlu0 %2412, %v2374
    %v2414 = vpop.permute.xlu0 %2413
    %v2416 = vadd.f32 %v2364, %v2406
    %v2417 = vadd.f32 %v2367, %v2410
    %v2418 = vadd.f32 %v2370, %v2414
    %v2419 = vsel %vm497, %v2416, -inf
    %v2420 = vsel %vm497, %v2417, -inf
    %v2421 = vsel %vm497, %v2418, -inf
    %v2422 = vmax.f32 %v2419, %v2420
    %v2423 = vmax.f32 %v2422, %v2421
    %v2424 = vrot.slane %v2423, 4
    %v2425 = vmax.f32 %v2423, %v2424
    %v2426 = vrot.slane %v2425, 2
    %v2427 = vmax.f32 %v2425, %v2426
    %v2428 = vrot.slane %v2427, 1
    %v2429 = vmax.f32 %v2427, %v2428
    %2430 = vset.pattern.permute.xlu0 2
    %2431 = vperm.xlu0 %2430, %v2372
    %v2432 = vpop.permute.xlu0 %2431
    %2434 = vset.pattern.permute.xlu0 2
    %2435 = vperm.xlu0 %2434, %v2373
    %v2436 = vpop.permute.xlu0 %2435
    %2438 = vset.pattern.permute.xlu0 2
    %2439 = vperm.xlu0 %2438, %v2374
    %v2440 = vpop.permute.xlu0 %2439
    %v2442 = vadd.f32 %v2364, %v2432
    %v2443 = vadd.f32 %v2367, %v2436
    %v2444 = vadd.f32 %v2370, %v2440
    %v2445 = vsel %vm497, %v2442, -inf
    %v2446 = vsel %vm497, %v2443, -inf
    %v2447 = vsel %vm497, %v2444, -inf
    %v2448 = vmax.f32 %v2445, %v2446
    %v2449 = vmax.f32 %v2448, %v2447
    %v2450 = vrot.slane %v2449, 4
    %v2451 = vmax.f32 %v2449, %v2450
    %v2452 = vrot.slane %v2451, 2
    %v2453 = vmax.f32 %v2451, %v2452
    %v2454 = vrot.slane %v2453, 1
    %v2455 = vmax.f32 %v2453, %v2454
    %2456 = vset.pattern.permute.xlu0 3
    %2457 = vperm.xlu0 %2456, %v2372
    %v2458 = vpop.permute.xlu0 %2457
    %2460 = vset.pattern.permute.xlu0 3
    %2461 = vperm.xlu0 %2460, %v2373
    %v2462 = vpop.permute.xlu0 %2461
    %2464 = vset.pattern.permute.xlu0 3
    %2465 = vperm.xlu0 %2464, %v2374
    %v2466 = vpop.permute.xlu0 %2465
    %v2468 = vadd.f32 %v2364, %v2458
    %v2469 = vadd.f32 %v2367, %v2462
    %v2470 = vadd.f32 %v2370, %v2466
    %v2471 = vsel %vm497, %v2468, -inf
    %v2472 = vsel %vm497, %v2469, -inf
    %v2473 = vsel %vm497, %v2470, -inf
    %v2474 = vmax.f32 %v2471, %v2472
    %v2475 = vmax.f32 %v2474, %v2473
    %v2476 = vrot.slane %v2475, 4
    %v2477 = vmax.f32 %v2475, %v2476
    %v2478 = vrot.slane %v2477, 2
    %v2479 = vmax.f32 %v2477, %v2478
    %v2480 = vrot.slane %v2479, 1
    %v2481 = vmax.f32 %v2479, %v2480
    %2482 = vset.pattern.permute.xlu0 4
    %2483 = vperm.xlu0 %2482, %v2372
    %v2484 = vpop.permute.xlu0 %2483
    %2486 = vset.pattern.permute.xlu0 4
    %2487 = vperm.xlu0 %2486, %v2373
    %v2488 = vpop.permute.xlu0 %2487
    %2490 = vset.pattern.permute.xlu0 4
    %2491 = vperm.xlu0 %2490, %v2374
    %v2492 = vpop.permute.xlu0 %2491
    %v2494 = vadd.f32 %v2364, %v2484
    %v2495 = vadd.f32 %v2367, %v2488
    %v2496 = vadd.f32 %v2370, %v2492
    %v2497 = vsel %vm497, %v2494, -inf
    %v2498 = vsel %vm497, %v2495, -inf
    %v2499 = vsel %vm497, %v2496, -inf
    %v2500 = vmax.f32 %v2497, %v2498
    %v2501 = vmax.f32 %v2500, %v2499
    %v2502 = vrot.slane %v2501, 4
    %v2503 = vmax.f32 %v2501, %v2502
    %v2504 = vrot.slane %v2503, 2
    %v2505 = vmax.f32 %v2503, %v2504
    %v2506 = vrot.slane %v2505, 1
    %v2507 = vmax.f32 %v2505, %v2506
    %2508 = vset.pattern.permute.xlu0 5
    %2509 = vperm.xlu0 %2508, %v2372
    %v2510 = vpop.permute.xlu0 %2509
    %2512 = vset.pattern.permute.xlu0 5
    %2513 = vperm.xlu0 %2512, %v2373
    %v2514 = vpop.permute.xlu0 %2513
    %2516 = vset.pattern.permute.xlu0 5
    %2517 = vperm.xlu0 %2516, %v2374
    %v2518 = vpop.permute.xlu0 %2517
    %v2520 = vadd.f32 %v2364, %v2510
    %v2521 = vadd.f32 %v2367, %v2514
    %v2522 = vadd.f32 %v2370, %v2518
    %v2523 = vsel %vm497, %v2520, -inf
    %v2524 = vsel %vm497, %v2521, -inf
    %v2525 = vsel %vm497, %v2522, -inf
    %v2526 = vmax.f32 %v2523, %v2524
    %v2527 = vmax.f32 %v2526, %v2525
    %v2528 = vrot.slane %v2527, 4
    %v2529 = vmax.f32 %v2527, %v2528
    %v2530 = vrot.slane %v2529, 2
    %v2531 = vmax.f32 %v2529, %v2530
    %v2532 = vrot.slane %v2531, 1
    %v2533 = vmax.f32 %v2531, %v2532
    %2534 = vset.pattern.permute.xlu0 6
    %2535 = vperm.xlu0 %2534, %v2372
    %v2536 = vpop.permute.xlu0 %2535
    %2538 = vset.pattern.permute.xlu0 6
    %2539 = vperm.xlu0 %2538, %v2373
    %v2540 = vpop.permute.xlu0 %2539
    %2542 = vset.pattern.permute.xlu0 6
    %2543 = vperm.xlu0 %2542, %v2374
    %v2544 = vpop.permute.xlu0 %2543
    %v2546 = vadd.f32 %v2364, %v2536
    %v2547 = vadd.f32 %v2367, %v2540
    %v2548 = vadd.f32 %v2370, %v2544
    %v2549 = vsel %vm497, %v2546, -inf
    %v2550 = vsel %vm497, %v2547, -inf
    %v2551 = vsel %vm497, %v2548, -inf
    %v2552 = vmax.f32 %v2549, %v2550
    %v2553 = vmax.f32 %v2552, %v2551
    %v2554 = vrot.slane %v2553, 4
    %v2555 = vmax.f32 %v2553, %v2554
    %v2556 = vrot.slane %v2555, 2
    %v2557 = vmax.f32 %v2555, %v2556
    %v2558 = vrot.slane %v2557, 1
    %v2559 = vmax.f32 %v2557, %v2558
    %2560 = vset.pattern.permute.xlu0 7
    %2561 = vperm.xlu0 %2560, %v2372
    %v2562 = vpop.permute.xlu0 %2561
    %2564 = vset.pattern.permute.xlu0 7
    %2565 = vperm.xlu0 %2564, %v2373
    %v2566 = vpop.permute.xlu0 %2565
    %2568 = vset.pattern.permute.xlu0 7
    %2569 = vperm.xlu0 %2568, %v2374
    %v2570 = vpop.permute.xlu0 %2569
    %v2572 = vadd.f32 %v2364, %v2562
    %v2573 = vadd.f32 %v2367, %v2566
    %v2574 = vadd.f32 %v2370, %v2570
    %v2575 = vsel %vm497, %v2572, -inf
    %v2576 = vsel %vm497, %v2573, -inf
    %v2577 = vsel %vm497, %v2574, -inf
    %v2578 = vmax.f32 %v2575, %v2576
    %v2579 = vmax.f32 %v2578, %v2577
    %v2580 = vrot.slane %v2579, 4
    %v2581 = vmax.f32 %v2579, %v2580
    %v2582 = vrot.slane %v2581, 2
    %v2583 = vmax.f32 %v2581, %v2582
    %v2584 = vrot.slane %v2583, 1
    %v2585 = vmax.f32 %v2583, %v2584
    %vm2586 = vcmask 1040384
    %v2587 = vsel %vm2586, %v2403, %v2429
    %v2588 = vsel %vm2342, %v2587, %v2455
    %vm2589 = vcmask 1042432
    %v2590 = vsel %vm2589, %v2588, %v2481
    %vm2591 = vcmask 1043456
    %v2592 = vsel %vm2591, %v2590, %v2507
    %vm2593 = vcmask 1044480
    %v2594 = vsel %vm2593, %v2592, %v2533
    %vm2595 = vcmask 1045504
    %v2596 = vsel %vm2595, %v2594, %v2559
    %vm2597 = vcmask 1046528
    %v2598 = vsel %vm2597, %v2596, %v2585
    %v2599 = vld [vmem:[%s67] sm:$0xf]
    %v2600 = vld [vmem:[%s67 + $0x4] sm:$0xf]
    %v2601 = vld [vmem:[%s67 + $0x8] sm:$0xf]
    %v2602 = vld [vmem:[%s67 + $0xc] sm:$0xf]
    %v2603 = vpack.c.bf16 %v2598, %v2598
    %v2604 = vld [vmem:[%s69] sm:$0x1]
    %v2606 = vperm.slane %v2604, 0
    %v2612 = vunpack.c.l.b16 %v2599
    %v2613 = vunpack.c.l.b16 %v2600
    %v2614 = vunpack.c.l.b16 %v2601
    %v2615 = vunpack.c.l.b16 %v2602
    %v2616 = vpack.c.b16 %v2613, %v2612
    %v2617 = vpack.c.b16 %v2615, %v2614
    %v2621 = vsel %vm497, %v2603, 0
    %2623 = vmatpush.bf16.msra.mxu0 0
    %2624 = vmatpush.bf16.msra.mxu0 0
    %2625 = vmatpush.bf16.msra.mxu0 0
    %2626 = vmatpush.bf16.msra.mxu0 0
    %2627 = vmatpush.bf16.msra.mxu0 0
    %2628 = vmatpush.bf16.msra.mxu0 0
    %2629 = vmatpush.bf16.msra.mxu0 %v2617
    %2630 = vmatpush.bf16.msra.mxu0 %v2616
    %2631 = vmatmul.bf16.gmra.mxu0 %v2621
    %v2632 = vpop.f32.mrf.mxu0
    %v2633 = vadd.f32 %v2606, %v2632
    %v2634 = vpop.f32.mrf.mxu0
    %2635 = vdwg.mxu0
    %2636 = vst.msk [vmem:[#allocation2] sm:$0xff] %vm240, %v2633
    // Predicated region
    $region142: #{graph_transformer_forward.1} parent=1 // pred_check
      _
    $region143: #{graph_transformer_forward.1} parent=1 // pred_check_branch
      %2638 = sbr.rel (0) target = $region145
    $region144: #{graph_transformer_forward.1} parent=1 // pred_region
      %2640 = vsyncadd [#allocation3], 0
      %s2642 = sshll.u32 [#allocation2], 4
      %s2643 = int_to_ptr.vmem [resolvable:$true] %s2642
      %s2644 = sshll.u32 %s71, 4
      %s2645 = int_to_ptr.hbm [resolvable:$true] %s2644
      %2647 = dma.vmem_to_hbm [thread:$0]  %s2643, 128, %s2645, [#allocation3]
    $region145: #{graph_transformer_forward.1} parent=1 // pred_fallthru
      _
    // Predicated region
    $region146: #{graph_transformer_forward.1} parent=1 // pred_check
      _
    $region147: #{graph_transformer_forward.1} parent=1 // pred_check_branch
      %2649 = sbr.rel (0) target = $region149
    $region148: #{graph_transformer_forward.1} parent=1 // pred_region
      %2651 = dma.done [#allocation3], 128
    $region149: #{graph_transformer_forward.1} parent=1 // pred_fallthru
      _
    %2652 = vsyncpa [#allocation3], 1

</llo_original>
